<compile_context>
chip_gen: v7x
topology: tpu7x:2x2x1
jax: 0.10.0
libtpu: 0.0.40
codegen_flags: <defaults>
</compile_context>

<pallas_src>
import functools

import jax
import jax.numpy as jnp
from jax import lax
from jax.experimental import pallas as pl
from jax.experimental.pallas import tpu as pltpu

JACCARD_THRESH = 0.5
NEG_POS_RATIO = 3
VARIANCE0 = 0.1
VARIANCE1 = 0.2


def _multibox_loss_kernel(tgt_sref, loc_ref, conf_ref, dbc_ref, out_ref, *,
                          num_dbox, nobj, num_classes, lanes):
    """One grid step == one batch image.

    tgt_sref : SMEM (B, nobj*5) f32   [xmin ymin xmax ymax label] * nobj
    loc_ref  : VMEM (1, 4, 8, L)      predicted loc offsets (coord-major, dense)
    conf_ref : VMEM (1, C, 8, L)      class logits (class-major, dense)
    dbc_ref  : VMEM (9, 8, L) f32     [dx1 dy1 dx2 dy2 area_d d_cx d_cy 1/dw 1/dh]
    out_ref  : VMEM (1, 8, 128) f32   [loss_l, loss_c, num_pos] at lanes 0..2
    """
    b = pl.program_id(0)
    L = lanes

    # ---- default-box derived constants (precomputed host-side) -------------
    dx1 = dbc_ref[0]
    dy1 = dbc_ref[1]
    dx2 = dbc_ref[2]
    dy2 = dbc_ref[3]
    area_d = dbc_ref[4]
    d_cx = dbc_ref[5]
    d_cy = dbc_ref[6]
    inv_dw = dbc_ref[7]
    inv_dh = dbc_ref[8]

    sub = lax.broadcasted_iota(jnp.int32, (8, L), 0)
    lane = lax.broadcasted_iota(jnp.int32, (8, L), 1)
    flat_idx = sub * L + lane          # == original dbox index in the dense view
    valid = flat_idx < num_dbox        # mask out the D-padding boxes

    # ---- pass 1: per-truth IoU, carried best-truth-per-prior ---------------
    # (Python loop over the small static truth count keeps match temporaries
    #  at a handful of (8, L) blocks; no (NOBJ, D) arrays are materialized.)
    # TODO(synk): for very large nobj switch this to lax.fori_loop with an
    # SMEM scratch for the per-truth best-prior indices.
    bt_overlap = jnp.full((8, L), -1.0, jnp.float32)
    bt_idx = jnp.zeros((8, L), jnp.int32)
    best_prior_idx = []
    truth_scalars = []
    for n in range(nobj):
        base = n * 5
        tx1 = tgt_sref[b, base + 0]
        ty1 = tgt_sref[b, base + 1]
        tx2 = tgt_sref[b, base + 2]
        ty2 = tgt_sref[b, base + 3]
        lab = tgt_sref[b, base + 4]
        truth_scalars.append((tx1, ty1, tx2, ty2, lab))
        # TODO(synk): padded target rows need a per-image validity mask; the
        # spec's dense (B, nobj, 5) targets treat every row as a real object.

        iw = jnp.maximum(jnp.minimum(tx2, dx2) - jnp.maximum(tx1, dx1), 0.0)
        ih = jnp.maximum(jnp.minimum(ty2, dy2) - jnp.maximum(ty1, dy1), 0.0)
        inter = iw * ih
        area_t = (tx2 - tx1) * (ty2 - ty1)
        iou = inter / (area_t + area_d - inter)      # exact divide (match fidelity)
        iou = jnp.where(valid, iou, -1.0)            # padded boxes never match

        take = iou > bt_overlap                      # strict > : first truth wins ties
        bt_overlap = jnp.where(take, iou, bt_overlap)
        bt_idx = jnp.where(take, n, bt_idx)

        bpo = jnp.max(iou)                           # best prior for this truth
        best_prior_idx.append(
            jnp.min(jnp.where(iou == bpo, flat_idx, jnp.int32(8 * L))))

    # ---- forced match (each truth's best prior is assigned to it) ----------
    for n in range(nobj):
        is_best = flat_idx == best_prior_idx[n]
        bt_idx = jnp.where(is_best, n, bt_idx)      # later truths overwrite
        bt_overlap = jnp.where(is_best, 2.0, bt_overlap)

    # ---- gather matched truth coords / labels (per-truth selects) ----------
    mx1 = jnp.zeros((8, L), jnp.float32)
    my1 = jnp.zeros((8, L), jnp.float32)
    mx2 = jnp.zeros((8, L), jnp.float32)
    my2 = jnp.zeros((8, L), jnp.float32)
    lab_m = jnp.zeros((8, L), jnp.float32)
    for n in range(nobj):
        sel = bt_idx == n
        tx1, ty1, tx2, ty2, lab = truth_scalars[n]
        mx1 = jnp.where(sel, tx1, mx1)
        my1 = jnp.where(sel, ty1, my1)
        mx2 = jnp.where(sel, tx2, mx2)
        my2 = jnp.where(sel, ty2, my2)
        lab_m = jnp.where(sel, lab, lab_m)

    conf_t = jnp.where(bt_overlap < JACCARD_THRESH, 0,
                       lab_m.astype(jnp.int32) + 1)                     # (8,L)
    pos = conf_t > 0

    # ---- encode loc targets + SmoothL1 over positives (sum) ----------------
    g_cx = ((mx1 + mx2) * 0.5 - d_cx) * inv_dw * (1.0 / VARIANCE0)
    g_cy = ((my1 + my2) * 0.5 - d_cy) * inv_dh * (1.0 / VARIANCE0)
    g_w = jnp.log((mx2 - mx1) * inv_dw) * (1.0 / VARIANCE1)
    g_h = jnp.log((my2 - my1) * inv_dh) * (1.0 / VARIANCE1)

    def _sl1(pred, tgt):
        d = pred - tgt
        ad = jnp.abs(d)
        return jnp.where(ad < 1.0, 0.5 * d * d, ad - 0.5)

    sl1 = (_sl1(loc_ref[0, 0].astype(jnp.float32), g_cx)
           + _sl1(loc_ref[0, 1].astype(jnp.float32), g_cy)
           + _sl1(loc_ref[0, 2].astype(jnp.float32), g_w)
           + _sl1(loc_ref[0, 3].astype(jnp.float32), g_h))
    loss_l = jnp.sum(jnp.where(pos, sl1, 0.0))

    # ---- per-box cross entropy (class axis unrolled, dense blocks) ---------
    m = conf_ref[0, 0].astype(jnp.float32)
    for c in range(1, num_classes):
        m = jnp.maximum(m, conf_ref[0, c].astype(jnp.float32))
    ssum = jnp.zeros((8, L), jnp.float32)
    tgt_logit = jnp.zeros((8, L), jnp.float32)
    for c in range(num_classes):
        lc = conf_ref[0, c].astype(jnp.float32)
        ssum = ssum + jnp.exp(lc - m)
        tgt_logit = jnp.where(conf_t == c, lc, tgt_logit)
    ce = m + jnp.log(ssum) - tgt_logit                                  # >= 0

    num_pos = jnp.sum(pos.astype(jnp.int32))
    num_neg = jnp.minimum(num_pos * NEG_POS_RATIO, num_dbox)

    # ---- hard negative mining: exact sum of the num_neg largest CE values --
    # 2 bits per step bisection on int32 bit patterns (non-negative floats are
    # order preserving).  Counts of three thresholds per step; two of them are
    # packed into one reduce (counts <= D_pad < 2^16).
    neg_keep = jnp.logical_and(valid, jnp.logical_not(pos))
    ce_hnm = jnp.maximum(jnp.where(neg_keep, ce, 0.0), 0.0)
    ce_bits = pltpu.bitcast(ce_hnm, jnp.int32)

    def _quad_step(_, carry):
        lo, q = carry
        c1m = (ce_bits >= (lo + q)).astype(jnp.int32)
        c2m = (ce_bits >= (lo + 2 * q)).astype(jnp.int32)
        c3m = (ce_bits >= (lo + 3 * q)).astype(jnp.int32)
        c13 = jnp.sum(c1m + (c3m << 16))        # two counts, one reduce
        c2 = jnp.sum(c2m)                        # independent -> overlaps
        c1 = c13 & 0xFFFF
        c3 = c13 >> 16
        nadv = ((c1 >= num_neg).astype(jnp.int32)
                + (c2 >= num_neg).astype(jnp.int32)
                + (c3 >= num_neg).astype(jnp.int32))
        return lo + q * nadv, q >> 2

    lo0 = jnp.zeros((), jnp.int32)
    q0 = jnp.full((), 1 << 29, jnp.int32)        # answer lies in [0, 2^31)
    lo, _ = lax.fori_loop(0, 15, _quad_step, (lo0, q0), unroll=True)
    cnt_hi = jnp.sum((ce_bits >= (lo + 1)).astype(jnp.int32))
    kth_bits = jnp.where(cnt_hi >= num_neg, lo + 1, lo)

    kth_val = jnp.max(jnp.where(ce_bits == kth_bits, ce_hnm, 0.0))
    n_gt = jnp.sum((ce_bits > kth_bits).astype(jnp.int32))
    sum_gt = jnp.sum(jnp.where(ce_bits > kth_bits, ce_hnm, 0.0))
    neg_loss = sum_gt + (num_neg - n_gt).astype(jnp.float32) * kth_val

    loss_c = jnp.sum(jnp.where(pos, ce, 0.0)) + neg_loss

    # ---- pack per-image scalars [loss_l, loss_c, num_pos] ------------------
    lane128 = lax.broadcasted_iota(jnp.int32, (8, 128), 1)
    sub8 = lax.broadcasted_iota(jnp.int32, (8, 128), 0)
    flat = sub8 * 128 + lane128
    packed = jnp.where(
        flat == 0, loss_l,
        jnp.where(flat == 1, loss_c,
                  jnp.where(flat == 2, num_pos.astype(jnp.float32), 0.0)))
    out_ref[...] = packed[None]


def multibox_loss(loc_data, conf_data, dbox_list, targets):
    """loc_data (B,D,4), conf_data (B,D,C), dbox_list (D,4) [cx,cy,w,h],
    targets (B,NOBJ,5) [xmin,ymin,xmax,ymax,label]."""
    B, D, _ = loc_data.shape
    C = conf_data.shape[2]
    nobj = targets.shape[1]

    d_pad = ((D + 1023) // 1024) * 1024
    L = d_pad // 8
    pad = d_pad - D

    # coord/class-major + dense (8, L) view of the default-box axis.
    # TODO(synk): fold these transposes into the detection head's reshape
    # upstream in a real pipeline (they cost one extra HBM pass here).
    loc_cm = jnp.transpose(loc_data, (0, 2, 1))              # (B,4,D), keep dtype
    conf_cm = jnp.transpose(conf_data, (0, 2, 1))            # (B,C,D)
    if pad:
        loc_cm = jnp.pad(loc_cm, ((0, 0), (0, 0), (0, pad)))
        conf_cm = jnp.pad(conf_cm, ((0, 0), (0, 0), (0, pad)))
    loc_cm = loc_cm.reshape(B, 4, 8, L)
    conf_cm = conf_cm.reshape(B, C, 8, L)

    # Default-box derived constants, exact divides, computed once host-side.
    db = dbox_list.astype(jnp.float32)
    d_cx, d_cy, d_w, d_h = db[:, 0], db[:, 1], db[:, 2], db[:, 3]
    dx1 = d_cx - 0.5 * d_w
    dy1 = d_cy - 0.5 * d_h
    dx2 = d_cx + 0.5 * d_w
    dy2 = d_cy + 0.5 * d_h
    area_d = (dx2 - dx1) * (dy2 - dy1)
    inv_dw = 1.0 / d_w
    inv_dh = 1.0 / d_h
    dbc = jnp.stack([dx1, dy1, dx2, dy2, area_d, d_cx, d_cy, inv_dw, inv_dh], 0)
    if pad:
        # Benign padding boxes: far away, zero size, area/inv set to 1.
        pad_vals = jnp.array([2., 2., 2., 2., 1., 2., 2., 1., 1.],
                             jnp.float32)[:, None]
        dbc = jnp.concatenate([dbc, jnp.broadcast_to(pad_vals, (9, pad))], 1)
    dbc = dbc.reshape(9, 8, L)

    # Truth boxes/labels as flat per-image scalar rows in SMEM.
    tgt_flat = targets.reshape(B, nobj * 5).astype(jnp.float32)

    kernel = functools.partial(_multibox_loss_kernel, num_dbox=D, nobj=nobj,
                               num_classes=C, lanes=L)

    out = pl.pallas_call(
        kernel,
        out_shape=jax.ShapeDtypeStruct((B, 8, 128), jnp.float32),
        grid_spec=pltpu.PrefetchScalarGridSpec(
            num_scalar_prefetch=0,
            grid=(B,),
            in_specs=[
                pl.BlockSpec(memory_space=pltpu.MemorySpace.SMEM),   # targets
                pl.BlockSpec((1, 4, 8, L), lambda b: (b, 0, 0, 0)),  # loc
                pl.BlockSpec((1, C, 8, L), lambda b: (b, 0, 0, 0)),  # conf
                pl.BlockSpec((9, 8, L), lambda b: (0, 0, 0)),        # dbox consts
            ],
            out_specs=pl.BlockSpec((1, 8, 128), lambda b: (b, 0, 0)),
        ),
        compiler_params=pltpu.CompilerParams(
            dimension_semantics=("parallel",),          # images independent
            vmem_limit_bytes=32 * 1024 * 1024),         # safe on v5e/v6e/v7x
    )(tgt_flat, loc_cm, conf_cm, dbc)

    loss_l_b = out[:, 0, 0]
    loss_c_b = out[:, 0, 1]
    npos_b = out[:, 0, 2]
    N = jnp.sum(npos_b)      # NOTE: NaN if a batch has zero positives (same as ref)
    return jnp.sum(loss_l_b) / N, jnp.sum(loss_c_b) / N


if __name__ == "__main__":
    key = jax.random.PRNGKey(0)
    B, D, C, NOBJ = 2, 256, 21, 4   # small stand-in for (B, 8732, 21)

    k1, k2, k3, k4, k5, k6, k7 = jax.random.split(key, 7)

    # SSD head outputs
    loc_data = 0.1 * jax.random.normal(k1, (B, D, 4), dtype=jnp.float32)
    conf_data = jax.random.normal(k2, (B, D, C), dtype=jnp.float32)

    # default boxes in center-size form (cx, cy, w, h)
    centers = jax.random.uniform(k3, (D, 2), minval=0.1, maxval=0.9)
    sizes = jax.random.uniform(k4, (D, 2), minval=0.1, maxval=0.3)
    dbox_list = jnp.concatenate([centers, sizes], axis=1).astype(jnp.float32)

    # targets: [xmin, ymin, xmax, ymax, label]
    mins = jax.random.uniform(k5, (B, NOBJ, 2), minval=0.0, maxval=0.6)
    wh = jax.random.uniform(k6, (B, NOBJ, 2), minval=0.1, maxval=0.35)
    maxs = jnp.minimum(mins + wh, 0.999)
    labels = jax.random.randint(k7, (B, NOBJ, 1), 0, C - 1).astype(jnp.float32)
    targets = jnp.concatenate([mins, maxs, labels], axis=2)

    loss_l, loss_c = multibox_loss(loc_data, conf_data, dbox_list, targets)
    loss_l, loss_c = jax.block_until_ready((loss_l, loss_c))

    assert jnp.isfinite(loss_l) and jnp.isfinite(loss_c)
    print("KERNEL_OK")
</pallas_src>

<mosaic_0001>
module attributes {stable_mosaic.version = 11 : i64} {
  func.func @_multibox_loss_kernel(%arg0: i32, %arg1: memref<2x20xf32, #tpu.memory_space<smem>>, %arg2: memref<1x4x8x128xf32, #tpu.memory_space<vmem>>, %arg3: memref<1x21x8x128xf32, #tpu.memory_space<vmem>>, %arg4: memref<9x8x128xf32, #tpu.memory_space<vmem>>, %arg5: memref<1x8x128xf32, #tpu.memory_space<vmem>>) attributes {dimension_semantics = [#tpu.dimension_semantics<parallel>], iteration_bounds = array<i64: 2>, scalar_prefetch = 0 : i64, scratch_operands = 0 : i64, tpu.core_type = #tpu.core_type<tc>, window_params = [{transform_indices = @transform_0, window_bounds = array<i64: 2, 20>}, {transform_indices = @transform_1, window_bounds = array<i64: 1, 4, 8, 128>}, {transform_indices = @transform_2, window_bounds = array<i64: 1, 21, 8, 128>}, {pipeline_mode = #tpu.pipeline_mode<synchronous>, transform_indices = @transform_3, window_bounds = array<i64: 9, 8, 128>}, {transform_indices = @transform_4, window_bounds = array<i64: 1, 8, 128>}]} {
    %c0 = arith.constant 0 : index
    %c0_0 = arith.constant 0 : index
    %c0_1 = arith.constant 0 : index
    %0 = vector.load %arg4[%c0, %c0_0, %c0_1] : memref<9x8x128xf32, #tpu.memory_space<vmem>>, vector<1x8x128xf32>
    %1 = vector.shape_cast %0 : vector<1x8x128xf32> to vector<8x128xf32>
    %c1 = arith.constant 1 : index
    %c0_2 = arith.constant 0 : index
    %c0_3 = arith.constant 0 : index
    %2 = vector.load %arg4[%c1, %c0_2, %c0_3] : memref<9x8x128xf32, #tpu.memory_space<vmem>>, vector<1x8x128xf32>
    %3 = vector.shape_cast %2 : vector<1x8x128xf32> to vector<8x128xf32>
    %c2 = arith.constant 2 : index
    %c0_4 = arith.constant 0 : index
    %c0_5 = arith.constant 0 : index
    %4 = vector.load %arg4[%c2, %c0_4, %c0_5] : memref<9x8x128xf32, #tpu.memory_space<vmem>>, vector<1x8x128xf32>
    %5 = vector.shape_cast %4 : vector<1x8x128xf32> to vector<8x128xf32>
    %c3 = arith.constant 3 : index
    %c0_6 = arith.constant 0 : index
    %c0_7 = arith.constant 0 : index
    %6 = vector.load %arg4[%c3, %c0_6, %c0_7] : memref<9x8x128xf32, #tpu.memory_space<vmem>>, vector<1x8x128xf32>
    %7 = vector.shape_cast %6 : vector<1x8x128xf32> to vector<8x128xf32>
    %c4 = arith.constant 4 : index
    %c0_8 = arith.constant 0 : index
    %c0_9 = arith.constant 0 : index
    %8 = vector.load %arg4[%c4, %c0_8, %c0_9] : memref<9x8x128xf32, #tpu.memory_space<vmem>>, vector<1x8x128xf32>
    %9 = vector.shape_cast %8 : vector<1x8x128xf32> to vector<8x128xf32>
    %c5 = arith.constant 5 : index
    %c0_10 = arith.constant 0 : index
    %c0_11 = arith.constant 0 : index
    %10 = vector.load %arg4[%c5, %c0_10, %c0_11] : memref<9x8x128xf32, #tpu.memory_space<vmem>>, vector<1x8x128xf32>
    %11 = vector.shape_cast %10 : vector<1x8x128xf32> to vector<8x128xf32>
    %c6 = arith.constant 6 : index
    %c0_12 = arith.constant 0 : index
    %c0_13 = arith.constant 0 : index
    %12 = vector.load %arg4[%c6, %c0_12, %c0_13] : memref<9x8x128xf32, #tpu.memory_space<vmem>>, vector<1x8x128xf32>
    %13 = vector.shape_cast %12 : vector<1x8x128xf32> to vector<8x128xf32>
    %c7 = arith.constant 7 : index
    %c0_14 = arith.constant 0 : index
    %c0_15 = arith.constant 0 : index
    %14 = vector.load %arg4[%c7, %c0_14, %c0_15] : memref<9x8x128xf32, #tpu.memory_space<vmem>>, vector<1x8x128xf32>
    %15 = vector.shape_cast %14 : vector<1x8x128xf32> to vector<8x128xf32>
    %c8 = arith.constant 8 : index
    %c0_16 = arith.constant 0 : index
    %c0_17 = arith.constant 0 : index
    %16 = vector.load %arg4[%c8, %c0_16, %c0_17] : memref<9x8x128xf32, #tpu.memory_space<vmem>>, vector<1x8x128xf32>
    %17 = vector.shape_cast %16 : vector<1x8x128xf32> to vector<8x128xf32>
    %18 = tpu.iota {dimensions = array<i32: 0>} : vector<8x128xi32>
    %19 = tpu.iota {dimensions = array<i32: 1>} : vector<8x128xi32>
    %c128_i32 = arith.constant 128 : i32
    %20 = vector.broadcast %c128_i32 : i32 to vector<8x128xi32>
    %21 = arith.muli %18, %20 : vector<8x128xi32>
    %22 = arith.addi %21, %19 : vector<8x128xi32>
    %c256_i32 = arith.constant 256 : i32
    %23 = vector.broadcast %c256_i32 : i32 to vector<8x128xi32>
    %24 = arith.cmpi slt, %22, %23 : vector<8x128xi32>
    %cst = arith.constant -1.000000e+00 : f32
    %25 = vector.broadcast %cst : f32 to vector<8x128xf32>
    %c0_i32 = arith.constant 0 : i32
    %26 = vector.broadcast %c0_i32 : i32 to vector<8x128xi32>
    %27 = arith.index_cast %arg0 : i32 to index
    %c0_18 = arith.constant 0 : index
    %28 = memref.load %arg1[%27, %c0_18] : memref<2x20xf32, #tpu.memory_space<smem>>
    %29 = arith.index_cast %arg0 : i32 to index
    %c1_19 = arith.constant 1 : index
    %30 = memref.load %arg1[%29, %c1_19] : memref<2x20xf32, #tpu.memory_space<smem>>
    %31 = arith.index_cast %arg0 : i32 to index
    %c2_20 = arith.constant 2 : index
    %32 = memref.load %arg1[%31, %c2_20] : memref<2x20xf32, #tpu.memory_space<smem>>
    %33 = arith.index_cast %arg0 : i32 to index
    %c3_21 = arith.constant 3 : index
    %34 = memref.load %arg1[%33, %c3_21] : memref<2x20xf32, #tpu.memory_space<smem>>
    %35 = arith.index_cast %arg0 : i32 to index
    %c4_22 = arith.constant 4 : index
    %36 = memref.load %arg1[%35, %c4_22] : memref<2x20xf32, #tpu.memory_space<smem>>
    %37 = vector.broadcast %32 : f32 to vector<8x128xf32>
    %38 = arith.minimumf %37, %5 : vector<8x128xf32>
    %39 = vector.broadcast %28 : f32 to vector<8x128xf32>
    %40 = arith.maximumf %39, %1 : vector<8x128xf32>
    %41 = arith.subf %38, %40 : vector<8x128xf32>
    %cst_23 = arith.constant 0.000000e+00 : f32
    %42 = vector.broadcast %cst_23 : f32 to vector<8x128xf32>
    %43 = arith.maximumf %41, %42 : vector<8x128xf32>
    %44 = vector.broadcast %34 : f32 to vector<8x128xf32>
    %45 = arith.minimumf %44, %7 : vector<8x128xf32>
    %46 = vector.broadcast %30 : f32 to vector<8x128xf32>
    %47 = arith.maximumf %46, %3 : vector<8x128xf32>
    %48 = arith.subf %45, %47 : vector<8x128xf32>
    %cst_24 = arith.constant 0.000000e+00 : f32
    %49 = vector.broadcast %cst_24 : f32 to vector<8x128xf32>
    %50 = arith.maximumf %48, %49 : vector<8x128xf32>
    %51 = arith.mulf %43, %50 : vector<8x128xf32>
    %52 = arith.subf %32, %28 : f32
    %53 = arith.subf %34, %30 : f32
    %54 = arith.mulf %52, %53 : f32
    %55 = vector.broadcast %54 : f32 to vector<8x128xf32>
    %56 = arith.addf %55, %9 : vector<8x128xf32>
    %57 = arith.subf %56, %51 : vector<8x128xf32>
    %58 = arith.divf %51, %57 : vector<8x128xf32>
    %cst_25 = arith.constant -1.000000e+00 : f32
    %59 = vector.broadcast %cst_25 : f32 to vector<8x128xf32>
    %60 = arith.select %24, %58, %59 : vector<8x128xi1>, vector<8x128xf32>
    %61 = arith.cmpf ogt, %60, %25 : vector<8x128xf32>
    %62 = arith.select %61, %60, %25 : vector<8x128xi1>, vector<8x128xf32>
    %c0_i32_26 = arith.constant 0 : i32
    %63 = vector.broadcast %c0_i32_26 : i32 to vector<8x128xi32>
    %64 = arith.select %61, %63, %26 : vector<8x128xi1>, vector<8x128xi32>
    %65 = vector.shape_cast %60 : vector<8x128xf32> to vector<1x8x128xf32>
    %cst_27 = arith.constant dense<0xFF800000> : vector<1xf32>
    %66 = vector.multi_reduction <maximumf>, %65, %cst_27 [1, 2] : vector<1x8x128xf32> to vector<1xf32>
    %67 = vector.shape_cast %66 : vector<1xf32> to vector<1x1x1xf32>
    %68 = vector.extract %67[0, 0, 0] : f32 from vector<1x1x1xf32>
    %69 = vector.broadcast %68 : f32 to vector<8x128xf32>
    %70 = arith.cmpf oeq, %60, %69 : vector<8x128xf32>
    %c1024_i32 = arith.constant 1024 : i32
    %71 = vector.broadcast %c1024_i32 : i32 to vector<8x128xi32>
    %72 = arith.select %70, %22, %71 : vector<8x128xi1>, vector<8x128xi32>
    %73 = vector.shape_cast %72 : vector<8x128xi32> to vector<1x8x128xi32>
    %cst_28 = arith.constant dense<2147483647> : vector<1xi32>
    %74 = vector.multi_reduction <minsi>, %73, %cst_28 [1, 2] : vector<1x8x128xi32> to vector<1xi32>
    %75 = vector.shape_cast %74 : vector<1xi32> to vector<1x1x1xi32>
    %76 = vector.extract %75[0, 0, 0] : i32 from vector<1x1x1xi32>
    %77 = arith.index_cast %arg0 : i32 to index
    %c5_29 = arith.constant 5 : index
    %78 = memref.load %arg1[%77, %c5_29] : memref<2x20xf32, #tpu.memory_space<smem>>
    %79 = arith.index_cast %arg0 : i32 to index
    %c6_30 = arith.constant 6 : index
    %80 = memref.load %arg1[%79, %c6_30] : memref<2x20xf32, #tpu.memory_space<smem>>
    %81 = arith.index_cast %arg0 : i32 to index
    %c7_31 = arith.constant 7 : index
    %82 = memref.load %arg1[%81, %c7_31] : memref<2x20xf32, #tpu.memory_space<smem>>
    %83 = arith.index_cast %arg0 : i32 to index
    %c8_32 = arith.constant 8 : index
    %84 = memref.load %arg1[%83, %c8_32] : memref<2x20xf32, #tpu.memory_space<smem>>
    %85 = arith.index_cast %arg0 : i32 to index
    %c9 = arith.constant 9 : index
    %86 = memref.load %arg1[%85, %c9] : memref<2x20xf32, #tpu.memory_space<smem>>
    %87 = vector.broadcast %82 : f32 to vector<8x128xf32>
    %88 = arith.minimumf %87, %5 : vector<8x128xf32>
    %89 = vector.broadcast %78 : f32 to vector<8x128xf32>
    %90 = arith.maximumf %89, %1 : vector<8x128xf32>
    %91 = arith.subf %88, %90 : vector<8x128xf32>
    %cst_33 = arith.constant 0.000000e+00 : f32
    %92 = vector.broadcast %cst_33 : f32 to vector<8x128xf32>
    %93 = arith.maximumf %91, %92 : vector<8x128xf32>
    %94 = vector.broadcast %84 : f32 to vector<8x128xf32>
    %95 = arith.minimumf %94, %7 : vector<8x128xf32>
    %96 = vector.broadcast %80 : f32 to vector<8x128xf32>
    %97 = arith.maximumf %96, %3 : vector<8x128xf32>
    %98 = arith.subf %95, %97 : vector<8x128xf32>
    %cst_34 = arith.constant 0.000000e+00 : f32
    %99 = vector.broadcast %cst_34 : f32 to vector<8x128xf32>
    %100 = arith.maximumf %98, %99 : vector<8x128xf32>
    %101 = arith.mulf %93, %100 : vector<8x128xf32>
    %102 = arith.subf %82, %78 : f32
    %103 = arith.subf %84, %80 : f32
    %104 = arith.mulf %102, %103 : f32
    %105 = vector.broadcast %104 : f32 to vector<8x128xf32>
    %106 = arith.addf %105, %9 : vector<8x128xf32>
    %107 = arith.subf %106, %101 : vector<8x128xf32>
    %108 = arith.divf %101, %107 : vector<8x128xf32>
    %cst_35 = arith.constant -1.000000e+00 : f32
    %109 = vector.broadcast %cst_35 : f32 to vector<8x128xf32>
    %110 = arith.select %24, %108, %109 : vector<8x128xi1>, vector<8x128xf32>
    %111 = arith.cmpf ogt, %110, %62 : vector<8x128xf32>
    %112 = arith.select %111, %110, %62 : vector<8x128xi1>, vector<8x128xf32>
    %c1_i32 = arith.constant 1 : i32
    %113 = vector.broadcast %c1_i32 : i32 to vector<8x128xi32>
    %114 = arith.select %111, %113, %64 : vector<8x128xi1>, vector<8x128xi32>
    %115 = vector.shape_cast %110 : vector<8x128xf32> to vector<1x8x128xf32>
    %cst_36 = arith.constant dense<0xFF800000> : vector<1xf32>
    %116 = vector.multi_reduction <maximumf>, %115, %cst_36 [1, 2] : vector<1x8x128xf32> to vector<1xf32>
    %117 = vector.shape_cast %116 : vector<1xf32> to vector<1x1x1xf32>
    %118 = vector.extract %117[0, 0, 0] : f32 from vector<1x1x1xf32>
    %119 = vector.broadcast %118 : f32 to vector<8x128xf32>
    %120 = arith.cmpf oeq, %110, %119 : vector<8x128xf32>
    %c1024_i32_37 = arith.constant 1024 : i32
    %121 = vector.broadcast %c1024_i32_37 : i32 to vector<8x128xi32>
    %122 = arith.select %120, %22, %121 : vector<8x128xi1>, vector<8x128xi32>
    %123 = vector.shape_cast %122 : vector<8x128xi32> to vector<1x8x128xi32>
    %cst_38 = arith.constant dense<2147483647> : vector<1xi32>
    %124 = vector.multi_reduction <minsi>, %123, %cst_38 [1, 2] : vector<1x8x128xi32> to vector<1xi32>
    %125 = vector.shape_cast %124 : vector<1xi32> to vector<1x1x1xi32>
    %126 = vector.extract %125[0, 0, 0] : i32 from vector<1x1x1xi32>
    %127 = arith.index_cast %arg0 : i32 to index
    %c10 = arith.constant 10 : index
    %128 = memref.load %arg1[%127, %c10] : memref<2x20xf32, #tpu.memory_space<smem>>
    %129 = arith.index_cast %arg0 : i32 to index
    %c11 = arith.constant 11 : index
    %130 = memref.load %arg1[%129, %c11] : memref<2x20xf32, #tpu.memory_space<smem>>
    %131 = arith.index_cast %arg0 : i32 to index
    %c12 = arith.constant 12 : index
    %132 = memref.load %arg1[%131, %c12] : memref<2x20xf32, #tpu.memory_space<smem>>
    %133 = arith.index_cast %arg0 : i32 to index
    %c13 = arith.constant 13 : index
    %134 = memref.load %arg1[%133, %c13] : memref<2x20xf32, #tpu.memory_space<smem>>
    %135 = arith.index_cast %arg0 : i32 to index
    %c14 = arith.constant 14 : index
    %136 = memref.load %arg1[%135, %c14] : memref<2x20xf32, #tpu.memory_space<smem>>
    %137 = vector.broadcast %132 : f32 to vector<8x128xf32>
    %138 = arith.minimumf %137, %5 : vector<8x128xf32>
    %139 = vector.broadcast %128 : f32 to vector<8x128xf32>
    %140 = arith.maximumf %139, %1 : vector<8x128xf32>
    %141 = arith.subf %138, %140 : vector<8x128xf32>
    %cst_39 = arith.constant 0.000000e+00 : f32
    %142 = vector.broadcast %cst_39 : f32 to vector<8x128xf32>
    %143 = arith.maximumf %141, %142 : vector<8x128xf32>
    %144 = vector.broadcast %134 : f32 to vector<8x128xf32>
    %145 = arith.minimumf %144, %7 : vector<8x128xf32>
    %146 = vector.broadcast %130 : f32 to vector<8x128xf32>
    %147 = arith.maximumf %146, %3 : vector<8x128xf32>
    %148 = arith.subf %145, %147 : vector<8x128xf32>
    %cst_40 = arith.constant 0.000000e+00 : f32
    %149 = vector.broadcast %cst_40 : f32 to vector<8x128xf32>
    %150 = arith.maximumf %148, %149 : vector<8x128xf32>
    %151 = arith.mulf %143, %150 : vector<8x128xf32>
    %152 = arith.subf %132, %128 : f32
    %153 = arith.subf %134, %130 : f32
    %154 = arith.mulf %152, %153 : f32
    %155 = vector.broadcast %154 : f32 to vector<8x128xf32>
    %156 = arith.addf %155, %9 : vector<8x128xf32>
    %157 = arith.subf %156, %151 : vector<8x128xf32>
    %158 = arith.divf %151, %157 : vector<8x128xf32>
    %cst_41 = arith.constant -1.000000e+00 : f32
    %159 = vector.broadcast %cst_41 : f32 to vector<8x128xf32>
    %160 = arith.select %24, %158, %159 : vector<8x128xi1>, vector<8x128xf32>
    %161 = arith.cmpf ogt, %160, %112 : vector<8x128xf32>
    %162 = arith.select %161, %160, %112 : vector<8x128xi1>, vector<8x128xf32>
    %c2_i32 = arith.constant 2 : i32
    %163 = vector.broadcast %c2_i32 : i32 to vector<8x128xi32>
    %164 = arith.select %161, %163, %114 : vector<8x128xi1>, vector<8x128xi32>
    %165 = vector.shape_cast %160 : vector<8x128xf32> to vector<1x8x128xf32>
    %cst_42 = arith.constant dense<0xFF800000> : vector<1xf32>
    %166 = vector.multi_reduction <maximumf>, %165, %cst_42 [1, 2] : vector<1x8x128xf32> to vector<1xf32>
    %167 = vector.shape_cast %166 : vector<1xf32> to vector<1x1x1xf32>
    %168 = vector.extract %167[0, 0, 0] : f32 from vector<1x1x1xf32>
    %169 = vector.broadcast %168 : f32 to vector<8x128xf32>
    %170 = arith.cmpf oeq, %160, %169 : vector<8x128xf32>
    %c1024_i32_43 = arith.constant 1024 : i32
    %171 = vector.broadcast %c1024_i32_43 : i32 to vector<8x128xi32>
    %172 = arith.select %170, %22, %171 : vector<8x128xi1>, vector<8x128xi32>
    %173 = vector.shape_cast %172 : vector<8x128xi32> to vector<1x8x128xi32>
    %cst_44 = arith.constant dense<2147483647> : vector<1xi32>
    %174 = vector.multi_reduction <minsi>, %173, %cst_44 [1, 2] : vector<1x8x128xi32> to vector<1xi32>
    %175 = vector.shape_cast %174 : vector<1xi32> to vector<1x1x1xi32>
    %176 = vector.extract %175[0, 0, 0] : i32 from vector<1x1x1xi32>
    %177 = arith.index_cast %arg0 : i32 to index
    %c15 = arith.constant 15 : index
    %178 = memref.load %arg1[%177, %c15] : memref<2x20xf32, #tpu.memory_space<smem>>
    %179 = arith.index_cast %arg0 : i32 to index
    %c16 = arith.constant 16 : index
    %180 = memref.load %arg1[%179, %c16] : memref<2x20xf32, #tpu.memory_space<smem>>
    %181 = arith.index_cast %arg0 : i32 to index
    %c17 = arith.constant 17 : index
    %182 = memref.load %arg1[%181, %c17] : memref<2x20xf32, #tpu.memory_space<smem>>
    %183 = arith.index_cast %arg0 : i32 to index
    %c18 = arith.constant 18 : index
    %184 = memref.load %arg1[%183, %c18] : memref<2x20xf32, #tpu.memory_space<smem>>
    %185 = arith.index_cast %arg0 : i32 to index
    %c19 = arith.constant 19 : index
    %186 = memref.load %arg1[%185, %c19] : memref<2x20xf32, #tpu.memory_space<smem>>
    %187 = vector.broadcast %182 : f32 to vector<8x128xf32>
    %188 = arith.minimumf %187, %5 : vector<8x128xf32>
    %189 = vector.broadcast %178 : f32 to vector<8x128xf32>
    %190 = arith.maximumf %189, %1 : vector<8x128xf32>
    %191 = arith.subf %188, %190 : vector<8x128xf32>
    %cst_45 = arith.constant 0.000000e+00 : f32
    %192 = vector.broadcast %cst_45 : f32 to vector<8x128xf32>
    %193 = arith.maximumf %191, %192 : vector<8x128xf32>
    %194 = vector.broadcast %184 : f32 to vector<8x128xf32>
    %195 = arith.minimumf %194, %7 : vector<8x128xf32>
    %196 = vector.broadcast %180 : f32 to vector<8x128xf32>
    %197 = arith.maximumf %196, %3 : vector<8x128xf32>
    %198 = arith.subf %195, %197 : vector<8x128xf32>
    %cst_46 = arith.constant 0.000000e+00 : f32
    %199 = vector.broadcast %cst_46 : f32 to vector<8x128xf32>
    %200 = arith.maximumf %198, %199 : vector<8x128xf32>
    %201 = arith.mulf %193, %200 : vector<8x128xf32>
    %202 = arith.subf %182, %178 : f32
    %203 = arith.subf %184, %180 : f32
    %204 = arith.mulf %202, %203 : f32
    %205 = vector.broadcast %204 : f32 to vector<8x128xf32>
    %206 = arith.addf %205, %9 : vector<8x128xf32>
    %207 = arith.subf %206, %201 : vector<8x128xf32>
    %208 = arith.divf %201, %207 : vector<8x128xf32>
    %cst_47 = arith.constant -1.000000e+00 : f32
    %209 = vector.broadcast %cst_47 : f32 to vector<8x128xf32>
    %210 = arith.select %24, %208, %209 : vector<8x128xi1>, vector<8x128xf32>
    %211 = arith.cmpf ogt, %210, %162 : vector<8x128xf32>
    %212 = arith.select %211, %210, %162 : vector<8x128xi1>, vector<8x128xf32>
    %c3_i32 = arith.constant 3 : i32
    %213 = vector.broadcast %c3_i32 : i32 to vector<8x128xi32>
    %214 = arith.select %211, %213, %164 : vector<8x128xi1>, vector<8x128xi32>
    %215 = vector.shape_cast %210 : vector<8x128xf32> to vector<1x8x128xf32>
    %cst_48 = arith.constant dense<0xFF800000> : vector<1xf32>
    %216 = vector.multi_reduction <maximumf>, %215, %cst_48 [1, 2] : vector<1x8x128xf32> to vector<1xf32>
    %217 = vector.shape_cast %216 : vector<1xf32> to vector<1x1x1xf32>
    %218 = vector.extract %217[0, 0, 0] : f32 from vector<1x1x1xf32>
    %219 = vector.broadcast %218 : f32 to vector<8x128xf32>
    %220 = arith.cmpf oeq, %210, %219 : vector<8x128xf32>
    %c1024_i32_49 = arith.constant 1024 : i32
    %221 = vector.broadcast %c1024_i32_49 : i32 to vector<8x128xi32>
    %222 = arith.select %220, %22, %221 : vector<8x128xi1>, vector<8x128xi32>
    %223 = vector.shape_cast %222 : vector<8x128xi32> to vector<1x8x128xi32>
    %cst_50 = arith.constant dense<2147483647> : vector<1xi32>
    %224 = vector.multi_reduction <minsi>, %223, %cst_50 [1, 2] : vector<1x8x128xi32> to vector<1xi32>
    %225 = vector.shape_cast %224 : vector<1xi32> to vector<1x1x1xi32>
    %226 = vector.extract %225[0, 0, 0] : i32 from vector<1x1x1xi32>
    %227 = vector.broadcast %76 : i32 to vector<8x128xi32>
    %228 = arith.cmpi eq, %22, %227 : vector<8x128xi32>
    %c0_i32_51 = arith.constant 0 : i32
    %229 = vector.broadcast %c0_i32_51 : i32 to vector<8x128xi32>
    %230 = arith.select %228, %229, %214 : vector<8x128xi1>, vector<8x128xi32>
    %cst_52 = arith.constant 2.000000e+00 : f32
    %231 = vector.broadcast %cst_52 : f32 to vector<8x128xf32>
    %232 = arith.select %228, %231, %212 : vector<8x128xi1>, vector<8x128xf32>
    %233 = vector.broadcast %126 : i32 to vector<8x128xi32>
    %234 = arith.cmpi eq, %22, %233 : vector<8x128xi32>
    %c1_i32_53 = arith.constant 1 : i32
    %235 = vector.broadcast %c1_i32_53 : i32 to vector<8x128xi32>
    %236 = arith.select %234, %235, %230 : vector<8x128xi1>, vector<8x128xi32>
    %cst_54 = arith.constant 2.000000e+00 : f32
    %237 = vector.broadcast %cst_54 : f32 to vector<8x128xf32>
    %238 = arith.select %234, %237, %232 : vector<8x128xi1>, vector<8x128xf32>
    %239 = vector.broadcast %176 : i32 to vector<8x128xi32>
    %240 = arith.cmpi eq, %22, %239 : vector<8x128xi32>
    %c2_i32_55 = arith.constant 2 : i32
    %241 = vector.broadcast %c2_i32_55 : i32 to vector<8x128xi32>
    %242 = arith.select %240, %241, %236 : vector<8x128xi1>, vector<8x128xi32>
    %cst_56 = arith.constant 2.000000e+00 : f32
    %243 = vector.broadcast %cst_56 : f32 to vector<8x128xf32>
    %244 = arith.select %240, %243, %238 : vector<8x128xi1>, vector<8x128xf32>
    %245 = vector.broadcast %226 : i32 to vector<8x128xi32>
    %246 = arith.cmpi eq, %22, %245 : vector<8x128xi32>
    %c3_i32_57 = arith.constant 3 : i32
    %247 = vector.broadcast %c3_i32_57 : i32 to vector<8x128xi32>
    %248 = arith.select %246, %247, %242 : vector<8x128xi1>, vector<8x128xi32>
    %cst_58 = arith.constant 2.000000e+00 : f32
    %249 = vector.broadcast %cst_58 : f32 to vector<8x128xf32>
    %250 = arith.select %246, %249, %244 : vector<8x128xi1>, vector<8x128xf32>
    %cst_59 = arith.constant 0.000000e+00 : f32
    %251 = vector.broadcast %cst_59 : f32 to vector<8x128xf32>
    %cst_60 = arith.constant 0.000000e+00 : f32
    %252 = vector.broadcast %cst_60 : f32 to vector<8x128xf32>
    %cst_61 = arith.constant 0.000000e+00 : f32
    %253 = vector.broadcast %cst_61 : f32 to vector<8x128xf32>
    %cst_62 = arith.constant 0.000000e+00 : f32
    %254 = vector.broadcast %cst_62 : f32 to vector<8x128xf32>
    %cst_63 = arith.constant 0.000000e+00 : f32
    %255 = vector.broadcast %cst_63 : f32 to vector<8x128xf32>
    %c0_i32_64 = arith.constant 0 : i32
    %256 = vector.broadcast %c0_i32_64 : i32 to vector<8x128xi32>
    %257 = arith.cmpi eq, %248, %256 : vector<8x128xi32>
    %258 = vector.broadcast %28 : f32 to vector<8x128xf32>
    %259 = arith.select %257, %258, %251 : vector<8x128xi1>, vector<8x128xf32>
    %260 = vector.broadcast %30 : f32 to vector<8x128xf32>
    %261 = arith.select %257, %260, %252 : vector<8x128xi1>, vector<8x128xf32>
    %262 = vector.broadcast %32 : f32 to vector<8x128xf32>
    %263 = arith.select %257, %262, %253 : vector<8x128xi1>, vector<8x128xf32>
    %264 = vector.broadcast %34 : f32 to vector<8x128xf32>
    %265 = arith.select %257, %264, %254 : vector<8x128xi1>, vector<8x128xf32>
    %266 = vector.broadcast %36 : f32 to vector<8x128xf32>
    %267 = arith.select %257, %266, %255 : vector<8x128xi1>, vector<8x128xf32>
    %c1_i32_65 = arith.constant 1 : i32
    %268 = vector.broadcast %c1_i32_65 : i32 to vector<8x128xi32>
    %269 = arith.cmpi eq, %248, %268 : vector<8x128xi32>
    %270 = vector.broadcast %78 : f32 to vector<8x128xf32>
    %271 = arith.select %269, %270, %259 : vector<8x128xi1>, vector<8x128xf32>
    %272 = vector.broadcast %80 : f32 to vector<8x128xf32>
    %273 = arith.select %269, %272, %261 : vector<8x128xi1>, vector<8x128xf32>
    %274 = vector.broadcast %82 : f32 to vector<8x128xf32>
    %275 = arith.select %269, %274, %263 : vector<8x128xi1>, vector<8x128xf32>
    %276 = vector.broadcast %84 : f32 to vector<8x128xf32>
    %277 = arith.select %269, %276, %265 : vector<8x128xi1>, vector<8x128xf32>
    %278 = vector.broadcast %86 : f32 to vector<8x128xf32>
    %279 = arith.select %269, %278, %267 : vector<8x128xi1>, vector<8x128xf32>
    %c2_i32_66 = arith.constant 2 : i32
    %280 = vector.broadcast %c2_i32_66 : i32 to vector<8x128xi32>
    %281 = arith.cmpi eq, %248, %280 : vector<8x128xi32>
    %282 = vector.broadcast %128 : f32 to vector<8x128xf32>
    %283 = arith.select %281, %282, %271 : vector<8x128xi1>, vector<8x128xf32>
    %284 = vector.broadcast %130 : f32 to vector<8x128xf32>
    %285 = arith.select %281, %284, %273 : vector<8x128xi1>, vector<8x128xf32>
    %286 = vector.broadcast %132 : f32 to vector<8x128xf32>
    %287 = arith.select %281, %286, %275 : vector<8x128xi1>, vector<8x128xf32>
    %288 = vector.broadcast %134 : f32 to vector<8x128xf32>
    %289 = arith.select %281, %288, %277 : vector<8x128xi1>, vector<8x128xf32>
    %290 = vector.broadcast %136 : f32 to vector<8x128xf32>
    %291 = arith.select %281, %290, %279 : vector<8x128xi1>, vector<8x128xf32>
    %c3_i32_67 = arith.constant 3 : i32
    %292 = vector.broadcast %c3_i32_67 : i32 to vector<8x128xi32>
    %293 = arith.cmpi eq, %248, %292 : vector<8x128xi32>
    %294 = vector.broadcast %178 : f32 to vector<8x128xf32>
    %295 = arith.select %293, %294, %283 : vector<8x128xi1>, vector<8x128xf32>
    %296 = vector.broadcast %180 : f32 to vector<8x128xf32>
    %297 = arith.select %293, %296, %285 : vector<8x128xi1>, vector<8x128xf32>
    %298 = vector.broadcast %182 : f32 to vector<8x128xf32>
    %299 = arith.select %293, %298, %287 : vector<8x128xi1>, vector<8x128xf32>
    %300 = vector.broadcast %184 : f32 to vector<8x128xf32>
    %301 = arith.select %293, %300, %289 : vector<8x128xi1>, vector<8x128xf32>
    %302 = vector.broadcast %186 : f32 to vector<8x128xf32>
    %303 = arith.select %293, %302, %291 : vector<8x128xi1>, vector<8x128xf32>
    %cst_68 = arith.constant 5.000000e-01 : f32
    %304 = vector.broadcast %cst_68 : f32 to vector<8x128xf32>
    %305 = arith.cmpf olt, %250, %304 : vector<8x128xf32>
    %306 = arith.fptosi %303 : vector<8x128xf32> to vector<8x128xi32>
    %c1_i32_69 = arith.constant 1 : i32
    %307 = vector.broadcast %c1_i32_69 : i32 to vector<8x128xi32>
    %308 = arith.addi %306, %307 : vector<8x128xi32>
    %c0_i32_70 = arith.constant 0 : i32
    %309 = vector.broadcast %c0_i32_70 : i32 to vector<8x128xi32>
    %310 = arith.select %305, %309, %308 : vector<8x128xi1>, vector<8x128xi32>
    %c0_i32_71 = arith.constant 0 : i32
    %311 = vector.broadcast %c0_i32_71 : i32 to vector<8x128xi32>
    %312 = arith.cmpi sgt, %310, %311 : vector<8x128xi32>
    %313 = arith.addf %295, %299 : vector<8x128xf32>
    %cst_72 = arith.constant 5.000000e-01 : f32
    %314 = vector.broadcast %cst_72 : f32 to vector<8x128xf32>
    %315 = arith.mulf %313, %314 : vector<8x128xf32>
    %316 = arith.subf %315, %11 : vector<8x128xf32>
    %317 = arith.mulf %316, %15 : vector<8x128xf32>
    %cst_73 = arith.constant 1.000000e+01 : f32
    %318 = vector.broadcast %cst_73 : f32 to vector<8x128xf32>
    %319 = arith.mulf %317, %318 : vector<8x128xf32>
    %320 = arith.addf %297, %301 : vector<8x128xf32>
    %cst_74 = arith.constant 5.000000e-01 : f32
    %321 = vector.broadcast %cst_74 : f32 to vector<8x128xf32>
    %322 = arith.mulf %320, %321 : vector<8x128xf32>
    %323 = arith.subf %322, %13 : vector<8x128xf32>
    %324 = arith.mulf %323, %17 : vector<8x128xf32>
    %cst_75 = arith.constant 1.000000e+01 : f32
    %325 = vector.broadcast %cst_75 : f32 to vector<8x128xf32>
    %326 = arith.mulf %324, %325 : vector<8x128xf32>
    %327 = arith.subf %299, %295 : vector<8x128xf32>
    %328 = arith.mulf %327, %15 : vector<8x128xf32>
    %329 = math.log %328 : vector<8x128xf32>
    %cst_76 = arith.constant 5.000000e+00 : f32
    %330 = vector.broadcast %cst_76 : f32 to vector<8x128xf32>
    %331 = arith.mulf %329, %330 : vector<8x128xf32>
    %332 = arith.subf %301, %297 : vector<8x128xf32>
    %333 = arith.mulf %332, %17 : vector<8x128xf32>
    %334 = math.log %333 : vector<8x128xf32>
    %cst_77 = arith.constant 5.000000e+00 : f32
    %335 = vector.broadcast %cst_77 : f32 to vector<8x128xf32>
    %336 = arith.mulf %334, %335 : vector<8x128xf32>
    %c0_78 = arith.constant 0 : index
    %c0_79 = arith.constant 0 : index
    %c0_80 = arith.constant 0 : index
    %c0_81 = arith.constant 0 : index
    %337 = vector.load %arg2[%c0_78, %c0_79, %c0_80, %c0_81] : memref<1x4x8x128xf32, #tpu.memory_space<vmem>>, vector<1x1x8x128xf32>
    %338 = vector.shape_cast %337 : vector<1x1x8x128xf32> to vector<8x128xf32>
    %339 = arith.subf %338, %319 : vector<8x128xf32>
    %340 = math.absf %339 : vector<8x128xf32>
    %cst_82 = arith.constant 1.000000e+00 : f32
    %341 = vector.broadcast %cst_82 : f32 to vector<8x128xf32>
    %342 = arith.cmpf olt, %340, %341 : vector<8x128xf32>
    %cst_83 = arith.constant 5.000000e-01 : f32
    %343 = vector.broadcast %cst_83 : f32 to vector<8x128xf32>
    %344 = arith.mulf %343, %339 : vector<8x128xf32>
    %345 = arith.mulf %344, %339 : vector<8x128xf32>
    %cst_84 = arith.constant 5.000000e-01 : f32
    %346 = vector.broadcast %cst_84 : f32 to vector<8x128xf32>
    %347 = arith.subf %340, %346 : vector<8x128xf32>
    %348 = arith.select %342, %345, %347 : vector<8x128xi1>, vector<8x128xf32>
    %c0_85 = arith.constant 0 : index
    %c1_86 = arith.constant 1 : index
    %c0_87 = arith.constant 0 : index
    %c0_88 = arith.constant 0 : index
    %349 = vector.load %arg2[%c0_85, %c1_86, %c0_87, %c0_88] : memref<1x4x8x128xf32, #tpu.memory_space<vmem>>, vector<1x1x8x128xf32>
    %350 = vector.shape_cast %349 : vector<1x1x8x128xf32> to vector<8x128xf32>
    %351 = arith.subf %350, %326 : vector<8x128xf32>
    %352 = math.absf %351 : vector<8x128xf32>
    %cst_89 = arith.constant 1.000000e+00 : f32
    %353 = vector.broadcast %cst_89 : f32 to vector<8x128xf32>
    %354 = arith.cmpf olt, %352, %353 : vector<8x128xf32>
    %cst_90 = arith.constant 5.000000e-01 : f32
    %355 = vector.broadcast %cst_90 : f32 to vector<8x128xf32>
    %356 = arith.mulf %355, %351 : vector<8x128xf32>
    %357 = arith.mulf %356, %351 : vector<8x128xf32>
    %cst_91 = arith.constant 5.000000e-01 : f32
    %358 = vector.broadcast %cst_91 : f32 to vector<8x128xf32>
    %359 = arith.subf %352, %358 : vector<8x128xf32>
    %360 = arith.select %354, %357, %359 : vector<8x128xi1>, vector<8x128xf32>
    %361 = arith.addf %348, %360 : vector<8x128xf32>
    %c0_92 = arith.constant 0 : index
    %c2_93 = arith.constant 2 : index
    %c0_94 = arith.constant 0 : index
    %c0_95 = arith.constant 0 : index
    %362 = vector.load %arg2[%c0_92, %c2_93, %c0_94, %c0_95] : memref<1x4x8x128xf32, #tpu.memory_space<vmem>>, vector<1x1x8x128xf32>
    %363 = vector.shape_cast %362 : vector<1x1x8x128xf32> to vector<8x128xf32>
    %364 = arith.subf %363, %331 : vector<8x128xf32>
    %365 = math.absf %364 : vector<8x128xf32>
    %cst_96 = arith.constant 1.000000e+00 : f32
    %366 = vector.broadcast %cst_96 : f32 to vector<8x128xf32>
    %367 = arith.cmpf olt, %365, %366 : vector<8x128xf32>
    %cst_97 = arith.constant 5.000000e-01 : f32
    %368 = vector.broadcast %cst_97 : f32 to vector<8x128xf32>
    %369 = arith.mulf %368, %364 : vector<8x128xf32>
    %370 = arith.mulf %369, %364 : vector<8x128xf32>
    %cst_98 = arith.constant 5.000000e-01 : f32
    %371 = vector.broadcast %cst_98 : f32 to vector<8x128xf32>
    %372 = arith.subf %365, %371 : vector<8x128xf32>
    %373 = arith.select %367, %370, %372 : vector<8x128xi1>, vector<8x128xf32>
    %374 = arith.addf %361, %373 : vector<8x128xf32>
    %c0_99 = arith.constant 0 : index
    %c3_100 = arith.constant 3 : index
    %c0_101 = arith.constant 0 : index
    %c0_102 = arith.constant 0 : index
    %375 = vector.load %arg2[%c0_99, %c3_100, %c0_101, %c0_102] : memref<1x4x8x128xf32, #tpu.memory_space<vmem>>, vector<1x1x8x128xf32>
    %376 = vector.shape_cast %375 : vector<1x1x8x128xf32> to vector<8x128xf32>
    %377 = arith.subf %376, %336 : vector<8x128xf32>
    %378 = math.absf %377 : vector<8x128xf32>
    %cst_103 = arith.constant 1.000000e+00 : f32
    %379 = vector.broadcast %cst_103 : f32 to vector<8x128xf32>
    %380 = arith.cmpf olt, %378, %379 : vector<8x128xf32>
    %cst_104 = arith.constant 5.000000e-01 : f32
    %381 = vector.broadcast %cst_104 : f32 to vector<8x128xf32>
    %382 = arith.mulf %381, %377 : vector<8x128xf32>
    %383 = arith.mulf %382, %377 : vector<8x128xf32>
    %cst_105 = arith.constant 5.000000e-01 : f32
    %384 = vector.broadcast %cst_105 : f32 to vector<8x128xf32>
    %385 = arith.subf %378, %384 : vector<8x128xf32>
    %386 = arith.select %380, %383, %385 : vector<8x128xi1>, vector<8x128xf32>
    %387 = arith.addf %374, %386 : vector<8x128xf32>
    %cst_106 = arith.constant 0.000000e+00 : f32
    %388 = vector.broadcast %cst_106 : f32 to vector<8x128xf32>
    %389 = arith.select %312, %387, %388 : vector<8x128xi1>, vector<8x128xf32>
    %390 = vector.shape_cast %389 : vector<8x128xf32> to vector<1x8x128xf32>
    %cst_107 = arith.constant dense<0.000000e+00> : vector<1xf32>
    %391 = vector.multi_reduction <add>, %390, %cst_107 [1, 2] : vector<1x8x128xf32> to vector<1xf32>
    %392 = vector.shape_cast %391 : vector<1xf32> to vector<1x1x1xf32>
    %393 = vector.extract %392[0, 0, 0] : f32 from vector<1x1x1xf32>
    %c0_108 = arith.constant 0 : index
    %c0_109 = arith.constant 0 : index
    %c0_110 = arith.constant 0 : index
    %c0_111 = arith.constant 0 : index
    %394 = vector.load %arg3[%c0_108, %c0_109, %c0_110, %c0_111] : memref<1x21x8x128xf32, #tpu.memory_space<vmem>>, vector<1x1x8x128xf32>
    %395 = vector.shape_cast %394 : vector<1x1x8x128xf32> to vector<8x128xf32>
    %c0_112 = arith.constant 0 : index
    %c1_113 = arith.constant 1 : index
    %c0_114 = arith.constant 0 : index
    %c0_115 = arith.constant 0 : index
    %396 = vector.load %arg3[%c0_112, %c1_113, %c0_114, %c0_115] : memref<1x21x8x128xf32, #tpu.memory_space<vmem>>, vector<1x1x8x128xf32>
    %397 = vector.shape_cast %396 : vector<1x1x8x128xf32> to vector<8x128xf32>
    %398 = arith.maximumf %395, %397 : vector<8x128xf32>
    %c0_116 = arith.constant 0 : index
    %c2_117 = arith.constant 2 : index
    %c0_118 = arith.constant 0 : index
    %c0_119 = arith.constant 0 : index
    %399 = vector.load %arg3[%c0_116, %c2_117, %c0_118, %c0_119] : memref<1x21x8x128xf32, #tpu.memory_space<vmem>>, vector<1x1x8x128xf32>
    %400 = vector.shape_cast %399 : vector<1x1x8x128xf32> to vector<8x128xf32>
    %401 = arith.maximumf %398, %400 : vector<8x128xf32>
    %c0_120 = arith.constant 0 : index
    %c3_121 = arith.constant 3 : index
    %c0_122 = arith.constant 0 : index
    %c0_123 = arith.constant 0 : index
    %402 = vector.load %arg3[%c0_120, %c3_121, %c0_122, %c0_123] : memref<1x21x8x128xf32, #tpu.memory_space<vmem>>, vector<1x1x8x128xf32>
    %403 = vector.shape_cast %402 : vector<1x1x8x128xf32> to vector<8x128xf32>
    %404 = arith.maximumf %401, %403 : vector<8x128xf32>
    %c0_124 = arith.constant 0 : index
    %c4_125 = arith.constant 4 : index
    %c0_126 = arith.constant 0 : index
    %c0_127 = arith.constant 0 : index
    %405 = vector.load %arg3[%c0_124, %c4_125, %c0_126, %c0_127] : memref<1x21x8x128xf32, #tpu.memory_space<vmem>>, vector<1x1x8x128xf32>
    %406 = vector.shape_cast %405 : vector<1x1x8x128xf32> to vector<8x128xf32>
    %407 = arith.maximumf %404, %406 : vector<8x128xf32>
    %c0_128 = arith.constant 0 : index
    %c5_129 = arith.constant 5 : index
    %c0_130 = arith.constant 0 : index
    %c0_131 = arith.constant 0 : index
    %408 = vector.load %arg3[%c0_128, %c5_129, %c0_130, %c0_131] : memref<1x21x8x128xf32, #tpu.memory_space<vmem>>, vector<1x1x8x128xf32>
    %409 = vector.shape_cast %408 : vector<1x1x8x128xf32> to vector<8x128xf32>
    %410 = arith.maximumf %407, %409 : vector<8x128xf32>
    %c0_132 = arith.constant 0 : index
    %c6_133 = arith.constant 6 : index
    %c0_134 = arith.constant 0 : index
    %c0_135 = arith.constant 0 : index
    %411 = vector.load %arg3[%c0_132, %c6_133, %c0_134, %c0_135] : memref<1x21x8x128xf32, #tpu.memory_space<vmem>>, vector<1x1x8x128xf32>
    %412 = vector.shape_cast %411 : vector<1x1x8x128xf32> to vector<8x128xf32>
    %413 = arith.maximumf %410, %412 : vector<8x128xf32>
    %c0_136 = arith.constant 0 : index
    %c7_137 = arith.constant 7 : index
    %c0_138 = arith.constant 0 : index
    %c0_139 = arith.constant 0 : index
    %414 = vector.load %arg3[%c0_136, %c7_137, %c0_138, %c0_139] : memref<1x21x8x128xf32, #tpu.memory_space<vmem>>, vector<1x1x8x128xf32>
    %415 = vector.shape_cast %414 : vector<1x1x8x128xf32> to vector<8x128xf32>
    %416 = arith.maximumf %413, %415 : vector<8x128xf32>
    %c0_140 = arith.constant 0 : index
    %c8_141 = arith.constant 8 : index
    %c0_142 = arith.constant 0 : index
    %c0_143 = arith.constant 0 : index
    %417 = vector.load %arg3[%c0_140, %c8_141, %c0_142, %c0_143] : memref<1x21x8x128xf32, #tpu.memory_space<vmem>>, vector<1x1x8x128xf32>
    %418 = vector.shape_cast %417 : vector<1x1x8x128xf32> to vector<8x128xf32>
    %419 = arith.maximumf %416, %418 : vector<8x128xf32>
    %c0_144 = arith.constant 0 : index
    %c9_145 = arith.constant 9 : index
    %c0_146 = arith.constant 0 : index
    %c0_147 = arith.constant 0 : index
    %420 = vector.load %arg3[%c0_144, %c9_145, %c0_146, %c0_147] : memref<1x21x8x128xf32, #tpu.memory_space<vmem>>, vector<1x1x8x128xf32>
    %421 = vector.shape_cast %420 : vector<1x1x8x128xf32> to vector<8x128xf32>
    %422 = arith.maximumf %419, %421 : vector<8x128xf32>
    %c0_148 = arith.constant 0 : index
    %c10_149 = arith.constant 10 : index
    %c0_150 = arith.constant 0 : index
    %c0_151 = arith.constant 0 : index
    %423 = vector.load %arg3[%c0_148, %c10_149, %c0_150, %c0_151] : memref<1x21x8x128xf32, #tpu.memory_space<vmem>>, vector<1x1x8x128xf32>
    %424 = vector.shape_cast %423 : vector<1x1x8x128xf32> to vector<8x128xf32>
    %425 = arith.maximumf %422, %424 : vector<8x128xf32>
    %c0_152 = arith.constant 0 : index
    %c11_153 = arith.constant 11 : index
    %c0_154 = arith.constant 0 : index
    %c0_155 = arith.constant 0 : index
    %426 = vector.load %arg3[%c0_152, %c11_153, %c0_154, %c0_155] : memref<1x21x8x128xf32, #tpu.memory_space<vmem>>, vector<1x1x8x128xf32>
    %427 = vector.shape_cast %426 : vector<1x1x8x128xf32> to vector<8x128xf32>
    %428 = arith.maximumf %425, %427 : vector<8x128xf32>
    %c0_156 = arith.constant 0 : index
    %c12_157 = arith.constant 12 : index
    %c0_158 = arith.constant 0 : index
    %c0_159 = arith.constant 0 : index
    %429 = vector.load %arg3[%c0_156, %c12_157, %c0_158, %c0_159] : memref<1x21x8x128xf32, #tpu.memory_space<vmem>>, vector<1x1x8x128xf32>
    %430 = vector.shape_cast %429 : vector<1x1x8x128xf32> to vector<8x128xf32>
    %431 = arith.maximumf %428, %430 : vector<8x128xf32>
    %c0_160 = arith.constant 0 : index
    %c13_161 = arith.constant 13 : index
    %c0_162 = arith.constant 0 : index
    %c0_163 = arith.constant 0 : index
    %432 = vector.load %arg3[%c0_160, %c13_161, %c0_162, %c0_163] : memref<1x21x8x128xf32, #tpu.memory_space<vmem>>, vector<1x1x8x128xf32>
    %433 = vector.shape_cast %432 : vector<1x1x8x128xf32> to vector<8x128xf32>
    %434 = arith.maximumf %431, %433 : vector<8x128xf32>
    %c0_164 = arith.constant 0 : index
    %c14_165 = arith.constant 14 : index
    %c0_166 = arith.constant 0 : index
    %c0_167 = arith.constant 0 : index
    %435 = vector.load %arg3[%c0_164, %c14_165, %c0_166, %c0_167] : memref<1x21x8x128xf32, #tpu.memory_space<vmem>>, vector<1x1x8x128xf32>
    %436 = vector.shape_cast %435 : vector<1x1x8x128xf32> to vector<8x128xf32>
    %437 = arith.maximumf %434, %436 : vector<8x128xf32>
    %c0_168 = arith.constant 0 : index
    %c15_169 = arith.constant 15 : index
    %c0_170 = arith.constant 0 : index
    %c0_171 = arith.constant 0 : index
    %438 = vector.load %arg3[%c0_168, %c15_169, %c0_170, %c0_171] : memref<1x21x8x128xf32, #tpu.memory_space<vmem>>, vector<1x1x8x128xf32>
    %439 = vector.shape_cast %438 : vector<1x1x8x128xf32> to vector<8x128xf32>
    %440 = arith.maximumf %437, %439 : vector<8x128xf32>
    %c0_172 = arith.constant 0 : index
    %c16_173 = arith.constant 16 : index
    %c0_174 = arith.constant 0 : index
    %c0_175 = arith.constant 0 : index
    %441 = vector.load %arg3[%c0_172, %c16_173, %c0_174, %c0_175] : memref<1x21x8x128xf32, #tpu.memory_space<vmem>>, vector<1x1x8x128xf32>
    %442 = vector.shape_cast %441 : vector<1x1x8x128xf32> to vector<8x128xf32>
    %443 = arith.maximumf %440, %442 : vector<8x128xf32>
    %c0_176 = arith.constant 0 : index
    %c17_177 = arith.constant 17 : index
    %c0_178 = arith.constant 0 : index
    %c0_179 = arith.constant 0 : index
    %444 = vector.load %arg3[%c0_176, %c17_177, %c0_178, %c0_179] : memref<1x21x8x128xf32, #tpu.memory_space<vmem>>, vector<1x1x8x128xf32>
    %445 = vector.shape_cast %444 : vector<1x1x8x128xf32> to vector<8x128xf32>
    %446 = arith.maximumf %443, %445 : vector<8x128xf32>
    %c0_180 = arith.constant 0 : index
    %c18_181 = arith.constant 18 : index
    %c0_182 = arith.constant 0 : index
    %c0_183 = arith.constant 0 : index
    %447 = vector.load %arg3[%c0_180, %c18_181, %c0_182, %c0_183] : memref<1x21x8x128xf32, #tpu.memory_space<vmem>>, vector<1x1x8x128xf32>
    %448 = vector.shape_cast %447 : vector<1x1x8x128xf32> to vector<8x128xf32>
    %449 = arith.maximumf %446, %448 : vector<8x128xf32>
    %c0_184 = arith.constant 0 : index
    %c19_185 = arith.constant 19 : index
    %c0_186 = arith.constant 0 : index
    %c0_187 = arith.constant 0 : index
    %450 = vector.load %arg3[%c0_184, %c19_185, %c0_186, %c0_187] : memref<1x21x8x128xf32, #tpu.memory_space<vmem>>, vector<1x1x8x128xf32>
    %451 = vector.shape_cast %450 : vector<1x1x8x128xf32> to vector<8x128xf32>
    %452 = arith.maximumf %449, %451 : vector<8x128xf32>
    %c0_188 = arith.constant 0 : index
    %c20 = arith.constant 20 : index
    %c0_189 = arith.constant 0 : index
    %c0_190 = arith.constant 0 : index
    %453 = vector.load %arg3[%c0_188, %c20, %c0_189, %c0_190] : memref<1x21x8x128xf32, #tpu.memory_space<vmem>>, vector<1x1x8x128xf32>
    %454 = vector.shape_cast %453 : vector<1x1x8x128xf32> to vector<8x128xf32>
    %455 = arith.maximumf %452, %454 : vector<8x128xf32>
    %cst_191 = arith.constant 0.000000e+00 : f32
    %456 = vector.broadcast %cst_191 : f32 to vector<8x128xf32>
    %cst_192 = arith.constant 0.000000e+00 : f32
    %457 = vector.broadcast %cst_192 : f32 to vector<8x128xf32>
    %c0_193 = arith.constant 0 : index
    %c0_194 = arith.constant 0 : index
    %c0_195 = arith.constant 0 : index
    %c0_196 = arith.constant 0 : index
    %458 = vector.load %arg3[%c0_193, %c0_194, %c0_195, %c0_196] : memref<1x21x8x128xf32, #tpu.memory_space<vmem>>, vector<1x1x8x128xf32>
    %459 = vector.shape_cast %458 : vector<1x1x8x128xf32> to vector<8x128xf32>
    %460 = arith.subf %459, %455 : vector<8x128xf32>
    %461 = math.exp %460 : vector<8x128xf32>
    %462 = arith.addf %456, %461 : vector<8x128xf32>
    %c0_i32_197 = arith.constant 0 : i32
    %463 = vector.broadcast %c0_i32_197 : i32 to vector<8x128xi32>
    %464 = arith.cmpi eq, %310, %463 : vector<8x128xi32>
    %465 = arith.select %464, %459, %457 : vector<8x128xi1>, vector<8x128xf32>
    %c0_198 = arith.constant 0 : index
    %c1_199 = arith.constant 1 : index
    %c0_200 = arith.constant 0 : index
    %c0_201 = arith.constant 0 : index
    %466 = vector.load %arg3[%c0_198, %c1_199, %c0_200, %c0_201] : memref<1x21x8x128xf32, #tpu.memory_space<vmem>>, vector<1x1x8x128xf32>
    %467 = vector.shape_cast %466 : vector<1x1x8x128xf32> to vector<8x128xf32>
    %468 = arith.subf %467, %455 : vector<8x128xf32>
    %469 = math.exp %468 : vector<8x128xf32>
    %470 = arith.addf %462, %469 : vector<8x128xf32>
    %c1_i32_202 = arith.constant 1 : i32
    %471 = vector.broadcast %c1_i32_202 : i32 to vector<8x128xi32>
    %472 = arith.cmpi eq, %310, %471 : vector<8x128xi32>
    %473 = arith.select %472, %467, %465 : vector<8x128xi1>, vector<8x128xf32>
    %c0_203 = arith.constant 0 : index
    %c2_204 = arith.constant 2 : index
    %c0_205 = arith.constant 0 : index
    %c0_206 = arith.constant 0 : index
    %474 = vector.load %arg3[%c0_203, %c2_204, %c0_205, %c0_206] : memref<1x21x8x128xf32, #tpu.memory_space<vmem>>, vector<1x1x8x128xf32>
    %475 = vector.shape_cast %474 : vector<1x1x8x128xf32> to vector<8x128xf32>
    %476 = arith.subf %475, %455 : vector<8x128xf32>
    %477 = math.exp %476 : vector<8x128xf32>
    %478 = arith.addf %470, %477 : vector<8x128xf32>
    %c2_i32_207 = arith.constant 2 : i32
    %479 = vector.broadcast %c2_i32_207 : i32 to vector<8x128xi32>
    %480 = arith.cmpi eq, %310, %479 : vector<8x128xi32>
    %481 = arith.select %480, %475, %473 : vector<8x128xi1>, vector<8x128xf32>
    %c0_208 = arith.constant 0 : index
    %c3_209 = arith.constant 3 : index
    %c0_210 = arith.constant 0 : index
    %c0_211 = arith.constant 0 : index
    %482 = vector.load %arg3[%c0_208, %c3_209, %c0_210, %c0_211] : memref<1x21x8x128xf32, #tpu.memory_space<vmem>>, vector<1x1x8x128xf32>
    %483 = vector.shape_cast %482 : vector<1x1x8x128xf32> to vector<8x128xf32>
    %484 = arith.subf %483, %455 : vector<8x128xf32>
    %485 = math.exp %484 : vector<8x128xf32>
    %486 = arith.addf %478, %485 : vector<8x128xf32>
    %c3_i32_212 = arith.constant 3 : i32
    %487 = vector.broadcast %c3_i32_212 : i32 to vector<8x128xi32>
    %488 = arith.cmpi eq, %310, %487 : vector<8x128xi32>
    %489 = arith.select %488, %483, %481 : vector<8x128xi1>, vector<8x128xf32>
    %c0_213 = arith.constant 0 : index
    %c4_214 = arith.constant 4 : index
    %c0_215 = arith.constant 0 : index
    %c0_216 = arith.constant 0 : index
    %490 = vector.load %arg3[%c0_213, %c4_214, %c0_215, %c0_216] : memref<1x21x8x128xf32, #tpu.memory_space<vmem>>, vector<1x1x8x128xf32>
    %491 = vector.shape_cast %490 : vector<1x1x8x128xf32> to vector<8x128xf32>
    %492 = arith.subf %491, %455 : vector<8x128xf32>
    %493 = math.exp %492 : vector<8x128xf32>
    %494 = arith.addf %486, %493 : vector<8x128xf32>
    %c4_i32 = arith.constant 4 : i32
    %495 = vector.broadcast %c4_i32 : i32 to vector<8x128xi32>
    %496 = arith.cmpi eq, %310, %495 : vector<8x128xi32>
    %497 = arith.select %496, %491, %489 : vector<8x128xi1>, vector<8x128xf32>
    %c0_217 = arith.constant 0 : index
    %c5_218 = arith.constant 5 : index
    %c0_219 = arith.constant 0 : index
    %c0_220 = arith.constant 0 : index
    %498 = vector.load %arg3[%c0_217, %c5_218, %c0_219, %c0_220] : memref<1x21x8x128xf32, #tpu.memory_space<vmem>>, vector<1x1x8x128xf32>
    %499 = vector.shape_cast %498 : vector<1x1x8x128xf32> to vector<8x128xf32>
    %500 = arith.subf %499, %455 : vector<8x128xf32>
    %501 = math.exp %500 : vector<8x128xf32>
    %502 = arith.addf %494, %501 : vector<8x128xf32>
    %c5_i32 = arith.constant 5 : i32
    %503 = vector.broadcast %c5_i32 : i32 to vector<8x128xi32>
    %504 = arith.cmpi eq, %310, %503 : vector<8x128xi32>
    %505 = arith.select %504, %499, %497 : vector<8x128xi1>, vector<8x128xf32>
    %c0_221 = arith.constant 0 : index
    %c6_222 = arith.constant 6 : index
    %c0_223 = arith.constant 0 : index
    %c0_224 = arith.constant 0 : index
    %506 = vector.load %arg3[%c0_221, %c6_222, %c0_223, %c0_224] : memref<1x21x8x128xf32, #tpu.memory_space<vmem>>, vector<1x1x8x128xf32>
    %507 = vector.shape_cast %506 : vector<1x1x8x128xf32> to vector<8x128xf32>
    %508 = arith.subf %507, %455 : vector<8x128xf32>
    %509 = math.exp %508 : vector<8x128xf32>
    %510 = arith.addf %502, %509 : vector<8x128xf32>
    %c6_i32 = arith.constant 6 : i32
    %511 = vector.broadcast %c6_i32 : i32 to vector<8x128xi32>
    %512 = arith.cmpi eq, %310, %511 : vector<8x128xi32>
    %513 = arith.select %512, %507, %505 : vector<8x128xi1>, vector<8x128xf32>
    %c0_225 = arith.constant 0 : index
    %c7_226 = arith.constant 7 : index
    %c0_227 = arith.constant 0 : index
    %c0_228 = arith.constant 0 : index
    %514 = vector.load %arg3[%c0_225, %c7_226, %c0_227, %c0_228] : memref<1x21x8x128xf32, #tpu.memory_space<vmem>>, vector<1x1x8x128xf32>
    %515 = vector.shape_cast %514 : vector<1x1x8x128xf32> to vector<8x128xf32>
    %516 = arith.subf %515, %455 : vector<8x128xf32>
    %517 = math.exp %516 : vector<8x128xf32>
    %518 = arith.addf %510, %517 : vector<8x128xf32>
    %c7_i32 = arith.constant 7 : i32
    %519 = vector.broadcast %c7_i32 : i32 to vector<8x128xi32>
    %520 = arith.cmpi eq, %310, %519 : vector<8x128xi32>
    %521 = arith.select %520, %515, %513 : vector<8x128xi1>, vector<8x128xf32>
    %c0_229 = arith.constant 0 : index
    %c8_230 = arith.constant 8 : index
    %c0_231 = arith.constant 0 : index
    %c0_232 = arith.constant 0 : index
    %522 = vector.load %arg3[%c0_229, %c8_230, %c0_231, %c0_232] : memref<1x21x8x128xf32, #tpu.memory_space<vmem>>, vector<1x1x8x128xf32>
    %523 = vector.shape_cast %522 : vector<1x1x8x128xf32> to vector<8x128xf32>
    %524 = arith.subf %523, %455 : vector<8x128xf32>
    %525 = math.exp %524 : vector<8x128xf32>
    %526 = arith.addf %518, %525 : vector<8x128xf32>
    %c8_i32 = arith.constant 8 : i32
    %527 = vector.broadcast %c8_i32 : i32 to vector<8x128xi32>
    %528 = arith.cmpi eq, %310, %527 : vector<8x128xi32>
    %529 = arith.select %528, %523, %521 : vector<8x128xi1>, vector<8x128xf32>
    %c0_233 = arith.constant 0 : index
    %c9_234 = arith.constant 9 : index
    %c0_235 = arith.constant 0 : index
    %c0_236 = arith.constant 0 : index
    %530 = vector.load %arg3[%c0_233, %c9_234, %c0_235, %c0_236] : memref<1x21x8x128xf32, #tpu.memory_space<vmem>>, vector<1x1x8x128xf32>
    %531 = vector.shape_cast %530 : vector<1x1x8x128xf32> to vector<8x128xf32>
    %532 = arith.subf %531, %455 : vector<8x128xf32>
    %533 = math.exp %532 : vector<8x128xf32>
    %534 = arith.addf %526, %533 : vector<8x128xf32>
    %c9_i32 = arith.constant 9 : i32
    %535 = vector.broadcast %c9_i32 : i32 to vector<8x128xi32>
    %536 = arith.cmpi eq, %310, %535 : vector<8x128xi32>
    %537 = arith.select %536, %531, %529 : vector<8x128xi1>, vector<8x128xf32>
    %c0_237 = arith.constant 0 : index
    %c10_238 = arith.constant 10 : index
    %c0_239 = arith.constant 0 : index
    %c0_240 = arith.constant 0 : index
    %538 = vector.load %arg3[%c0_237, %c10_238, %c0_239, %c0_240] : memref<1x21x8x128xf32, #tpu.memory_space<vmem>>, vector<1x1x8x128xf32>
    %539 = vector.shape_cast %538 : vector<1x1x8x128xf32> to vector<8x128xf32>
    %540 = arith.subf %539, %455 : vector<8x128xf32>
    %541 = math.exp %540 : vector<8x128xf32>
    %542 = arith.addf %534, %541 : vector<8x128xf32>
    %c10_i32 = arith.constant 10 : i32
    %543 = vector.broadcast %c10_i32 : i32 to vector<8x128xi32>
    %544 = arith.cmpi eq, %310, %543 : vector<8x128xi32>
    %545 = arith.select %544, %539, %537 : vector<8x128xi1>, vector<8x128xf32>
    %c0_241 = arith.constant 0 : index
    %c11_242 = arith.constant 11 : index
    %c0_243 = arith.constant 0 : index
    %c0_244 = arith.constant 0 : index
    %546 = vector.load %arg3[%c0_241, %c11_242, %c0_243, %c0_244] : memref<1x21x8x128xf32, #tpu.memory_space<vmem>>, vector<1x1x8x128xf32>
    %547 = vector.shape_cast %546 : vector<1x1x8x128xf32> to vector<8x128xf32>
    %548 = arith.subf %547, %455 : vector<8x128xf32>
    %549 = math.exp %548 : vector<8x128xf32>
    %550 = arith.addf %542, %549 : vector<8x128xf32>
    %c11_i32 = arith.constant 11 : i32
    %551 = vector.broadcast %c11_i32 : i32 to vector<8x128xi32>
    %552 = arith.cmpi eq, %310, %551 : vector<8x128xi32>
    %553 = arith.select %552, %547, %545 : vector<8x128xi1>, vector<8x128xf32>
    %c0_245 = arith.constant 0 : index
    %c12_246 = arith.constant 12 : index
    %c0_247 = arith.constant 0 : index
    %c0_248 = arith.constant 0 : index
    %554 = vector.load %arg3[%c0_245, %c12_246, %c0_247, %c0_248] : memref<1x21x8x128xf32, #tpu.memory_space<vmem>>, vector<1x1x8x128xf32>
    %555 = vector.shape_cast %554 : vector<1x1x8x128xf32> to vector<8x128xf32>
    %556 = arith.subf %555, %455 : vector<8x128xf32>
    %557 = math.exp %556 : vector<8x128xf32>
    %558 = arith.addf %550, %557 : vector<8x128xf32>
    %c12_i32 = arith.constant 12 : i32
    %559 = vector.broadcast %c12_i32 : i32 to vector<8x128xi32>
    %560 = arith.cmpi eq, %310, %559 : vector<8x128xi32>
    %561 = arith.select %560, %555, %553 : vector<8x128xi1>, vector<8x128xf32>
    %c0_249 = arith.constant 0 : index
    %c13_250 = arith.constant 13 : index
    %c0_251 = arith.constant 0 : index
    %c0_252 = arith.constant 0 : index
    %562 = vector.load %arg3[%c0_249, %c13_250, %c0_251, %c0_252] : memref<1x21x8x128xf32, #tpu.memory_space<vmem>>, vector<1x1x8x128xf32>
    %563 = vector.shape_cast %562 : vector<1x1x8x128xf32> to vector<8x128xf32>
    %564 = arith.subf %563, %455 : vector<8x128xf32>
    %565 = math.exp %564 : vector<8x128xf32>
    %566 = arith.addf %558, %565 : vector<8x128xf32>
    %c13_i32 = arith.constant 13 : i32
    %567 = vector.broadcast %c13_i32 : i32 to vector<8x128xi32>
    %568 = arith.cmpi eq, %310, %567 : vector<8x128xi32>
    %569 = arith.select %568, %563, %561 : vector<8x128xi1>, vector<8x128xf32>
    %c0_253 = arith.constant 0 : index
    %c14_254 = arith.constant 14 : index
    %c0_255 = arith.constant 0 : index
    %c0_256 = arith.constant 0 : index
    %570 = vector.load %arg3[%c0_253, %c14_254, %c0_255, %c0_256] : memref<1x21x8x128xf32, #tpu.memory_space<vmem>>, vector<1x1x8x128xf32>
    %571 = vector.shape_cast %570 : vector<1x1x8x128xf32> to vector<8x128xf32>
    %572 = arith.subf %571, %455 : vector<8x128xf32>
    %573 = math.exp %572 : vector<8x128xf32>
    %574 = arith.addf %566, %573 : vector<8x128xf32>
    %c14_i32 = arith.constant 14 : i32
    %575 = vector.broadcast %c14_i32 : i32 to vector<8x128xi32>
    %576 = arith.cmpi eq, %310, %575 : vector<8x128xi32>
    %577 = arith.select %576, %571, %569 : vector<8x128xi1>, vector<8x128xf32>
    %c0_257 = arith.constant 0 : index
    %c15_258 = arith.constant 15 : index
    %c0_259 = arith.constant 0 : index
    %c0_260 = arith.constant 0 : index
    %578 = vector.load %arg3[%c0_257, %c15_258, %c0_259, %c0_260] : memref<1x21x8x128xf32, #tpu.memory_space<vmem>>, vector<1x1x8x128xf32>
    %579 = vector.shape_cast %578 : vector<1x1x8x128xf32> to vector<8x128xf32>
    %580 = arith.subf %579, %455 : vector<8x128xf32>
    %581 = math.exp %580 : vector<8x128xf32>
    %582 = arith.addf %574, %581 : vector<8x128xf32>
    %c15_i32 = arith.constant 15 : i32
    %583 = vector.broadcast %c15_i32 : i32 to vector<8x128xi32>
    %584 = arith.cmpi eq, %310, %583 : vector<8x128xi32>
    %585 = arith.select %584, %579, %577 : vector<8x128xi1>, vector<8x128xf32>
    %c0_261 = arith.constant 0 : index
    %c16_262 = arith.constant 16 : index
    %c0_263 = arith.constant 0 : index
    %c0_264 = arith.constant 0 : index
    %586 = vector.load %arg3[%c0_261, %c16_262, %c0_263, %c0_264] : memref<1x21x8x128xf32, #tpu.memory_space<vmem>>, vector<1x1x8x128xf32>
    %587 = vector.shape_cast %586 : vector<1x1x8x128xf32> to vector<8x128xf32>
    %588 = arith.subf %587, %455 : vector<8x128xf32>
    %589 = math.exp %588 : vector<8x128xf32>
    %590 = arith.addf %582, %589 : vector<8x128xf32>
    %c16_i32 = arith.constant 16 : i32
    %591 = vector.broadcast %c16_i32 : i32 to vector<8x128xi32>
    %592 = arith.cmpi eq, %310, %591 : vector<8x128xi32>
    %593 = arith.select %592, %587, %585 : vector<8x128xi1>, vector<8x128xf32>
    %c0_265 = arith.constant 0 : index
    %c17_266 = arith.constant 17 : index
    %c0_267 = arith.constant 0 : index
    %c0_268 = arith.constant 0 : index
    %594 = vector.load %arg3[%c0_265, %c17_266, %c0_267, %c0_268] : memref<1x21x8x128xf32, #tpu.memory_space<vmem>>, vector<1x1x8x128xf32>
    %595 = vector.shape_cast %594 : vector<1x1x8x128xf32> to vector<8x128xf32>
    %596 = arith.subf %595, %455 : vector<8x128xf32>
    %597 = math.exp %596 : vector<8x128xf32>
    %598 = arith.addf %590, %597 : vector<8x128xf32>
    %c17_i32 = arith.constant 17 : i32
    %599 = vector.broadcast %c17_i32 : i32 to vector<8x128xi32>
    %600 = arith.cmpi eq, %310, %599 : vector<8x128xi32>
    %601 = arith.select %600, %595, %593 : vector<8x128xi1>, vector<8x128xf32>
    %c0_269 = arith.constant 0 : index
    %c18_270 = arith.constant 18 : index
    %c0_271 = arith.constant 0 : index
    %c0_272 = arith.constant 0 : index
    %602 = vector.load %arg3[%c0_269, %c18_270, %c0_271, %c0_272] : memref<1x21x8x128xf32, #tpu.memory_space<vmem>>, vector<1x1x8x128xf32>
    %603 = vector.shape_cast %602 : vector<1x1x8x128xf32> to vector<8x128xf32>
    %604 = arith.subf %603, %455 : vector<8x128xf32>
    %605 = math.exp %604 : vector<8x128xf32>
    %606 = arith.addf %598, %605 : vector<8x128xf32>
    %c18_i32 = arith.constant 18 : i32
    %607 = vector.broadcast %c18_i32 : i32 to vector<8x128xi32>
    %608 = arith.cmpi eq, %310, %607 : vector<8x128xi32>
    %609 = arith.select %608, %603, %601 : vector<8x128xi1>, vector<8x128xf32>
    %c0_273 = arith.constant 0 : index
    %c19_274 = arith.constant 19 : index
    %c0_275 = arith.constant 0 : index
    %c0_276 = arith.constant 0 : index
    %610 = vector.load %arg3[%c0_273, %c19_274, %c0_275, %c0_276] : memref<1x21x8x128xf32, #tpu.memory_space<vmem>>, vector<1x1x8x128xf32>
    %611 = vector.shape_cast %610 : vector<1x1x8x128xf32> to vector<8x128xf32>
    %612 = arith.subf %611, %455 : vector<8x128xf32>
    %613 = math.exp %612 : vector<8x128xf32>
    %614 = arith.addf %606, %613 : vector<8x128xf32>
    %c19_i32 = arith.constant 19 : i32
    %615 = vector.broadcast %c19_i32 : i32 to vector<8x128xi32>
    %616 = arith.cmpi eq, %310, %615 : vector<8x128xi32>
    %617 = arith.select %616, %611, %609 : vector<8x128xi1>, vector<8x128xf32>
    %c0_277 = arith.constant 0 : index
    %c20_278 = arith.constant 20 : index
    %c0_279 = arith.constant 0 : index
    %c0_280 = arith.constant 0 : index
    %618 = vector.load %arg3[%c0_277, %c20_278, %c0_279, %c0_280] : memref<1x21x8x128xf32, #tpu.memory_space<vmem>>, vector<1x1x8x128xf32>
    %619 = vector.shape_cast %618 : vector<1x1x8x128xf32> to vector<8x128xf32>
    %620 = arith.subf %619, %455 : vector<8x128xf32>
    %621 = math.exp %620 : vector<8x128xf32>
    %622 = arith.addf %614, %621 : vector<8x128xf32>
    %c20_i32 = arith.constant 20 : i32
    %623 = vector.broadcast %c20_i32 : i32 to vector<8x128xi32>
    %624 = arith.cmpi eq, %310, %623 : vector<8x128xi32>
    %625 = arith.select %624, %619, %617 : vector<8x128xi1>, vector<8x128xf32>
    %626 = math.log %622 : vector<8x128xf32>
    %627 = arith.addf %455, %626 : vector<8x128xf32>
    %628 = arith.subf %627, %625 : vector<8x128xf32>
    %629 = arith.extui %312 : vector<8x128xi1> to vector<8x128xi32>
    %630 = vector.shape_cast %629 : vector<8x128xi32> to vector<1x8x128xi32>
    %cst_281 = arith.constant dense<0> : vector<1xi32>
    %631 = vector.multi_reduction <add>, %630, %cst_281 [1, 2] : vector<1x8x128xi32> to vector<1xi32>
    %632 = vector.shape_cast %631 : vector<1xi32> to vector<1x1x1xi32>
    %633 = vector.extract %632[0, 0, 0] : i32 from vector<1x1x1xi32>
    %c3_i32_282 = arith.constant 3 : i32
    %634 = arith.muli %633, %c3_i32_282 : i32
    %c256_i32_283 = arith.constant 256 : i32
    %635 = arith.minsi %634, %c256_i32_283 : i32
    %cst_284 = arith.constant dense<true> : vector<8x128xi1>
    %636 = arith.xori %312, %cst_284 : vector<8x128xi1>
    %637 = arith.andi %24, %636 : vector<8x128xi1>
    %cst_285 = arith.constant 0.000000e+00 : f32
    %638 = vector.broadcast %cst_285 : f32 to vector<8x128xf32>
    %639 = arith.select %637, %628, %638 : vector<8x128xi1>, vector<8x128xf32>
    %cst_286 = arith.constant 0.000000e+00 : f32
    %640 = vector.broadcast %cst_286 : f32 to vector<8x128xf32>
    %641 = arith.maximumf %639, %640 : vector<8x128xf32>
    %642 = tpu.bitcast %641 : vector<8x128xf32> -> vector<8x128xi32>
    %c0_i32_287 = arith.constant 0 : i32
    %c536870912_i32 = arith.constant 536870912 : i32
    %c0_i32_288 = arith.constant 0 : i32
    %643 = arith.addi %c0_i32_287, %c536870912_i32 : i32
    %644 = vector.broadcast %643 : i32 to vector<8x128xi32>
    %645 = arith.cmpi sge, %642, %644 : vector<8x128xi32>
    %646 = arith.extui %645 : vector<8x128xi1> to vector<8x128xi32>
    %c2_i32_289 = arith.constant 2 : i32
    %647 = arith.muli %c2_i32_289, %c536870912_i32 : i32
    %648 = arith.addi %c0_i32_287, %647 : i32
    %649 = vector.broadcast %648 : i32 to vector<8x128xi32>
    %650 = arith.cmpi sge, %642, %649 : vector<8x128xi32>
    %651 = arith.extui %650 : vector<8x128xi1> to vector<8x128xi32>
    %c3_i32_290 = arith.constant 3 : i32
    %652 = arith.muli %c3_i32_290, %c536870912_i32 : i32
    %653 = arith.addi %c0_i32_287, %652 : i32
    %654 = vector.broadcast %653 : i32 to vector<8x128xi32>
    %655 = arith.cmpi sge, %642, %654 : vector<8x128xi32>
    %656 = arith.extui %655 : vector<8x128xi1> to vector<8x128xi32>
    %c16_i32_291 = arith.constant 16 : i32
    %657 = vector.broadcast %c16_i32_291 : i32 to vector<8x128xi32>
    %658 = arith.shli %656, %657 : vector<8x128xi32>
    %659 = arith.addi %646, %658 : vector<8x128xi32>
    %660 = vector.shape_cast %659 : vector<8x128xi32> to vector<1x8x128xi32>
    %cst_292 = arith.constant dense<0> : vector<1xi32>
    %661 = vector.multi_reduction <add>, %660, %cst_292 [1, 2] : vector<1x8x128xi32> to vector<1xi32>
    %662 = vector.shape_cast %661 : vector<1xi32> to vector<1x1x1xi32>
    %663 = vector.extract %662[0, 0, 0] : i32 from vector<1x1x1xi32>
    %664 = vector.shape_cast %651 : vector<8x128xi32> to vector<1x8x128xi32>
    %cst_293 = arith.constant dense<0> : vector<1xi32>
    %665 = vector.multi_reduction <add>, %664, %cst_293 [1, 2] : vector<1x8x128xi32> to vector<1xi32>
    %666 = vector.shape_cast %665 : vector<1xi32> to vector<1x1x1xi32>
    %667 = vector.extract %666[0, 0, 0] : i32 from vector<1x1x1xi32>
    %c65535_i32 = arith.constant 65535 : i32
    %668 = arith.andi %663, %c65535_i32 : i32
    %c16_i32_294 = arith.constant 16 : i32
    %669 = arith.shrsi %663, %c16_i32_294 : i32
    %670 = arith.cmpi sge, %668, %635 : i32
    %671 = arith.extui %670 : i1 to i32
    %672 = arith.cmpi sge, %667, %635 : i32
    %673 = arith.extui %672 : i1 to i32
    %674 = arith.addi %671, %673 : i32
    %675 = arith.cmpi sge, %669, %635 : i32
    %676 = arith.extui %675 : i1 to i32
    %677 = arith.addi %674, %676 : i32
    %678 = arith.muli %c536870912_i32, %677 : i32
    %679 = arith.addi %c0_i32_287, %678 : i32
    %c2_i32_295 = arith.constant 2 : i32
    %680 = arith.shrsi %c536870912_i32, %c2_i32_295 : i32
    %c1_i32_296 = arith.constant 1 : i32
    %681 = arith.addi %679, %680 : i32
    %682 = vector.broadcast %681 : i32 to vector<8x128xi32>
    %683 = arith.cmpi sge, %642, %682 : vector<8x128xi32>
    %684 = arith.extui %683 : vector<8x128xi1> to vector<8x128xi32>
    %c2_i32_297 = arith.constant 2 : i32
    %685 = arith.muli %c2_i32_297, %680 : i32
    %686 = arith.addi %679, %685 : i32
    %687 = vector.broadcast %686 : i32 to vector<8x128xi32>
    %688 = arith.cmpi sge, %642, %687 : vector<8x128xi32>
    %689 = arith.extui %688 : vector<8x128xi1> to vector<8x128xi32>
    %c3_i32_298 = arith.constant 3 : i32
    %690 = arith.muli %c3_i32_298, %680 : i32
    %691 = arith.addi %679, %690 : i32
    %692 = vector.broadcast %691 : i32 to vector<8x128xi32>
    %693 = arith.cmpi sge, %642, %692 : vector<8x128xi32>
    %694 = arith.extui %693 : vector<8x128xi1> to vector<8x128xi32>
    %c16_i32_299 = arith.constant 16 : i32
    %695 = vector.broadcast %c16_i32_299 : i32 to vector<8x128xi32>
    %696 = arith.shli %694, %695 : vector<8x128xi32>
    %697 = arith.addi %684, %696 : vector<8x128xi32>
    %698 = vector.shape_cast %697 : vector<8x128xi32> to vector<1x8x128xi32>
    %cst_300 = arith.constant dense<0> : vector<1xi32>
    %699 = vector.multi_reduction <add>, %698, %cst_300 [1, 2] : vector<1x8x128xi32> to vector<1xi32>
    %700 = vector.shape_cast %699 : vector<1xi32> to vector<1x1x1xi32>
    %701 = vector.extract %700[0, 0, 0] : i32 from vector<1x1x1xi32>
    %702 = vector.shape_cast %689 : vector<8x128xi32> to vector<1x8x128xi32>
    %cst_301 = arith.constant dense<0> : vector<1xi32>
    %703 = vector.multi_reduction <add>, %702, %cst_301 [1, 2] : vector<1x8x128xi32> to vector<1xi32>
    %704 = vector.shape_cast %703 : vector<1xi32> to vector<1x1x1xi32>
    %705 = vector.extract %704[0, 0, 0] : i32 from vector<1x1x1xi32>
    %c65535_i32_302 = arith.constant 65535 : i32
    %706 = arith.andi %701, %c65535_i32_302 : i32
    %c16_i32_303 = arith.constant 16 : i32
    %707 = arith.shrsi %701, %c16_i32_303 : i32
    %708 = arith.cmpi sge, %706, %635 : i32
    %709 = arith.extui %708 : i1 to i32
    %710 = arith.cmpi sge, %705, %635 : i32
    %711 = arith.extui %710 : i1 to i32
    %712 = arith.addi %709, %711 : i32
    %713 = arith.cmpi sge, %707, %635 : i32
    %714 = arith.extui %713 : i1 to i32
    %715 = arith.addi %712, %714 : i32
    %716 = arith.muli %680, %715 : i32
    %717 = arith.addi %679, %716 : i32
    %c2_i32_304 = arith.constant 2 : i32
    %718 = arith.shrsi %680, %c2_i32_304 : i32
    %c2_i32_305 = arith.constant 2 : i32
    %719 = arith.addi %717, %718 : i32
    %720 = vector.broadcast %719 : i32 to vector<8x128xi32>
    %721 = arith.cmpi sge, %642, %720 : vector<8x128xi32>
    %722 = arith.extui %721 : vector<8x128xi1> to vector<8x128xi32>
    %c2_i32_306 = arith.constant 2 : i32
    %723 = arith.muli %c2_i32_306, %718 : i32
    %724 = arith.addi %717, %723 : i32
    %725 = vector.broadcast %724 : i32 to vector<8x128xi32>
    %726 = arith.cmpi sge, %642, %725 : vector<8x128xi32>
    %727 = arith.extui %726 : vector<8x128xi1> to vector<8x128xi32>
    %c3_i32_307 = arith.constant 3 : i32
    %728 = arith.muli %c3_i32_307, %718 : i32
    %729 = arith.addi %717, %728 : i32
    %730 = vector.broadcast %729 : i32 to vector<8x128xi32>
    %731 = arith.cmpi sge, %642, %730 : vector<8x128xi32>
    %732 = arith.extui %731 : vector<8x128xi1> to vector<8x128xi32>
    %c16_i32_308 = arith.constant 16 : i32
    %733 = vector.broadcast %c16_i32_308 : i32 to vector<8x128xi32>
    %734 = arith.shli %732, %733 : vector<8x128xi32>
    %735 = arith.addi %722, %734 : vector<8x128xi32>
    %736 = vector.shape_cast %735 : vector<8x128xi32> to vector<1x8x128xi32>
    %cst_309 = arith.constant dense<0> : vector<1xi32>
    %737 = vector.multi_reduction <add>, %736, %cst_309 [1, 2] : vector<1x8x128xi32> to vector<1xi32>
    %738 = vector.shape_cast %737 : vector<1xi32> to vector<1x1x1xi32>
    %739 = vector.extract %738[0, 0, 0] : i32 from vector<1x1x1xi32>
    %740 = vector.shape_cast %727 : vector<8x128xi32> to vector<1x8x128xi32>
    %cst_310 = arith.constant dense<0> : vector<1xi32>
    %741 = vector.multi_reduction <add>, %740, %cst_310 [1, 2] : vector<1x8x128xi32> to vector<1xi32>
    %742 = vector.shape_cast %741 : vector<1xi32> to vector<1x1x1xi32>
    %743 = vector.extract %742[0, 0, 0] : i32 from vector<1x1x1xi32>
    %c65535_i32_311 = arith.constant 65535 : i32
    %744 = arith.andi %739, %c65535_i32_311 : i32
    %c16_i32_312 = arith.constant 16 : i32
    %745 = arith.shrsi %739, %c16_i32_312 : i32
    %746 = arith.cmpi sge, %744, %635 : i32
    %747 = arith.extui %746 : i1 to i32
    %748 = arith.cmpi sge, %743, %635 : i32
    %749 = arith.extui %748 : i1 to i32
    %750 = arith.addi %747, %749 : i32
    %751 = arith.cmpi sge, %745, %635 : i32
    %752 = arith.extui %751 : i1 to i32
    %753 = arith.addi %750, %752 : i32
    %754 = arith.muli %718, %753 : i32
    %755 = arith.addi %717, %754 : i32
    %c2_i32_313 = arith.constant 2 : i32
    %756 = arith.shrsi %718, %c2_i32_313 : i32
    %c3_i32_314 = arith.constant 3 : i32
    %757 = arith.addi %755, %756 : i32
    %758 = vector.broadcast %757 : i32 to vector<8x128xi32>
    %759 = arith.cmpi sge, %642, %758 : vector<8x128xi32>
    %760 = arith.extui %759 : vector<8x128xi1> to vector<8x128xi32>
    %c2_i32_315 = arith.constant 2 : i32
    %761 = arith.muli %c2_i32_315, %756 : i32
    %762 = arith.addi %755, %761 : i32
    %763 = vector.broadcast %762 : i32 to vector<8x128xi32>
    %764 = arith.cmpi sge, %642, %763 : vector<8x128xi32>
    %765 = arith.extui %764 : vector<8x128xi1> to vector<8x128xi32>
    %c3_i32_316 = arith.constant 3 : i32
    %766 = arith.muli %c3_i32_316, %756 : i32
    %767 = arith.addi %755, %766 : i32
    %768 = vector.broadcast %767 : i32 to vector<8x128xi32>
    %769 = arith.cmpi sge, %642, %768 : vector<8x128xi32>
    %770 = arith.extui %769 : vector<8x128xi1> to vector<8x128xi32>
    %c16_i32_317 = arith.constant 16 : i32
    %771 = vector.broadcast %c16_i32_317 : i32 to vector<8x128xi32>
    %772 = arith.shli %770, %771 : vector<8x128xi32>
    %773 = arith.addi %760, %772 : vector<8x128xi32>
    %774 = vector.shape_cast %773 : vector<8x128xi32> to vector<1x8x128xi32>
    %cst_318 = arith.constant dense<0> : vector<1xi32>
    %775 = vector.multi_reduction <add>, %774, %cst_318 [1, 2] : vector<1x8x128xi32> to vector<1xi32>
    %776 = vector.shape_cast %775 : vector<1xi32> to vector<1x1x1xi32>
    %777 = vector.extract %776[0, 0, 0] : i32 from vector<1x1x1xi32>
    %778 = vector.shape_cast %765 : vector<8x128xi32> to vector<1x8x128xi32>
    %cst_319 = arith.constant dense<0> : vector<1xi32>
    %779 = vector.multi_reduction <add>, %778, %cst_319 [1, 2] : vector<1x8x128xi32> to vector<1xi32>
    %780 = vector.shape_cast %779 : vector<1xi32> to vector<1x1x1xi32>
    %781 = vector.extract %780[0, 0, 0] : i32 from vector<1x1x1xi32>
    %c65535_i32_320 = arith.constant 65535 : i32
    %782 = arith.andi %777, %c65535_i32_320 : i32
    %c16_i32_321 = arith.constant 16 : i32
    %783 = arith.shrsi %777, %c16_i32_321 : i32
    %784 = arith.cmpi sge, %782, %635 : i32
    %785 = arith.extui %784 : i1 to i32
    %786 = arith.cmpi sge, %781, %635 : i32
    %787 = arith.extui %786 : i1 to i32
    %788 = arith.addi %785, %787 : i32
    %789 = arith.cmpi sge, %783, %635 : i32
    %790 = arith.extui %789 : i1 to i32
    %791 = arith.addi %788, %790 : i32
    %792 = arith.muli %756, %791 : i32
    %793 = arith.addi %755, %792 : i32
    %c2_i32_322 = arith.constant 2 : i32
    %794 = arith.shrsi %756, %c2_i32_322 : i32
    %c4_i32_323 = arith.constant 4 : i32
    %795 = arith.addi %793, %794 : i32
    %796 = vector.broadcast %795 : i32 to vector<8x128xi32>
    %797 = arith.cmpi sge, %642, %796 : vector<8x128xi32>
    %798 = arith.extui %797 : vector<8x128xi1> to vector<8x128xi32>
    %c2_i32_324 = arith.constant 2 : i32
    %799 = arith.muli %c2_i32_324, %794 : i32
    %800 = arith.addi %793, %799 : i32
    %801 = vector.broadcast %800 : i32 to vector<8x128xi32>
    %802 = arith.cmpi sge, %642, %801 : vector<8x128xi32>
    %803 = arith.extui %802 : vector<8x128xi1> to vector<8x128xi32>
    %c3_i32_325 = arith.constant 3 : i32
    %804 = arith.muli %c3_i32_325, %794 : i32
    %805 = arith.addi %793, %804 : i32
    %806 = vector.broadcast %805 : i32 to vector<8x128xi32>
    %807 = arith.cmpi sge, %642, %806 : vector<8x128xi32>
    %808 = arith.extui %807 : vector<8x128xi1> to vector<8x128xi32>
    %c16_i32_326 = arith.constant 16 : i32
    %809 = vector.broadcast %c16_i32_326 : i32 to vector<8x128xi32>
    %810 = arith.shli %808, %809 : vector<8x128xi32>
    %811 = arith.addi %798, %810 : vector<8x128xi32>
    %812 = vector.shape_cast %811 : vector<8x128xi32> to vector<1x8x128xi32>
    %cst_327 = arith.constant dense<0> : vector<1xi32>
    %813 = vector.multi_reduction <add>, %812, %cst_327 [1, 2] : vector<1x8x128xi32> to vector<1xi32>
    %814 = vector.shape_cast %813 : vector<1xi32> to vector<1x1x1xi32>
    %815 = vector.extract %814[0, 0, 0] : i32 from vector<1x1x1xi32>
    %816 = vector.shape_cast %803 : vector<8x128xi32> to vector<1x8x128xi32>
    %cst_328 = arith.constant dense<0> : vector<1xi32>
    %817 = vector.multi_reduction <add>, %816, %cst_328 [1, 2] : vector<1x8x128xi32> to vector<1xi32>
    %818 = vector.shape_cast %817 : vector<1xi32> to vector<1x1x1xi32>
    %819 = vector.extract %818[0, 0, 0] : i32 from vector<1x1x1xi32>
    %c65535_i32_329 = arith.constant 65535 : i32
    %820 = arith.andi %815, %c65535_i32_329 : i32
    %c16_i32_330 = arith.constant 16 : i32
    %821 = arith.shrsi %815, %c16_i32_330 : i32
    %822 = arith.cmpi sge, %820, %635 : i32
    %823 = arith.extui %822 : i1 to i32
    %824 = arith.cmpi sge, %819, %635 : i32
    %825 = arith.extui %824 : i1 to i32
    %826 = arith.addi %823, %825 : i32
    %827 = arith.cmpi sge, %821, %635 : i32
    %828 = arith.extui %827 : i1 to i32
    %829 = arith.addi %826, %828 : i32
    %830 = arith.muli %794, %829 : i32
    %831 = arith.addi %793, %830 : i32
    %c2_i32_331 = arith.constant 2 : i32
    %832 = arith.shrsi %794, %c2_i32_331 : i32
    %c5_i32_332 = arith.constant 5 : i32
    %833 = arith.addi %831, %832 : i32
    %834 = vector.broadcast %833 : i32 to vector<8x128xi32>
    %835 = arith.cmpi sge, %642, %834 : vector<8x128xi32>
    %836 = arith.extui %835 : vector<8x128xi1> to vector<8x128xi32>
    %c2_i32_333 = arith.constant 2 : i32
    %837 = arith.muli %c2_i32_333, %832 : i32
    %838 = arith.addi %831, %837 : i32
    %839 = vector.broadcast %838 : i32 to vector<8x128xi32>
    %840 = arith.cmpi sge, %642, %839 : vector<8x128xi32>
    %841 = arith.extui %840 : vector<8x128xi1> to vector<8x128xi32>
    %c3_i32_334 = arith.constant 3 : i32
    %842 = arith.muli %c3_i32_334, %832 : i32
    %843 = arith.addi %831, %842 : i32
    %844 = vector.broadcast %843 : i32 to vector<8x128xi32>
    %845 = arith.cmpi sge, %642, %844 : vector<8x128xi32>
    %846 = arith.extui %845 : vector<8x128xi1> to vector<8x128xi32>
    %c16_i32_335 = arith.constant 16 : i32
    %847 = vector.broadcast %c16_i32_335 : i32 to vector<8x128xi32>
    %848 = arith.shli %846, %847 : vector<8x128xi32>
    %849 = arith.addi %836, %848 : vector<8x128xi32>
    %850 = vector.shape_cast %849 : vector<8x128xi32> to vector<1x8x128xi32>
    %cst_336 = arith.constant dense<0> : vector<1xi32>
    %851 = vector.multi_reduction <add>, %850, %cst_336 [1, 2] : vector<1x8x128xi32> to vector<1xi32>
    %852 = vector.shape_cast %851 : vector<1xi32> to vector<1x1x1xi32>
    %853 = vector.extract %852[0, 0, 0] : i32 from vector<1x1x1xi32>
    %854 = vector.shape_cast %841 : vector<8x128xi32> to vector<1x8x128xi32>
    %cst_337 = arith.constant dense<0> : vector<1xi32>
    %855 = vector.multi_reduction <add>, %854, %cst_337 [1, 2] : vector<1x8x128xi32> to vector<1xi32>
    %856 = vector.shape_cast %855 : vector<1xi32> to vector<1x1x1xi32>
    %857 = vector.extract %856[0, 0, 0] : i32 from vector<1x1x1xi32>
    %c65535_i32_338 = arith.constant 65535 : i32
    %858 = arith.andi %853, %c65535_i32_338 : i32
    %c16_i32_339 = arith.constant 16 : i32
    %859 = arith.shrsi %853, %c16_i32_339 : i32
    %860 = arith.cmpi sge, %858, %635 : i32
    %861 = arith.extui %860 : i1 to i32
    %862 = arith.cmpi sge, %857, %635 : i32
    %863 = arith.extui %862 : i1 to i32
    %864 = arith.addi %861, %863 : i32
    %865 = arith.cmpi sge, %859, %635 : i32
    %866 = arith.extui %865 : i1 to i32
    %867 = arith.addi %864, %866 : i32
    %868 = arith.muli %832, %867 : i32
    %869 = arith.addi %831, %868 : i32
    %c2_i32_340 = arith.constant 2 : i32
    %870 = arith.shrsi %832, %c2_i32_340 : i32
    %c6_i32_341 = arith.constant 6 : i32
    %871 = arith.addi %869, %870 : i32
    %872 = vector.broadcast %871 : i32 to vector<8x128xi32>
    %873 = arith.cmpi sge, %642, %872 : vector<8x128xi32>
    %874 = arith.extui %873 : vector<8x128xi1> to vector<8x128xi32>
    %c2_i32_342 = arith.constant 2 : i32
    %875 = arith.muli %c2_i32_342, %870 : i32
    %876 = arith.addi %869, %875 : i32
    %877 = vector.broadcast %876 : i32 to vector<8x128xi32>
    %878 = arith.cmpi sge, %642, %877 : vector<8x128xi32>
    %879 = arith.extui %878 : vector<8x128xi1> to vector<8x128xi32>
    %c3_i32_343 = arith.constant 3 : i32
    %880 = arith.muli %c3_i32_343, %870 : i32
    %881 = arith.addi %869, %880 : i32
    %882 = vector.broadcast %881 : i32 to vector<8x128xi32>
    %883 = arith.cmpi sge, %642, %882 : vector<8x128xi32>
    %884 = arith.extui %883 : vector<8x128xi1> to vector<8x128xi32>
    %c16_i32_344 = arith.constant 16 : i32
    %885 = vector.broadcast %c16_i32_344 : i32 to vector<8x128xi32>
    %886 = arith.shli %884, %885 : vector<8x128xi32>
    %887 = arith.addi %874, %886 : vector<8x128xi32>
    %888 = vector.shape_cast %887 : vector<8x128xi32> to vector<1x8x128xi32>
    %cst_345 = arith.constant dense<0> : vector<1xi32>
    %889 = vector.multi_reduction <add>, %888, %cst_345 [1, 2] : vector<1x8x128xi32> to vector<1xi32>
    %890 = vector.shape_cast %889 : vector<1xi32> to vector<1x1x1xi32>
    %891 = vector.extract %890[0, 0, 0] : i32 from vector<1x1x1xi32>
    %892 = vector.shape_cast %879 : vector<8x128xi32> to vector<1x8x128xi32>
    %cst_346 = arith.constant dense<0> : vector<1xi32>
    %893 = vector.multi_reduction <add>, %892, %cst_346 [1, 2] : vector<1x8x128xi32> to vector<1xi32>
    %894 = vector.shape_cast %893 : vector<1xi32> to vector<1x1x1xi32>
    %895 = vector.extract %894[0, 0, 0] : i32 from vector<1x1x1xi32>
    %c65535_i32_347 = arith.constant 65535 : i32
    %896 = arith.andi %891, %c65535_i32_347 : i32
    %c16_i32_348 = arith.constant 16 : i32
    %897 = arith.shrsi %891, %c16_i32_348 : i32
    %898 = arith.cmpi sge, %896, %635 : i32
    %899 = arith.extui %898 : i1 to i32
    %900 = arith.cmpi sge, %895, %635 : i32
    %901 = arith.extui %900 : i1 to i32
    %902 = arith.addi %899, %901 : i32
    %903 = arith.cmpi sge, %897, %635 : i32
    %904 = arith.extui %903 : i1 to i32
    %905 = arith.addi %902, %904 : i32
    %906 = arith.muli %870, %905 : i32
    %907 = arith.addi %869, %906 : i32
    %c2_i32_349 = arith.constant 2 : i32
    %908 = arith.shrsi %870, %c2_i32_349 : i32
    %c7_i32_350 = arith.constant 7 : i32
    %909 = arith.addi %907, %908 : i32
    %910 = vector.broadcast %909 : i32 to vector<8x128xi32>
    %911 = arith.cmpi sge, %642, %910 : vector<8x128xi32>
    %912 = arith.extui %911 : vector<8x128xi1> to vector<8x128xi32>
    %c2_i32_351 = arith.constant 2 : i32
    %913 = arith.muli %c2_i32_351, %908 : i32
    %914 = arith.addi %907, %913 : i32
    %915 = vector.broadcast %914 : i32 to vector<8x128xi32>
    %916 = arith.cmpi sge, %642, %915 : vector<8x128xi32>
    %917 = arith.extui %916 : vector<8x128xi1> to vector<8x128xi32>
    %c3_i32_352 = arith.constant 3 : i32
    %918 = arith.muli %c3_i32_352, %908 : i32
    %919 = arith.addi %907, %918 : i32
    %920 = vector.broadcast %919 : i32 to vector<8x128xi32>
    %921 = arith.cmpi sge, %642, %920 : vector<8x128xi32>
    %922 = arith.extui %921 : vector<8x128xi1> to vector<8x128xi32>
    %c16_i32_353 = arith.constant 16 : i32
    %923 = vector.broadcast %c16_i32_353 : i32 to vector<8x128xi32>
    %924 = arith.shli %922, %923 : vector<8x128xi32>
    %925 = arith.addi %912, %924 : vector<8x128xi32>
    %926 = vector.shape_cast %925 : vector<8x128xi32> to vector<1x8x128xi32>
    %cst_354 = arith.constant dense<0> : vector<1xi32>
    %927 = vector.multi_reduction <add>, %926, %cst_354 [1, 2] : vector<1x8x128xi32> to vector<1xi32>
    %928 = vector.shape_cast %927 : vector<1xi32> to vector<1x1x1xi32>
    %929 = vector.extract %928[0, 0, 0] : i32 from vector<1x1x1xi32>
    %930 = vector.shape_cast %917 : vector<8x128xi32> to vector<1x8x128xi32>
    %cst_355 = arith.constant dense<0> : vector<1xi32>
    %931 = vector.multi_reduction <add>, %930, %cst_355 [1, 2] : vector<1x8x128xi32> to vector<1xi32>
    %932 = vector.shape_cast %931 : vector<1xi32> to vector<1x1x1xi32>
    %933 = vector.extract %932[0, 0, 0] : i32 from vector<1x1x1xi32>
    %c65535_i32_356 = arith.constant 65535 : i32
    %934 = arith.andi %929, %c65535_i32_356 : i32
    %c16_i32_357 = arith.constant 16 : i32
    %935 = arith.shrsi %929, %c16_i32_357 : i32
    %936 = arith.cmpi sge, %934, %635 : i32
    %937 = arith.extui %936 : i1 to i32
    %938 = arith.cmpi sge, %933, %635 : i32
    %939 = arith.extui %938 : i1 to i32
    %940 = arith.addi %937, %939 : i32
    %941 = arith.cmpi sge, %935, %635 : i32
    %942 = arith.extui %941 : i1 to i32
    %943 = arith.addi %940, %942 : i32
    %944 = arith.muli %908, %943 : i32
    %945 = arith.addi %907, %944 : i32
    %c2_i32_358 = arith.constant 2 : i32
    %946 = arith.shrsi %908, %c2_i32_358 : i32
    %c8_i32_359 = arith.constant 8 : i32
    %947 = arith.addi %945, %946 : i32
    %948 = vector.broadcast %947 : i32 to vector<8x128xi32>
    %949 = arith.cmpi sge, %642, %948 : vector<8x128xi32>
    %950 = arith.extui %949 : vector<8x128xi1> to vector<8x128xi32>
    %c2_i32_360 = arith.constant 2 : i32
    %951 = arith.muli %c2_i32_360, %946 : i32
    %952 = arith.addi %945, %951 : i32
    %953 = vector.broadcast %952 : i32 to vector<8x128xi32>
    %954 = arith.cmpi sge, %642, %953 : vector<8x128xi32>
    %955 = arith.extui %954 : vector<8x128xi1> to vector<8x128xi32>
    %c3_i32_361 = arith.constant 3 : i32
    %956 = arith.muli %c3_i32_361, %946 : i32
    %957 = arith.addi %945, %956 : i32
    %958 = vector.broadcast %957 : i32 to vector<8x128xi32>
    %959 = arith.cmpi sge, %642, %958 : vector<8x128xi32>
    %960 = arith.extui %959 : vector<8x128xi1> to vector<8x128xi32>
    %c16_i32_362 = arith.constant 16 : i32
    %961 = vector.broadcast %c16_i32_362 : i32 to vector<8x128xi32>
    %962 = arith.shli %960, %961 : vector<8x128xi32>
    %963 = arith.addi %950, %962 : vector<8x128xi32>
    %964 = vector.shape_cast %963 : vector<8x128xi32> to vector<1x8x128xi32>
    %cst_363 = arith.constant dense<0> : vector<1xi32>
    %965 = vector.multi_reduction <add>, %964, %cst_363 [1, 2] : vector<1x8x128xi32> to vector<1xi32>
    %966 = vector.shape_cast %965 : vector<1xi32> to vector<1x1x1xi32>
    %967 = vector.extract %966[0, 0, 0] : i32 from vector<1x1x1xi32>
    %968 = vector.shape_cast %955 : vector<8x128xi32> to vector<1x8x128xi32>
    %cst_364 = arith.constant dense<0> : vector<1xi32>
    %969 = vector.multi_reduction <add>, %968, %cst_364 [1, 2] : vector<1x8x128xi32> to vector<1xi32>
    %970 = vector.shape_cast %969 : vector<1xi32> to vector<1x1x1xi32>
    %971 = vector.extract %970[0, 0, 0] : i32 from vector<1x1x1xi32>
    %c65535_i32_365 = arith.constant 65535 : i32
    %972 = arith.andi %967, %c65535_i32_365 : i32
    %c16_i32_366 = arith.constant 16 : i32
    %973 = arith.shrsi %967, %c16_i32_366 : i32
    %974 = arith.cmpi sge, %972, %635 : i32
    %975 = arith.extui %974 : i1 to i32
    %976 = arith.cmpi sge, %971, %635 : i32
    %977 = arith.extui %976 : i1 to i32
    %978 = arith.addi %975, %977 : i32
    %979 = arith.cmpi sge, %973, %635 : i32
    %980 = arith.extui %979 : i1 to i32
    %981 = arith.addi %978, %980 : i32
    %982 = arith.muli %946, %981 : i32
    %983 = arith.addi %945, %982 : i32
    %c2_i32_367 = arith.constant 2 : i32
    %984 = arith.shrsi %946, %c2_i32_367 : i32
    %c9_i32_368 = arith.constant 9 : i32
    %985 = arith.addi %983, %984 : i32
    %986 = vector.broadcast %985 : i32 to vector<8x128xi32>
    %987 = arith.cmpi sge, %642, %986 : vector<8x128xi32>
    %988 = arith.extui %987 : vector<8x128xi1> to vector<8x128xi32>
    %c2_i32_369 = arith.constant 2 : i32
    %989 = arith.muli %c2_i32_369, %984 : i32
    %990 = arith.addi %983, %989 : i32
    %991 = vector.broadcast %990 : i32 to vector<8x128xi32>
    %992 = arith.cmpi sge, %642, %991 : vector<8x128xi32>
    %993 = arith.extui %992 : vector<8x128xi1> to vector<8x128xi32>
    %c3_i32_370 = arith.constant 3 : i32
    %994 = arith.muli %c3_i32_370, %984 : i32
    %995 = arith.addi %983, %994 : i32
    %996 = vector.broadcast %995 : i32 to vector<8x128xi32>
    %997 = arith.cmpi sge, %642, %996 : vector<8x128xi32>
    %998 = arith.extui %997 : vector<8x128xi1> to vector<8x128xi32>
    %c16_i32_371 = arith.constant 16 : i32
    %999 = vector.broadcast %c16_i32_371 : i32 to vector<8x128xi32>
    %1000 = arith.shli %998, %999 : vector<8x128xi32>
    %1001 = arith.addi %988, %1000 : vector<8x128xi32>
    %1002 = vector.shape_cast %1001 : vector<8x128xi32> to vector<1x8x128xi32>
    %cst_372 = arith.constant dense<0> : vector<1xi32>
    %1003 = vector.multi_reduction <add>, %1002, %cst_372 [1, 2] : vector<1x8x128xi32> to vector<1xi32>
    %1004 = vector.shape_cast %1003 : vector<1xi32> to vector<1x1x1xi32>
    %1005 = vector.extract %1004[0, 0, 0] : i32 from vector<1x1x1xi32>
    %1006 = vector.shape_cast %993 : vector<8x128xi32> to vector<1x8x128xi32>
    %cst_373 = arith.constant dense<0> : vector<1xi32>
    %1007 = vector.multi_reduction <add>, %1006, %cst_373 [1, 2] : vector<1x8x128xi32> to vector<1xi32>
    %1008 = vector.shape_cast %1007 : vector<1xi32> to vector<1x1x1xi32>
    %1009 = vector.extract %1008[0, 0, 0] : i32 from vector<1x1x1xi32>
    %c65535_i32_374 = arith.constant 65535 : i32
    %1010 = arith.andi %1005, %c65535_i32_374 : i32
    %c16_i32_375 = arith.constant 16 : i32
    %1011 = arith.shrsi %1005, %c16_i32_375 : i32
    %1012 = arith.cmpi sge, %1010, %635 : i32
    %1013 = arith.extui %1012 : i1 to i32
    %1014 = arith.cmpi sge, %1009, %635 : i32
    %1015 = arith.extui %1014 : i1 to i32
    %1016 = arith.addi %1013, %1015 : i32
    %1017 = arith.cmpi sge, %1011, %635 : i32
    %1018 = arith.extui %1017 : i1 to i32
    %1019 = arith.addi %1016, %1018 : i32
    %1020 = arith.muli %984, %1019 : i32
    %1021 = arith.addi %983, %1020 : i32
    %c2_i32_376 = arith.constant 2 : i32
    %1022 = arith.shrsi %984, %c2_i32_376 : i32
    %c10_i32_377 = arith.constant 10 : i32
    %1023 = arith.addi %1021, %1022 : i32
    %1024 = vector.broadcast %1023 : i32 to vector<8x128xi32>
    %1025 = arith.cmpi sge, %642, %1024 : vector<8x128xi32>
    %1026 = arith.extui %1025 : vector<8x128xi1> to vector<8x128xi32>
    %c2_i32_378 = arith.constant 2 : i32
    %1027 = arith.muli %c2_i32_378, %1022 : i32
    %1028 = arith.addi %1021, %1027 : i32
    %1029 = vector.broadcast %1028 : i32 to vector<8x128xi32>
    %1030 = arith.cmpi sge, %642, %1029 : vector<8x128xi32>
    %1031 = arith.extui %1030 : vector<8x128xi1> to vector<8x128xi32>
    %c3_i32_379 = arith.constant 3 : i32
    %1032 = arith.muli %c3_i32_379, %1022 : i32
    %1033 = arith.addi %1021, %1032 : i32
    %1034 = vector.broadcast %1033 : i32 to vector<8x128xi32>
    %1035 = arith.cmpi sge, %642, %1034 : vector<8x128xi32>
    %1036 = arith.extui %1035 : vector<8x128xi1> to vector<8x128xi32>
    %c16_i32_380 = arith.constant 16 : i32
    %1037 = vector.broadcast %c16_i32_380 : i32 to vector<8x128xi32>
    %1038 = arith.shli %1036, %1037 : vector<8x128xi32>
    %1039 = arith.addi %1026, %1038 : vector<8x128xi32>
    %1040 = vector.shape_cast %1039 : vector<8x128xi32> to vector<1x8x128xi32>
    %cst_381 = arith.constant dense<0> : vector<1xi32>
    %1041 = vector.multi_reduction <add>, %1040, %cst_381 [1, 2] : vector<1x8x128xi32> to vector<1xi32>
    %1042 = vector.shape_cast %1041 : vector<1xi32> to vector<1x1x1xi32>
    %1043 = vector.extract %1042[0, 0, 0] : i32 from vector<1x1x1xi32>
    %1044 = vector.shape_cast %1031 : vector<8x128xi32> to vector<1x8x128xi32>
    %cst_382 = arith.constant dense<0> : vector<1xi32>
    %1045 = vector.multi_reduction <add>, %1044, %cst_382 [1, 2] : vector<1x8x128xi32> to vector<1xi32>
    %1046 = vector.shape_cast %1045 : vector<1xi32> to vector<1x1x1xi32>
    %1047 = vector.extract %1046[0, 0, 0] : i32 from vector<1x1x1xi32>
    %c65535_i32_383 = arith.constant 65535 : i32
    %1048 = arith.andi %1043, %c65535_i32_383 : i32
    %c16_i32_384 = arith.constant 16 : i32
    %1049 = arith.shrsi %1043, %c16_i32_384 : i32
    %1050 = arith.cmpi sge, %1048, %635 : i32
    %1051 = arith.extui %1050 : i1 to i32
    %1052 = arith.cmpi sge, %1047, %635 : i32
    %1053 = arith.extui %1052 : i1 to i32
    %1054 = arith.addi %1051, %1053 : i32
    %1055 = arith.cmpi sge, %1049, %635 : i32
    %1056 = arith.extui %1055 : i1 to i32
    %1057 = arith.addi %1054, %1056 : i32
    %1058 = arith.muli %1022, %1057 : i32
    %1059 = arith.addi %1021, %1058 : i32
    %c2_i32_385 = arith.constant 2 : i32
    %1060 = arith.shrsi %1022, %c2_i32_385 : i32
    %c11_i32_386 = arith.constant 11 : i32
    %1061 = arith.addi %1059, %1060 : i32
    %1062 = vector.broadcast %1061 : i32 to vector<8x128xi32>
    %1063 = arith.cmpi sge, %642, %1062 : vector<8x128xi32>
    %1064 = arith.extui %1063 : vector<8x128xi1> to vector<8x128xi32>
    %c2_i32_387 = arith.constant 2 : i32
    %1065 = arith.muli %c2_i32_387, %1060 : i32
    %1066 = arith.addi %1059, %1065 : i32
    %1067 = vector.broadcast %1066 : i32 to vector<8x128xi32>
    %1068 = arith.cmpi sge, %642, %1067 : vector<8x128xi32>
    %1069 = arith.extui %1068 : vector<8x128xi1> to vector<8x128xi32>
    %c3_i32_388 = arith.constant 3 : i32
    %1070 = arith.muli %c3_i32_388, %1060 : i32
    %1071 = arith.addi %1059, %1070 : i32
    %1072 = vector.broadcast %1071 : i32 to vector<8x128xi32>
    %1073 = arith.cmpi sge, %642, %1072 : vector<8x128xi32>
    %1074 = arith.extui %1073 : vector<8x128xi1> to vector<8x128xi32>
    %c16_i32_389 = arith.constant 16 : i32
    %1075 = vector.broadcast %c16_i32_389 : i32 to vector<8x128xi32>
    %1076 = arith.shli %1074, %1075 : vector<8x128xi32>
    %1077 = arith.addi %1064, %1076 : vector<8x128xi32>
    %1078 = vector.shape_cast %1077 : vector<8x128xi32> to vector<1x8x128xi32>
    %cst_390 = arith.constant dense<0> : vector<1xi32>
    %1079 = vector.multi_reduction <add>, %1078, %cst_390 [1, 2] : vector<1x8x128xi32> to vector<1xi32>
    %1080 = vector.shape_cast %1079 : vector<1xi32> to vector<1x1x1xi32>
    %1081 = vector.extract %1080[0, 0, 0] : i32 from vector<1x1x1xi32>
    %1082 = vector.shape_cast %1069 : vector<8x128xi32> to vector<1x8x128xi32>
    %cst_391 = arith.constant dense<0> : vector<1xi32>
    %1083 = vector.multi_reduction <add>, %1082, %cst_391 [1, 2] : vector<1x8x128xi32> to vector<1xi32>
    %1084 = vector.shape_cast %1083 : vector<1xi32> to vector<1x1x1xi32>
    %1085 = vector.extract %1084[0, 0, 0] : i32 from vector<1x1x1xi32>
    %c65535_i32_392 = arith.constant 65535 : i32
    %1086 = arith.andi %1081, %c65535_i32_392 : i32
    %c16_i32_393 = arith.constant 16 : i32
    %1087 = arith.shrsi %1081, %c16_i32_393 : i32
    %1088 = arith.cmpi sge, %1086, %635 : i32
    %1089 = arith.extui %1088 : i1 to i32
    %1090 = arith.cmpi sge, %1085, %635 : i32
    %1091 = arith.extui %1090 : i1 to i32
    %1092 = arith.addi %1089, %1091 : i32
    %1093 = arith.cmpi sge, %1087, %635 : i32
    %1094 = arith.extui %1093 : i1 to i32
    %1095 = arith.addi %1092, %1094 : i32
    %1096 = arith.muli %1060, %1095 : i32
    %1097 = arith.addi %1059, %1096 : i32
    %c2_i32_394 = arith.constant 2 : i32
    %1098 = arith.shrsi %1060, %c2_i32_394 : i32
    %c12_i32_395 = arith.constant 12 : i32
    %1099 = arith.addi %1097, %1098 : i32
    %1100 = vector.broadcast %1099 : i32 to vector<8x128xi32>
    %1101 = arith.cmpi sge, %642, %1100 : vector<8x128xi32>
    %1102 = arith.extui %1101 : vector<8x128xi1> to vector<8x128xi32>
    %c2_i32_396 = arith.constant 2 : i32
    %1103 = arith.muli %c2_i32_396, %1098 : i32
    %1104 = arith.addi %1097, %1103 : i32
    %1105 = vector.broadcast %1104 : i32 to vector<8x128xi32>
    %1106 = arith.cmpi sge, %642, %1105 : vector<8x128xi32>
    %1107 = arith.extui %1106 : vector<8x128xi1> to vector<8x128xi32>
    %c3_i32_397 = arith.constant 3 : i32
    %1108 = arith.muli %c3_i32_397, %1098 : i32
    %1109 = arith.addi %1097, %1108 : i32
    %1110 = vector.broadcast %1109 : i32 to vector<8x128xi32>
    %1111 = arith.cmpi sge, %642, %1110 : vector<8x128xi32>
    %1112 = arith.extui %1111 : vector<8x128xi1> to vector<8x128xi32>
    %c16_i32_398 = arith.constant 16 : i32
    %1113 = vector.broadcast %c16_i32_398 : i32 to vector<8x128xi32>
    %1114 = arith.shli %1112, %1113 : vector<8x128xi32>
    %1115 = arith.addi %1102, %1114 : vector<8x128xi32>
    %1116 = vector.shape_cast %1115 : vector<8x128xi32> to vector<1x8x128xi32>
    %cst_399 = arith.constant dense<0> : vector<1xi32>
    %1117 = vector.multi_reduction <add>, %1116, %cst_399 [1, 2] : vector<1x8x128xi32> to vector<1xi32>
    %1118 = vector.shape_cast %1117 : vector<1xi32> to vector<1x1x1xi32>
    %1119 = vector.extract %1118[0, 0, 0] : i32 from vector<1x1x1xi32>
    %1120 = vector.shape_cast %1107 : vector<8x128xi32> to vector<1x8x128xi32>
    %cst_400 = arith.constant dense<0> : vector<1xi32>
    %1121 = vector.multi_reduction <add>, %1120, %cst_400 [1, 2] : vector<1x8x128xi32> to vector<1xi32>
    %1122 = vector.shape_cast %1121 : vector<1xi32> to vector<1x1x1xi32>
    %1123 = vector.extract %1122[0, 0, 0] : i32 from vector<1x1x1xi32>
    %c65535_i32_401 = arith.constant 65535 : i32
    %1124 = arith.andi %1119, %c65535_i32_401 : i32
    %c16_i32_402 = arith.constant 16 : i32
    %1125 = arith.shrsi %1119, %c16_i32_402 : i32
    %1126 = arith.cmpi sge, %1124, %635 : i32
    %1127 = arith.extui %1126 : i1 to i32
    %1128 = arith.cmpi sge, %1123, %635 : i32
    %1129 = arith.extui %1128 : i1 to i32
    %1130 = arith.addi %1127, %1129 : i32
    %1131 = arith.cmpi sge, %1125, %635 : i32
    %1132 = arith.extui %1131 : i1 to i32
    %1133 = arith.addi %1130, %1132 : i32
    %1134 = arith.muli %1098, %1133 : i32
    %1135 = arith.addi %1097, %1134 : i32
    %c2_i32_403 = arith.constant 2 : i32
    %1136 = arith.shrsi %1098, %c2_i32_403 : i32
    %c13_i32_404 = arith.constant 13 : i32
    %1137 = arith.addi %1135, %1136 : i32
    %1138 = vector.broadcast %1137 : i32 to vector<8x128xi32>
    %1139 = arith.cmpi sge, %642, %1138 : vector<8x128xi32>
    %1140 = arith.extui %1139 : vector<8x128xi1> to vector<8x128xi32>
    %c2_i32_405 = arith.constant 2 : i32
    %1141 = arith.muli %c2_i32_405, %1136 : i32
    %1142 = arith.addi %1135, %1141 : i32
    %1143 = vector.broadcast %1142 : i32 to vector<8x128xi32>
    %1144 = arith.cmpi sge, %642, %1143 : vector<8x128xi32>
    %1145 = arith.extui %1144 : vector<8x128xi1> to vector<8x128xi32>
    %c3_i32_406 = arith.constant 3 : i32
    %1146 = arith.muli %c3_i32_406, %1136 : i32
    %1147 = arith.addi %1135, %1146 : i32
    %1148 = vector.broadcast %1147 : i32 to vector<8x128xi32>
    %1149 = arith.cmpi sge, %642, %1148 : vector<8x128xi32>
    %1150 = arith.extui %1149 : vector<8x128xi1> to vector<8x128xi32>
    %c16_i32_407 = arith.constant 16 : i32
    %1151 = vector.broadcast %c16_i32_407 : i32 to vector<8x128xi32>
    %1152 = arith.shli %1150, %1151 : vector<8x128xi32>
    %1153 = arith.addi %1140, %1152 : vector<8x128xi32>
    %1154 = vector.shape_cast %1153 : vector<8x128xi32> to vector<1x8x128xi32>
    %cst_408 = arith.constant dense<0> : vector<1xi32>
    %1155 = vector.multi_reduction <add>, %1154, %cst_408 [1, 2] : vector<1x8x128xi32> to vector<1xi32>
    %1156 = vector.shape_cast %1155 : vector<1xi32> to vector<1x1x1xi32>
    %1157 = vector.extract %1156[0, 0, 0] : i32 from vector<1x1x1xi32>
    %1158 = vector.shape_cast %1145 : vector<8x128xi32> to vector<1x8x128xi32>
    %cst_409 = arith.constant dense<0> : vector<1xi32>
    %1159 = vector.multi_reduction <add>, %1158, %cst_409 [1, 2] : vector<1x8x128xi32> to vector<1xi32>
    %1160 = vector.shape_cast %1159 : vector<1xi32> to vector<1x1x1xi32>
    %1161 = vector.extract %1160[0, 0, 0] : i32 from vector<1x1x1xi32>
    %c65535_i32_410 = arith.constant 65535 : i32
    %1162 = arith.andi %1157, %c65535_i32_410 : i32
    %c16_i32_411 = arith.constant 16 : i32
    %1163 = arith.shrsi %1157, %c16_i32_411 : i32
    %1164 = arith.cmpi sge, %1162, %635 : i32
    %1165 = arith.extui %1164 : i1 to i32
    %1166 = arith.cmpi sge, %1161, %635 : i32
    %1167 = arith.extui %1166 : i1 to i32
    %1168 = arith.addi %1165, %1167 : i32
    %1169 = arith.cmpi sge, %1163, %635 : i32
    %1170 = arith.extui %1169 : i1 to i32
    %1171 = arith.addi %1168, %1170 : i32
    %1172 = arith.muli %1136, %1171 : i32
    %1173 = arith.addi %1135, %1172 : i32
    %c2_i32_412 = arith.constant 2 : i32
    %1174 = arith.shrsi %1136, %c2_i32_412 : i32
    %c14_i32_413 = arith.constant 14 : i32
    %1175 = arith.addi %1173, %1174 : i32
    %1176 = vector.broadcast %1175 : i32 to vector<8x128xi32>
    %1177 = arith.cmpi sge, %642, %1176 : vector<8x128xi32>
    %1178 = arith.extui %1177 : vector<8x128xi1> to vector<8x128xi32>
    %c2_i32_414 = arith.constant 2 : i32
    %1179 = arith.muli %c2_i32_414, %1174 : i32
    %1180 = arith.addi %1173, %1179 : i32
    %1181 = vector.broadcast %1180 : i32 to vector<8x128xi32>
    %1182 = arith.cmpi sge, %642, %1181 : vector<8x128xi32>
    %1183 = arith.extui %1182 : vector<8x128xi1> to vector<8x128xi32>
    %c3_i32_415 = arith.constant 3 : i32
    %1184 = arith.muli %c3_i32_415, %1174 : i32
    %1185 = arith.addi %1173, %1184 : i32
    %1186 = vector.broadcast %1185 : i32 to vector<8x128xi32>
    %1187 = arith.cmpi sge, %642, %1186 : vector<8x128xi32>
    %1188 = arith.extui %1187 : vector<8x128xi1> to vector<8x128xi32>
    %c16_i32_416 = arith.constant 16 : i32
    %1189 = vector.broadcast %c16_i32_416 : i32 to vector<8x128xi32>
    %1190 = arith.shli %1188, %1189 : vector<8x128xi32>
    %1191 = arith.addi %1178, %1190 : vector<8x128xi32>
    %1192 = vector.shape_cast %1191 : vector<8x128xi32> to vector<1x8x128xi32>
    %cst_417 = arith.constant dense<0> : vector<1xi32>
    %1193 = vector.multi_reduction <add>, %1192, %cst_417 [1, 2] : vector<1x8x128xi32> to vector<1xi32>
    %1194 = vector.shape_cast %1193 : vector<1xi32> to vector<1x1x1xi32>
    %1195 = vector.extract %1194[0, 0, 0] : i32 from vector<1x1x1xi32>
    %1196 = vector.shape_cast %1183 : vector<8x128xi32> to vector<1x8x128xi32>
    %cst_418 = arith.constant dense<0> : vector<1xi32>
    %1197 = vector.multi_reduction <add>, %1196, %cst_418 [1, 2] : vector<1x8x128xi32> to vector<1xi32>
    %1198 = vector.shape_cast %1197 : vector<1xi32> to vector<1x1x1xi32>
    %1199 = vector.extract %1198[0, 0, 0] : i32 from vector<1x1x1xi32>
    %c65535_i32_419 = arith.constant 65535 : i32
    %1200 = arith.andi %1195, %c65535_i32_419 : i32
    %c16_i32_420 = arith.constant 16 : i32
    %1201 = arith.shrsi %1195, %c16_i32_420 : i32
    %1202 = arith.cmpi sge, %1200, %635 : i32
    %1203 = arith.extui %1202 : i1 to i32
    %1204 = arith.cmpi sge, %1199, %635 : i32
    %1205 = arith.extui %1204 : i1 to i32
    %1206 = arith.addi %1203, %1205 : i32
    %1207 = arith.cmpi sge, %1201, %635 : i32
    %1208 = arith.extui %1207 : i1 to i32
    %1209 = arith.addi %1206, %1208 : i32
    %1210 = arith.muli %1174, %1209 : i32
    %1211 = arith.addi %1173, %1210 : i32
    %c2_i32_421 = arith.constant 2 : i32
    %1212 = arith.shrsi %1174, %c2_i32_421 : i32
    %c1_i32_422 = arith.constant 1 : i32
    %1213 = arith.addi %1211, %c1_i32_422 : i32
    %1214 = vector.broadcast %1213 : i32 to vector<8x128xi32>
    %1215 = arith.cmpi sge, %642, %1214 : vector<8x128xi32>
    %1216 = arith.extui %1215 : vector<8x128xi1> to vector<8x128xi32>
    %1217 = vector.shape_cast %1216 : vector<8x128xi32> to vector<1x8x128xi32>
    %cst_423 = arith.constant dense<0> : vector<1xi32>
    %1218 = vector.multi_reduction <add>, %1217, %cst_423 [1, 2] : vector<1x8x128xi32> to vector<1xi32>
    %1219 = vector.shape_cast %1218 : vector<1xi32> to vector<1x1x1xi32>
    %1220 = vector.extract %1219[0, 0, 0] : i32 from vector<1x1x1xi32>
    %1221 = arith.cmpi sge, %1220, %635 : i32
    %c1_i32_424 = arith.constant 1 : i32
    %1222 = arith.addi %1211, %c1_i32_424 : i32
    %1223 = arith.select %1221, %1222, %1211 : i32
    %1224 = vector.broadcast %1223 : i32 to vector<8x128xi32>
    %1225 = arith.cmpi eq, %642, %1224 : vector<8x128xi32>
    %cst_425 = arith.constant 0.000000e+00 : f32
    %1226 = vector.broadcast %cst_425 : f32 to vector<8x128xf32>
    %1227 = arith.select %1225, %641, %1226 : vector<8x128xi1>, vector<8x128xf32>
    %1228 = vector.shape_cast %1227 : vector<8x128xf32> to vector<1x8x128xf32>
    %cst_426 = arith.constant dense<0xFF800000> : vector<1xf32>
    %1229 = vector.multi_reduction <maximumf>, %1228, %cst_426 [1, 2] : vector<1x8x128xf32> to vector<1xf32>
    %1230 = vector.shape_cast %1229 : vector<1xf32> to vector<1x1x1xf32>
    %1231 = vector.extract %1230[0, 0, 0] : f32 from vector<1x1x1xf32>
    %1232 = vector.broadcast %1223 : i32 to vector<8x128xi32>
    %1233 = arith.cmpi sgt, %642, %1232 : vector<8x128xi32>
    %1234 = arith.extui %1233 : vector<8x128xi1> to vector<8x128xi32>
    %1235 = vector.shape_cast %1234 : vector<8x128xi32> to vector<1x8x128xi32>
    %cst_427 = arith.constant dense<0> : vector<1xi32>
    %1236 = vector.multi_reduction <add>, %1235, %cst_427 [1, 2] : vector<1x8x128xi32> to vector<1xi32>
    %1237 = vector.shape_cast %1236 : vector<1xi32> to vector<1x1x1xi32>
    %1238 = vector.extract %1237[0, 0, 0] : i32 from vector<1x1x1xi32>
    %1239 = vector.broadcast %1223 : i32 to vector<8x128xi32>
    %1240 = arith.cmpi sgt, %642, %1239 : vector<8x128xi32>
    %cst_428 = arith.constant 0.000000e+00 : f32
    %1241 = vector.broadcast %cst_428 : f32 to vector<8x128xf32>
    %1242 = arith.select %1240, %641, %1241 : vector<8x128xi1>, vector<8x128xf32>
    %1243 = vector.shape_cast %1242 : vector<8x128xf32> to vector<1x8x128xf32>
    %cst_429 = arith.constant dense<0.000000e+00> : vector<1xf32>
    %1244 = vector.multi_reduction <add>, %1243, %cst_429 [1, 2] : vector<1x8x128xf32> to vector<1xf32>
    %1245 = vector.shape_cast %1244 : vector<1xf32> to vector<1x1x1xf32>
    %1246 = vector.extract %1245[0, 0, 0] : f32 from vector<1x1x1xf32>
    %1247 = arith.subi %635, %1238 : i32
    %1248 = arith.sitofp %1247 : i32 to f32
    %1249 = arith.mulf %1248, %1231 : f32
    %1250 = arith.addf %1246, %1249 : f32
    %cst_430 = arith.constant 0.000000e+00 : f32
    %1251 = vector.broadcast %cst_430 : f32 to vector<8x128xf32>
    %1252 = arith.select %312, %628, %1251 : vector<8x128xi1>, vector<8x128xf32>
    %1253 = vector.shape_cast %1252 : vector<8x128xf32> to vector<1x8x128xf32>
    %cst_431 = arith.constant dense<0.000000e+00> : vector<1xf32>
    %1254 = vector.multi_reduction <add>, %1253, %cst_431 [1, 2] : vector<1x8x128xf32> to vector<1xf32>
    %1255 = vector.shape_cast %1254 : vector<1xf32> to vector<1x1x1xf32>
    %1256 = vector.extract %1255[0, 0, 0] : f32 from vector<1x1x1xf32>
    %1257 = arith.addf %1256, %1250 : f32
    %1258 = tpu.iota {dimensions = array<i32: 1>} : vector<8x128xi32>
    %1259 = tpu.iota {dimensions = array<i32: 0>} : vector<8x128xi32>
    %c128_i32_432 = arith.constant 128 : i32
    %1260 = vector.broadcast %c128_i32_432 : i32 to vector<8x128xi32>
    %1261 = arith.muli %1259, %1260 : vector<8x128xi32>
    %1262 = arith.addi %1261, %1258 : vector<8x128xi32>
    %c0_i32_433 = arith.constant 0 : i32
    %1263 = vector.broadcast %c0_i32_433 : i32 to vector<8x128xi32>
    %1264 = arith.cmpi eq, %1262, %1263 : vector<8x128xi32>
    %c1_i32_434 = arith.constant 1 : i32
    %1265 = vector.broadcast %c1_i32_434 : i32 to vector<8x128xi32>
    %1266 = arith.cmpi eq, %1262, %1265 : vector<8x128xi32>
    %c2_i32_435 = arith.constant 2 : i32
    %1267 = vector.broadcast %c2_i32_435 : i32 to vector<8x128xi32>
    %1268 = arith.cmpi eq, %1262, %1267 : vector<8x128xi32>
    %1269 = arith.sitofp %633 : i32 to f32
    %cst_436 = arith.constant 0.000000e+00 : f32
    %1270 = vector.broadcast %1269 : f32 to vector<8x128xf32>
    %1271 = vector.broadcast %cst_436 : f32 to vector<8x128xf32>
    %1272 = arith.select %1268, %1270, %1271 : vector<8x128xi1>, vector<8x128xf32>
    %1273 = vector.broadcast %1257 : f32 to vector<8x128xf32>
    %1274 = arith.select %1266, %1273, %1272 : vector<8x128xi1>, vector<8x128xf32>
    %1275 = vector.broadcast %393 : f32 to vector<8x128xf32>
    %1276 = arith.select %1264, %1275, %1274 : vector<8x128xi1>, vector<8x128xf32>
    %1277 = vector.shape_cast %1276 : vector<8x128xf32> to vector<1x8x128xf32>
    %c0_437 = arith.constant 0 : index
    %c0_438 = arith.constant 0 : index
    %c0_439 = arith.constant 0 : index
    %1278 = vector.load %arg5[%c0_437, %c0_438, %c0_439] : memref<1x8x128xf32, #tpu.memory_space<vmem>>, vector<1x8x128xf32>
    tpu.vector_store %arg5[%c0_437, %c0_438, %c0_439], %1277 {strides = array<i32>} : memref<1x8x128xf32, #tpu.memory_space<vmem>>, vector<1x8x128xf32>,
    return
  }
  func.func @transform_0(%arg0: i32) -> (i32, i32) {
    %c0_i32 = arith.constant 0 : i32
    %c0_i32_0 = arith.constant 0 : i32
    %c0_i32_1 = arith.constant 0 : i32
    return %c0_i32, %c0_i32_0 : i32, i32
  }
  func.func @transform_1(%arg0: i32) -> (i32, i32, i32, i32) {
    %c0_i32 = arith.constant 0 : i32
    %c0_i32_0 = arith.constant 0 : i32
    %c0_i32_1 = arith.constant 0 : i32
    %c0_i32_2 = arith.constant 0 : i32
    return %arg0, %c0_i32, %c0_i32_0, %c0_i32_1 : i32, i32, i32, i32
  }
  func.func @transform_2(%arg0: i32) -> (i32, i32, i32, i32) {
    %c0_i32 = arith.constant 0 : i32
    %c0_i32_0 = arith.constant 0 : i32
    %c0_i32_1 = arith.constant 0 : i32
    %c0_i32_2 = arith.constant 0 : i32
    return %arg0, %c0_i32, %c0_i32_0, %c0_i32_1 : i32, i32, i32, i32
  }
  func.func @transform_3(%arg0: i32) -> (i32, i32, i32) {
    %c0_i32 = arith.constant 0 : i32
    %c0_i32_0 = arith.constant 0 : i32
    %c0_i32_1 = arith.constant 0 : i32
    %c0_i32_2 = arith.constant 0 : i32
    return %c0_i32, %c0_i32_0, %c0_i32_1 : i32, i32, i32
  }
  func.func @transform_4(%arg0: i32) -> (i32, i32, i32) {
    %c0_i32 = arith.constant 0 : i32
    %c0_i32_0 = arith.constant 0 : i32
    %c0_i32_1 = arith.constant 0 : i32
    return %arg0, %c0_i32, %c0_i32_0 : i32, i32, i32
  }
}

</mosaic_0001>

<llo_original>
// kernel: tpu_custom_call.1
$region0: #{tpu_custom_call.1}
  #allocation0 [shape = 'u32[]', space=smem, size = 0x4, offset = 0x4, fixed_abs, tag = 'smem constant byte address 0x4 - core index']
  #allocation1 [shape = 'u32[144,128]{1,0:T(1,128)}', space=vmem, size = 0x12000, scoped, tag = 'internal scratch']
  %s0 = inlined_call_operand.hbm [shape: f32[2,20], index: 0, kind: input, shape index: {}]
  %s1 = inlined_call_operand.hbm [shape: f32[2,4,8,128], index: 1, kind: input, shape index: {}]
  %s2 = inlined_call_operand.hbm [shape: f32[2,21,8,128], index: 2, kind: input, shape index: {}]
  %s3 = inlined_call_operand.hbm [shape: f32[9,8,128], index: 3, kind: input, shape index: {}]
  %s4 = inlined_call_operand.hbm [shape: f32[2,8,128], index: 4, kind: output, shape index: {}]
  %s5 = sld [smem:[#allocation0]]
  $region65: #{tpu_custom_call.1} parent=0
    _
  %s7 = ssub.s32 1, %s5
  %s8 = scalar_select 0, %s7, %s5
  $region1: #{tpu_custom_call.1} parent=0
    #allocation2 [shape = 'u8[1024]{0}', space=smem, size = 0x400, scoped, tag = 'input window, operand 0, single buffered']
    #allocation3 [shape = 's32[2]{0}', space=sflag, size = 0x8, scoped, tag = 'scoped memory for tpu_custom_call.1']
    #allocation4 [shape = 's32[2]{0}', space=sflag, size = 0x8, scoped, tag = 'scoped memory for tpu_custom_call.1']
    #allocation5 [shape = 's32[2]{0}', space=sflag, size = 0x8, scoped, tag = 'scoped memory for tpu_custom_call.1']
    #allocation6 [shape = 'u8[32768]{0}', space=vmem, size = 0x8000, scoped, tag = 'input window, operand 1']
    #allocation7 [shape = 'u8[172032]{0}', space=vmem, size = 0x2a000, scoped, tag = 'input window, operand 2']
    #allocation8 [shape = 's32[2]{0}', space=sflag, size = 0x8, scoped, tag = 'scoped memory for tpu_custom_call.1']
    #allocation9 [shape = 'u8[36864]{0}', space=vmem, size = 0x9000, scoped, tag = 'input window, operand 3, single buffered']
    #allocation10 [shape = 'u8[8192]{0}', space=vmem, size = 0x2000, scoped, tag = 'output window, operand 0']
    %9 = vsyncpa [#allocation5], 0
    %10 = vsyncpa [#allocation3], 0
    %s11 = scalar_lea.sflag [#allocation3], 1
    %12 = vsyncpa %s11, 0
    %13 = vsyncpa [#allocation8], 0
    %s14 = scalar_lea.sflag [#allocation8], 1
    %15 = vsyncpa %s14, 0
    %16 = vsyncpa [#allocation4], 0
    %s17 = scalar_lea.sflag [#allocation4], 1
    %18 = vsyncpa %s17, 0
    loop: start=0, step=1, limit=4
    $region2: #{tpu_custom_call.1} parent=1 // loop_pre_header
      _
    $region3: #{tpu_custom_call.1} parent=1 // loop_header
      %s20 = sphi 0, %s24
      %p21 = scmp.ge.s32.totalorder %s20, 4
      %s28 = sphi 0, %s28
      %s30 = sphi 0, %s28
      %s31 = sphi 0, %s30
      %s45 = sphi 0, %s31
      %s51 = sphi 0, %s53
      %s54 = sphi 0, %s51
      %s55 = sphi 0, %s54
      %s71 = sphi 0, %s55
      %s77 = sphi 0, %s79
      %s80 = sphi 0, %s77
      %s81 = sphi 0, %s80
      %s97 = sphi 0, %s81
      %s101 = sphi 0, %s101
      %s103 = sphi 0, %s101
      %s104 = sphi 0, %s103
      %s118 = sphi 0, %s104
      %s124 = sphi 0, %s126
      %s127 = sphi 0, %s124
      %s128 = sphi 0, %s127
      %s144 = sphi 0, %s128
    $region4: #{tpu_custom_call.1} parent=1 // loop_header_branch
      %23 = sbr.rel (%p21) target = $region8
    $region5: #{tpu_custom_call.1} parent=1 // loop_body
      %s25 = ssub.s32 %s20, 1
      %s26 = ssub.s32 %s20, 2
      %s27 = sadd.s32 %s20, 1
      %s29 = sadd.s32 %s28, 1
      %p32 = scmp.eq.s32.totalorder %s20, 1
      %p33 = scmp.ne.s32.totalorder %s28, %s30
      %p34 = scmp.eq.s32.totalorder %s20, 0
      %p35 = por %p33, %p34
      %p36 = scmp.ne.s32.totalorder %s28, %s30
      %p37 = scmp.eq.s32.totalorder %s25, 1
      %p38 = por %p36, %p37
      %p39 = scmp.ne.s32.totalorder %s30, %s31
      %p40 = scmp.eq.s32.totalorder %s25, 0
      %p41 = por %p39, %p40
      %p42 = scmp.ne.s32.totalorder %s30, %s31
      %p43 = scmp.eq.s32.totalorder %s26, 1
      %p44 = por %p42, %p43
      %p46 = scmp.ne.s32.totalorder %s31, %s45
      %p47 = scmp.eq.s32.totalorder %s26, 0
      %p48 = por %p46, %p47
      %s49 = ssub.s32 %s20, %s27
      %p50 = scmp.eq.s32.totalorder %s49, 0
      %s52 = sadd.s32 %s51, 1
      %s53 = scalar_select %p50, %s51, %s52
      %p56 = pneg %p50
      %p57 = scmp.eq.s32.totalorder %s20, 1
      %p58 = por %p56, %p57
      %p59 = scmp.ne.s32.totalorder %s51, %s54
      %p60 = scmp.eq.s32.totalorder %s20, 0
      %p61 = por %p59, %p60
      %p62 = scmp.ne.s32.totalorder %s51, %s54
      %p63 = scmp.eq.s32.totalorder %s25, 1
      %p64 = por %p62, %p63
      %p65 = scmp.ne.s32.totalorder %s54, %s55
      %p66 = scmp.eq.s32.totalorder %s25, 0
      %p67 = por %p65, %p66
      %p68 = scmp.ne.s32.totalorder %s54, %s55
      %p69 = scmp.eq.s32.totalorder %s26, 1
      %p70 = por %p68, %p69
      %p72 = scmp.ne.s32.totalorder %s55, %s71
      %p73 = scmp.eq.s32.totalorder %s26, 0
      %p74 = por %p72, %p73
      %s75 = ssub.s32 %s20, %s27
      %p76 = scmp.eq.s32.totalorder %s75, 0
      %s78 = sadd.s32 %s77, 1
      %s79 = scalar_select %p76, %s77, %s78
      %p82 = pneg %p76
      %p83 = scmp.eq.s32.totalorder %s20, 1
      %p84 = por %p82, %p83
      %p85 = scmp.ne.s32.totalorder %s77, %s80
      %p86 = scmp.eq.s32.totalorder %s20, 0
      %p87 = por %p85, %p86
      %p88 = scmp.ne.s32.totalorder %s77, %s80
      %p89 = scmp.eq.s32.totalorder %s25, 1
      %p90 = por %p88, %p89
      %p91 = scmp.ne.s32.totalorder %s80, %s81
      %p92 = scmp.eq.s32.totalorder %s25, 0
      %p93 = por %p91, %p92
      %p94 = scmp.ne.s32.totalorder %s80, %s81
      %p95 = scmp.eq.s32.totalorder %s26, 1
      %p96 = por %p94, %p95
      %p98 = scmp.ne.s32.totalorder %s81, %s97
      %p99 = scmp.eq.s32.totalorder %s26, 0
      %p100 = por %p98, %p99
      %s102 = sadd.s32 %s101, 1
      %p105 = scmp.eq.s32.totalorder %s20, 1
      %p106 = scmp.ne.s32.totalorder %s101, %s103
      %p107 = scmp.eq.s32.totalorder %s20, 0
      %p108 = por %p106, %p107
      %p109 = scmp.ne.s32.totalorder %s101, %s103
      %p110 = scmp.eq.s32.totalorder %s25, 1
      %p111 = por %p109, %p110
      %p112 = scmp.ne.s32.totalorder %s103, %s104
      %p113 = scmp.eq.s32.totalorder %s25, 0
      %p114 = por %p112, %p113
      %p115 = scmp.ne.s32.totalorder %s103, %s104
      %p116 = scmp.eq.s32.totalorder %s26, 1
      %p117 = por %p115, %p116
      %p119 = scmp.ne.s32.totalorder %s104, %s118
      %p120 = scmp.eq.s32.totalorder %s26, 0
      %p121 = por %p119, %p120
      %s122 = ssub.s32 %s20, %s27
      %p123 = scmp.eq.s32.totalorder %s122, 0
      %s125 = sadd.s32 %s124, 1
      %s126 = scalar_select %p123, %s124, %s125
      %p129 = pneg %p123
      %p130 = scmp.eq.s32.totalorder %s20, 1
      %p131 = por %p129, %p130
      %p132 = scmp.ne.s32.totalorder %s124, %s127
      %p133 = scmp.eq.s32.totalorder %s20, 0
      %p134 = por %p132, %p133
      %p135 = scmp.ne.s32.totalorder %s124, %s127
      %p136 = scmp.eq.s32.totalorder %s25, 1
      %p137 = por %p135, %p136
      %p138 = scmp.ne.s32.totalorder %s127, %s128
      %p139 = scmp.eq.s32.totalorder %s25, 0
      %p140 = por %p138, %p139
      %p141 = scmp.ne.s32.totalorder %s127, %s128
      %p142 = scmp.eq.s32.totalorder %s26, 1
      %p143 = por %p141, %p142
      %p145 = scmp.ne.s32.totalorder %s128, %s144
      %p146 = scmp.eq.s32.totalorder %s26, 0
      %p147 = por %p145, %p146
      %p148 = scmp.le.s32.totalorder 1, %s20
      %p149 = scmp.lt.s32.totalorder %s20, 3
      %p150 = pnand %p148, %p149
      %p151 = pneg %p150
      // Predicated region
      $region9: #{tpu_custom_call.1} parent=5 // pred_check
        _
      $region10: #{tpu_custom_call.1} parent=5 // pred_check_branch
        %153 = sbr.rel (%p150) target = $region12
      $region11: #{tpu_custom_call.1} parent=5 // pred_region
        %s154 = ssub.s32 %s20, 1
        // Predicated region
        $region13: #{tpu_custom_call.1} parent=11 // pred_check
          %p155 = pneg %p41
        $region14: #{tpu_custom_call.1} parent=11 // pred_check_branch
          %157 = sbr.rel (%p155) target = $region16
        $region15: #{tpu_custom_call.1} parent=11 // pred_region
          %s159 = ssub.s32 32, 32
          %160 = vsyncadd [#allocation5], %s159
          %163 = dma.hbm_to_smem %s0, 32, [#allocation2], [#allocation5]
        $region16: #{tpu_custom_call.1} parent=11 // pred_fallthru
          _
        // Predicated region
        $region17: #{tpu_custom_call.1} parent=11 // pred_check
          %p164 = pneg %p114
        $region18: #{tpu_custom_call.1} parent=11 // pred_check_branch
          %166 = sbr.rel (%p164) target = $region20
        $region19: #{tpu_custom_call.1} parent=11 // pred_region
          %s168 = ssub.s32 1152, 1152
          %169 = vsyncadd [#allocation8], %s168
          %s170 = sshll.u32 [#allocation9], 4
          %s171 = int_to_ptr.vmem [resolvable:$true] %s170
          %176 = dma.hbm_to_vmem [thread:$0]  %s3, 1152, %s171, [#allocation8], 128, 128, 8
        $region20: #{tpu_custom_call.1} parent=11 // pred_fallthru
          _
      $region12: #{tpu_custom_call.1} parent=5 // pred_fallthru
        _
      %p177 = scmp.lt.s32.totalorder %s20, 2
      // Predicated region
      $region21: #{tpu_custom_call.1} parent=5 // pred_check
        %p178 = pneg %p177
      $region22: #{tpu_custom_call.1} parent=5 // pred_check_branch
        %180 = sbr.rel (%p178) target = $region24
      $region23: #{tpu_custom_call.1} parent=5 // pred_region
        // Predicated region
        $region25: #{tpu_custom_call.1} parent=23 // pred_check
          %p181 = pneg %p61
        $region26: #{tpu_custom_call.1} parent=23 // pred_check_branch
          %183 = sbr.rel (%p181) target = $region28
        $region27: #{tpu_custom_call.1} parent=23 // pred_region
          %s184 = sand.u32 %s51, 1
          %s185 = scalar_lea.sflag [#allocation3], %s184
          %s186 = sand.u32 %s51, 1
          %s187 = smul.addr %s186, 32
          %s188 = scalar_lea.vmem [#allocation6], %s187
          %s190 = ssub.s32 512, 512
          %191 = vsyncadd %s185, %s190
          %s192 = smul.addr %s20, 4
          %s193 = smul.addr %s192, 128
          %s194 = scalar_lea.hbm %s1, %s193
          %s195 = sshll.u32 %s188, 4
          %s196 = int_to_ptr.vmem [resolvable:$true] %s195
          %201 = dma.hbm_to_vmem [thread:$0]  %s194, 512, %s196, %s185, 128, 128, 8
        $region28: #{tpu_custom_call.1} parent=23 // pred_fallthru
          _
        // Predicated region
        $region29: #{tpu_custom_call.1} parent=23 // pred_check
          %p202 = pneg %p87
        $region30: #{tpu_custom_call.1} parent=23 // pred_check_branch
          %204 = sbr.rel (%p202) target = $region32
        $region31: #{tpu_custom_call.1} parent=23 // pred_region
          %s205 = sand.u32 %s20, 1
          %s206 = scalar_lea.sflag [#allocation8], %s205
          %s207 = sand.u32 %s77, 1
          %s208 = smul.addr %s207, 168
          %s209 = scalar_lea.vmem [#allocation7], %s208
          %s211 = ssub.s32 2688, 2688
          %212 = vsyncadd %s206, %s211
          %s213 = smul.addr %s20, 21
          %s214 = smul.addr %s213, 128
          %s215 = scalar_lea.hbm %s2, %s214
          %s216 = sshll.u32 %s209, 4
          %s217 = int_to_ptr.vmem [resolvable:$true] %s216
          %222 = dma.hbm_to_vmem [thread:$0]  %s215, 2688, %s217, %s206, 128, 128, 8
        $region32: #{tpu_custom_call.1} parent=23 // pred_fallthru
          _
      $region24: #{tpu_custom_call.1} parent=5 // pred_fallthru
        _
      %p223 = scmp.le.s32.totalorder 1, %s20
      %p224 = scmp.lt.s32.totalorder %s20, 3
      %p225 = pnand %p223, %p224
      %p226 = pneg %p225
      // Predicated region
      $region33: #{tpu_custom_call.1} parent=5 // pred_check
        _
      $region34: #{tpu_custom_call.1} parent=5 // pred_check_branch
        %228 = sbr.rel (%p225) target = $region36
      $region35: #{tpu_custom_call.1} parent=5 // pred_region
        %s229 = ssub.s32 %s20, 1
        // Predicated region
        $region37: #{tpu_custom_call.1} parent=35 // pred_check
          %p230 = pneg %p41
        $region38: #{tpu_custom_call.1} parent=35 // pred_check_branch
          %232 = sbr.rel (%p230) target = $region40
        $region39: #{tpu_custom_call.1} parent=35 // pred_region
          %233 = dma.done [#allocation5], 32
        $region40: #{tpu_custom_call.1} parent=35 // pred_fallthru
          _
        %s234 = sand.u32 %s54, 1
        %s235 = scalar_lea.sflag [#allocation3], %s234
        %s236 = sand.u32 %s54, 1
        %s237 = smul.addr %s236, 32
        %s238 = scalar_lea.vmem [#allocation6], %s237
        // Predicated region
        $region41: #{tpu_custom_call.1} parent=35 // pred_check
          %p239 = pneg %p67
        $region42: #{tpu_custom_call.1} parent=35 // pred_check_branch
          %241 = sbr.rel (%p239) target = $region44
        $region43: #{tpu_custom_call.1} parent=35 // pred_region
          %242 = dma.done %s235, 512
        $region44: #{tpu_custom_call.1} parent=35 // pred_fallthru
          _
        %s243 = sand.u32 %s25, 1
        %s244 = scalar_lea.sflag [#allocation8], %s243
        %s245 = sand.u32 %s80, 1
        %s246 = smul.addr %s245, 168
        %s247 = scalar_lea.vmem [#allocation7], %s246
        // Predicated region
        $region45: #{tpu_custom_call.1} parent=35 // pred_check
          %p248 = pneg %p93
        $region46: #{tpu_custom_call.1} parent=35 // pred_check_branch
          %250 = sbr.rel (%p248) target = $region48
        $region47: #{tpu_custom_call.1} parent=35 // pred_region
          %251 = dma.done %s244, 2688
        $region48: #{tpu_custom_call.1} parent=35 // pred_fallthru
          _
        // Predicated region
        $region49: #{tpu_custom_call.1} parent=35 // pred_check
          %p252 = pneg %p114
        $region50: #{tpu_custom_call.1} parent=35 // pred_check_branch
          %254 = sbr.rel (%p252) target = $region52
        $region51: #{tpu_custom_call.1} parent=35 // pred_region
          %255 = dma.done [#allocation8], 1152
        $region52: #{tpu_custom_call.1} parent=35 // pred_fallthru
          _
        %256 = sfence
        %p257 = pneg %p41
        %p258 = pneg %p38
        %s259 = sand.u32 %s54, 1
        %s260 = scalar_lea.sflag [#allocation3], %s259
        %s261 = sand.u32 %s54, 1
        %s262 = smul.addr %s261, 32
        %s263 = scalar_lea.vmem [#allocation6], %s262
        %p264 = pneg %p67
        %p265 = pneg %p64
        %s266 = sand.u32 %s25, 1
        %s267 = scalar_lea.sflag [#allocation8], %s266
        %s268 = sand.u32 %s80, 1
        %s269 = smul.addr %s268, 168
        %s270 = scalar_lea.vmem [#allocation7], %s269
        %p271 = pneg %p93
        %p272 = pneg %p90
        %p273 = pneg %p114
        %p274 = pneg %p111
        %p275 = pneg %p140
        %p276 = pneg %p137
        %s277 = sand.u32 %s127, 1
        %s278 = scalar_lea.sflag [#allocation4], %s277
        %s279 = sand.u32 %s127, 1
        %s280 = smul.addr %s279, 8
        %s281 = scalar_lea.vmem [#allocation10], %s280
        %v282 = vld [vmem:[#allocation9] sm:$0xff]
        %s283 = scalar_lea.vmem [#allocation9], 8
        %v284 = vld [vmem:[%s283] sm:$0xff]
        %s285 = scalar_lea.vmem [#allocation9], 16
        %v286 = vld [vmem:[%s285] sm:$0xff]
        %s287 = scalar_lea.vmem [#allocation9], 24
        %v288 = vld [vmem:[%s287] sm:$0xff]
        %s289 = scalar_lea.vmem [#allocation9], 32
        %v290 = vld [vmem:[%s289] sm:$0xff]
        %s291 = scalar_lea.vmem [#allocation9], 40
        %v292 = vld [vmem:[%s291] sm:$0xff]
        %s293 = scalar_lea.vmem [#allocation9], 48
        %v294 = vld [vmem:[%s293] sm:$0xff]
        %s295 = scalar_lea.vmem [#allocation9], 56
        %v296 = vld [vmem:[%s295] sm:$0xff]
        %s297 = scalar_lea.vmem [#allocation9], 64
        %v298 = vld [vmem:[%s297] sm:$0xff]
        %v299 = vlaneseq
        %v300 = vshrl.u32 %v299, 7
        %v301 = vlaneseq
        %v302 = vand.u32 %v301, 127
        %v303 = vmul.u32 %v300, 128
        %v304 = vadd.s32 %v303, %v302
        %vm305 = vcmp.lt.s32.totalorder %v304, 256
        %s306 = smul.u32 %s25, 128
        %s307 = sld [smem:[#allocation2 + %s306]]
        %s308 = sadd.s32 %s306, 1
        %s309 = sld [smem:[#allocation2 + %s308]]
        %s310 = sadd.s32 %s306, 2
        %s311 = sld [smem:[#allocation2 + %s310]]
        %s312 = sadd.s32 %s306, 3
        %s313 = sld [smem:[#allocation2 + %s312]]
        %s314 = sadd.s32 %s306, 4
        %s315 = sld [smem:[#allocation2 + %s314]]
        %v316 = vstv %s311
        %v317 = vmin.f32 %v316, %v286
        %v318 = vstv %s307
        %v319 = vmax.f32 %v318, %v282
        %v320 = vsub.f32 %v317, %v319
        %v321 = vmax.f32 %v320, 0.0
        %v322 = vstv %s313
        %v323 = vmin.f32 %v322, %v288
        %v324 = vstv %s309
        %v325 = vmax.f32 %v324, %v284
        %v326 = vsub.f32 %v323, %v325
        %v327 = vmax.f32 %v326, 0.0
        %v328 = vmul.f32 %v321, %v327
        %s329 = ssub.f32 %s311, %s307
        %s330 = ssub.f32 %s313, %s309
        %s331 = smul.f32 %s329, %s330
        %v332 = vstv %s331
        %v333 = vadd.f32 %v332, %v290
        %v334 = vsub.f32 %v333, %v328
        %v335 = vrcp.pop %v334
        %v336 = vmul.f32 %v328, %v335
        %v337 = vsel %vm305, %v336, -1.0
        %vm338 = vcmp.gt.f32.partialorder %v337, -1.0
        %v339 = vsel %vm338, %v337, -1.0
        %340 = vmax.xlane.f32.xlu0 %v337
        %v341 = vpop.xlane.xlu0 %340
        %v342 = vrot.slane %v341, 4
        %v343 = vmax.f32 %v341, %v342
        %v344 = vrot.slane %v343, 2
        %v345 = vmax.f32 %v343, %v344
        %v346 = vrot.slane %v345, 1
        %v347 = vmax.f32 %v345, %v346
        %s348 = vtos %v347
        %v349 = vstv %s348
        %vm350 = vcmp.eq.f32.partialorder %v337, %v349
        %v351 = vsel %vm350, %v304, 1024
        %v352 = vand.u32 %v351, 65535
        %v353 = vshra.s32 %v351, 16
        %v354 = vcvt.s32.f32 %v352
        %v355 = vcvt.s32.f32 %v353
        %356 = vmin.xlane.f32.xlu0 %v355
        %v357 = vpop.xlane.xlu0 %356
        %vm358 = vcmp.eq.f32.partialorder %v355, %v357
        %v359 = vsel %vm358, %v354, inf
        %360 = vmin.xlane.f32.xlu0 %v359
        %v361 = vpop.xlane.xlu0 %360
        %v362 = vcvt.f32.s32 %v361
        %v363 = vcvt.f32.s32 %v357
        %v364 = vshll.u32 %v363, 16
        %v365 = vadd.s32 %v364, %v362
        %v366 = vrot.slane %v365, 4
        %vm367 = vcmp.lt.s32.totalorder %v365, %v366
        %v368 = vsel %vm367, %v365, %v366
        %v369 = vrot.slane %v368, 2
        %vm370 = vcmp.lt.s32.totalorder %v368, %v369
        %v371 = vsel %vm370, %v368, %v369
        %v372 = vrot.slane %v371, 1
        %vm373 = vcmp.lt.s32.totalorder %v371, %v372
        %v374 = vsel %vm373, %v371, %v372
        %s375 = vtos %v374
        %s376 = sadd.s32 %s306, 5
        %s377 = sld [smem:[#allocation2 + %s376]]
        %s378 = sadd.s32 %s306, 6
        %s379 = sld [smem:[#allocation2 + %s378]]
        %s380 = sadd.s32 %s306, 7
        %s381 = sld [smem:[#allocation2 + %s380]]
        %s382 = sadd.s32 %s306, 8
        %s383 = sld [smem:[#allocation2 + %s382]]
        %s384 = sadd.s32 %s306, 9
        %s385 = sld [smem:[#allocation2 + %s384]]
        %v386 = vstv %s381
        %v387 = vmin.f32 %v386, %v286
        %v388 = vstv %s377
        %v389 = vmax.f32 %v388, %v282
        %v390 = vsub.f32 %v387, %v389
        %v391 = vmax.f32 %v390, 0.0
        %v392 = vstv %s383
        %v393 = vmin.f32 %v392, %v288
        %v394 = vstv %s379
        %v395 = vmax.f32 %v394, %v284
        %v396 = vsub.f32 %v393, %v395
        %v397 = vmax.f32 %v396, 0.0
        %v398 = vmul.f32 %v391, %v397
        %s399 = ssub.f32 %s381, %s377
        %s400 = ssub.f32 %s383, %s379
        %s401 = smul.f32 %s399, %s400
        %v402 = vstv %s401
        %v403 = vadd.f32 %v402, %v290
        %v404 = vsub.f32 %v403, %v398
        %v405 = vrcp.pop %v404
        %v406 = vmul.f32 %v398, %v405
        %v407 = vsel %vm305, %v406, -1.0
        %vm408 = vcmp.gt.f32.partialorder %v407, %v339
        %v409 = vsel %vm408, %v407, %v339
        %v410 = vsel %vm408, 1, 0
        %411 = vmax.xlane.f32.xlu0 %v407
        %v412 = vpop.xlane.xlu0 %411
        %v413 = vrot.slane %v412, 4
        %v414 = vmax.f32 %v412, %v413
        %v415 = vrot.slane %v414, 2
        %v416 = vmax.f32 %v414, %v415
        %v417 = vrot.slane %v416, 1
        %v418 = vmax.f32 %v416, %v417
        %s419 = vtos %v418
        %v420 = vstv %s419
        %vm421 = vcmp.eq.f32.partialorder %v407, %v420
        %v422 = vsel %vm421, %v304, 1024
        %v423 = vand.u32 %v422, 65535
        %v424 = vshra.s32 %v422, 16
        %v425 = vcvt.s32.f32 %v423
        %v426 = vcvt.s32.f32 %v424
        %427 = vmin.xlane.f32.xlu0 %v426
        %v428 = vpop.xlane.xlu0 %427
        %vm429 = vcmp.eq.f32.partialorder %v426, %v428
        %v430 = vsel %vm429, %v425, inf
        %431 = vmin.xlane.f32.xlu0 %v430
        %v432 = vpop.xlane.xlu0 %431
        %v433 = vcvt.f32.s32 %v432
        %v434 = vcvt.f32.s32 %v428
        %v435 = vshll.u32 %v434, 16
        %v436 = vadd.s32 %v435, %v433
        %v437 = vrot.slane %v436, 4
        %vm438 = vcmp.lt.s32.totalorder %v436, %v437
        %v439 = vsel %vm438, %v436, %v437
        %v440 = vrot.slane %v439, 2
        %vm441 = vcmp.lt.s32.totalorder %v439, %v440
        %v442 = vsel %vm441, %v439, %v440
        %v443 = vrot.slane %v442, 1
        %vm444 = vcmp.lt.s32.totalorder %v442, %v443
        %v445 = vsel %vm444, %v442, %v443
        %s446 = vtos %v445
        %s447 = sadd.s32 %s306, 10
        %s448 = sld [smem:[#allocation2 + %s447]]
        %s449 = sadd.s32 %s306, 11
        %s450 = sld [smem:[#allocation2 + %s449]]
        %s451 = sadd.s32 %s306, 12
        %s452 = sld [smem:[#allocation2 + %s451]]
        %s453 = sadd.s32 %s306, 13
        %s454 = sld [smem:[#allocation2 + %s453]]
        %s455 = sadd.s32 %s306, 14
        %s456 = sld [smem:[#allocation2 + %s455]]
        %v457 = vstv %s452
        %v458 = vmin.f32 %v457, %v286
        %v459 = vstv %s448
        %v460 = vmax.f32 %v459, %v282
        %v461 = vsub.f32 %v458, %v460
        %v462 = vmax.f32 %v461, 0.0
        %v463 = vstv %s454
        %v464 = vmin.f32 %v463, %v288
        %v465 = vstv %s450
        %v466 = vmax.f32 %v465, %v284
        %v467 = vsub.f32 %v464, %v466
        %v468 = vmax.f32 %v467, 0.0
        %v469 = vmul.f32 %v462, %v468
        %s470 = ssub.f32 %s452, %s448
        %s471 = ssub.f32 %s454, %s450
        %s472 = smul.f32 %s470, %s471
        %v473 = vstv %s472
        %v474 = vadd.f32 %v473, %v290
        %v475 = vsub.f32 %v474, %v469
        %v476 = vrcp.pop %v475
        %v477 = vmul.f32 %v469, %v476
        %v478 = vsel %vm305, %v477, -1.0
        %vm479 = vcmp.gt.f32.partialorder %v478, %v409
        %v480 = vsel %vm479, %v478, %v409
        %v481 = vsel %vm479, 2, %v410
        %482 = vmax.xlane.f32.xlu0 %v478
        %v483 = vpop.xlane.xlu0 %482
        %v484 = vrot.slane %v483, 4
        %v485 = vmax.f32 %v483, %v484
        %v486 = vrot.slane %v485, 2
        %v487 = vmax.f32 %v485, %v486
        %v488 = vrot.slane %v487, 1
        %v489 = vmax.f32 %v487, %v488
        %s490 = vtos %v489
        %v491 = vstv %s490
        %vm492 = vcmp.eq.f32.partialorder %v478, %v491
        %v493 = vsel %vm492, %v304, 1024
        %v494 = vand.u32 %v493, 65535
        %v495 = vshra.s32 %v493, 16
        %v496 = vcvt.s32.f32 %v494
        %v497 = vcvt.s32.f32 %v495
        %498 = vmin.xlane.f32.xlu0 %v497
        %v499 = vpop.xlane.xlu0 %498
        %vm500 = vcmp.eq.f32.partialorder %v497, %v499
        %v501 = vsel %vm500, %v496, inf
        %502 = vmin.xlane.f32.xlu0 %v501
        %v503 = vpop.xlane.xlu0 %502
        %v504 = vcvt.f32.s32 %v503
        %v505 = vcvt.f32.s32 %v499
        %v506 = vshll.u32 %v505, 16
        %v507 = vadd.s32 %v506, %v504
        %v508 = vrot.slane %v507, 4
        %vm509 = vcmp.lt.s32.totalorder %v507, %v508
        %v510 = vsel %vm509, %v507, %v508
        %v511 = vrot.slane %v510, 2
        %vm512 = vcmp.lt.s32.totalorder %v510, %v511
        %v513 = vsel %vm512, %v510, %v511
        %v514 = vrot.slane %v513, 1
        %vm515 = vcmp.lt.s32.totalorder %v513, %v514
        %v516 = vsel %vm515, %v513, %v514
        %s517 = vtos %v516
        %s518 = sadd.s32 %s306, 15
        %s519 = sld [smem:[#allocation2 + %s518]]
        %s520 = sadd.s32 %s306, 16
        %s521 = sld [smem:[#allocation2 + %s520]]
        %s522 = sadd.s32 %s306, 17
        %s523 = sld [smem:[#allocation2 + %s522]]
        %s524 = sadd.s32 %s306, 18
        %s525 = sld [smem:[#allocation2 + %s524]]
        %s526 = sadd.s32 %s306, 19
        %s527 = sld [smem:[#allocation2 + %s526]]
        %v528 = vstv %s523
        %v529 = vmin.f32 %v528, %v286
        %v530 = vstv %s519
        %v531 = vmax.f32 %v530, %v282
        %v532 = vsub.f32 %v529, %v531
        %v533 = vmax.f32 %v532, 0.0
        %v534 = vstv %s525
        %v535 = vmin.f32 %v534, %v288
        %v536 = vstv %s521
        %v537 = vmax.f32 %v536, %v284
        %v538 = vsub.f32 %v535, %v537
        %v539 = vmax.f32 %v538, 0.0
        %v540 = vmul.f32 %v533, %v539
        %s541 = ssub.f32 %s523, %s519
        %s542 = ssub.f32 %s525, %s521
        %s543 = smul.f32 %s541, %s542
        %v544 = vstv %s543
        %v545 = vadd.f32 %v544, %v290
        %v546 = vsub.f32 %v545, %v540
        %v547 = vrcp.pop %v546
        %v548 = vmul.f32 %v540, %v547
        %v549 = vsel %vm305, %v548, -1.0
        %vm550 = vcmp.gt.f32.partialorder %v549, %v480
        %v551 = vsel %vm550, %v549, %v480
        %v552 = vsel %vm550, 3, %v481
        %553 = vmax.xlane.f32.xlu0 %v549
        %v554 = vpop.xlane.xlu0 %553
        %v555 = vrot.slane %v554, 4
        %v556 = vmax.f32 %v554, %v555
        %v557 = vrot.slane %v556, 2
        %v558 = vmax.f32 %v556, %v557
        %v559 = vrot.slane %v558, 1
        %v560 = vmax.f32 %v558, %v559
        %s561 = vtos %v560
        %v562 = vstv %s561
        %vm563 = vcmp.eq.f32.partialorder %v549, %v562
        %v564 = vsel %vm563, %v304, 1024
        %v565 = vand.u32 %v564, 65535
        %v566 = vshra.s32 %v564, 16
        %v567 = vcvt.s32.f32 %v565
        %v568 = vcvt.s32.f32 %v566
        %569 = vmin.xlane.f32.xlu0 %v568
        %v570 = vpop.xlane.xlu0 %569
        %vm571 = vcmp.eq.f32.partialorder %v568, %v570
        %v572 = vsel %vm571, %v567, inf
        %573 = vmin.xlane.f32.xlu0 %v572
        %v574 = vpop.xlane.xlu0 %573
        %v575 = vcvt.f32.s32 %v574
        %v576 = vcvt.f32.s32 %v570
        %v577 = vshll.u32 %v576, 16
        %v578 = vadd.s32 %v577, %v575
        %v579 = vrot.slane %v578, 4
        %vm580 = vcmp.lt.s32.totalorder %v578, %v579
        %v581 = vsel %vm580, %v578, %v579
        %v582 = vrot.slane %v581, 2
        %vm583 = vcmp.lt.s32.totalorder %v581, %v582
        %v584 = vsel %vm583, %v581, %v582
        %v585 = vrot.slane %v584, 1
        %vm586 = vcmp.lt.s32.totalorder %v584, %v585
        %v587 = vsel %vm586, %v584, %v585
        %s588 = vtos %v587
        %v589 = vstv %s375
        %vm590 = vcmp.eq.s32.totalorder %v304, %v589
        %v591 = vsel %vm590, 0, %v552
        %v592 = vsel %vm590, 2.0, %v551
        %v593 = vstv %s446
        %vm594 = vcmp.eq.s32.totalorder %v304, %v593
        %v595 = vsel %vm594, 1, %v591
        %v596 = vsel %vm594, 2.0, %v592
        %v597 = vstv %s517
        %vm598 = vcmp.eq.s32.totalorder %v304, %v597
        %v599 = vsel %vm598, 2, %v595
        %v600 = vsel %vm598, 2.0, %v596
        %v601 = vstv %s588
        %vm602 = vcmp.eq.s32.totalorder %v304, %v601
        %v603 = vsel %vm602, 3, %v599
        %v604 = vsel %vm602, 2.0, %v600
        %vm605 = vcmp.eq.s32.totalorder %v603, 0
        %v606 = vsel %vm605, %v318, 0.0
        %v607 = vsel %vm605, %v324, 0.0
        %v608 = vsel %vm605, %v316, 0.0
        %v609 = vsel %vm605, %v322, 0.0
        %v610 = vstv %s315
        %v611 = vsel %vm605, %v610, 0.0
        %vm612 = vcmp.eq.s32.totalorder %v603, 1
        %v613 = vsel %vm612, %v388, %v606
        %v614 = vsel %vm612, %v394, %v607
        %v615 = vsel %vm612, %v386, %v608
        %v616 = vsel %vm612, %v392, %v609
        %v617 = vstv %s385
        %v618 = vsel %vm612, %v617, %v611
        %vm619 = vcmp.eq.s32.totalorder %v603, 2
        %v620 = vsel %vm619, %v459, %v613
        %v621 = vsel %vm619, %v465, %v614
        %v622 = vsel %vm619, %v457, %v615
        %v623 = vsel %vm619, %v463, %v616
        %v624 = vstv %s456
        %v625 = vsel %vm619, %v624, %v618
        %vm626 = vcmp.eq.s32.totalorder %v603, 3
        %v627 = vsel %vm626, %v530, %v620
        %v628 = vsel %vm626, %v536, %v621
        %v629 = vsel %vm626, %v528, %v622
        %v630 = vsel %vm626, %v534, %v623
        %v631 = vstv %s527
        %v632 = vsel %vm626, %v631, %v625
        %vm633 = vcmp.lt.f32.partialorder %v604, 0.5
        %v634 = vcvt.f32.s32.to.zero.pseudo %v632
        %v635 = vadd.s32 %v634, 1
        %v636 = vsel %vm633, 0, %v635
        %vm637 = vcmp.gt.s32.totalorder %v636, 0
        %v638 = vadd.f32 %v627, %v629
        %v639 = vmul.f32 %v638, 0.5
        %v640 = vsub.f32 %v639, %v292
        %v641 = vmul.f32 %v640, %v296
        %v642 = vmul.f32 %v641, 10.0
        %v643 = vadd.f32 %v628, %v630
        %v644 = vmul.f32 %v643, 0.5
        %v645 = vsub.f32 %v644, %v294
        %v646 = vmul.f32 %v645, %v298
        %v647 = vmul.f32 %v646, 10.0
        %v648 = vsub.f32 %v629, %v627
        %v649 = vmul.f32 %v648, %v296
        %v650 = vlog2.pop %v649
        %v651 = vmul.f32 %v650, 0.6931472
        %v652 = vmul.f32 %v651, 5.0
        %v653 = vsub.f32 %v630, %v628
        %v654 = vmul.f32 %v653, %v298
        %v655 = vlog2.pop %v654
        %v656 = vmul.f32 %v655, 0.6931472
        %v657 = vmul.f32 %v656, 5.0
        %v658 = vld [vmem:[%s238] sm:$0xff]
        %v659 = vsub.f32 %v658, %v642
        %v660 = vand.u32 2147483647, %v659
        %vm661 = vcmp.lt.f32.partialorder %v660, 1.0
        %v662 = vmul.f32 %v659, 0.5
        %v663 = vmul.f32 %v662, %v659
        %v664 = vsub.f32 %v660, 0.5
        %v665 = vsel %vm661, %v663, %v664
        %s666 = scalar_lea.vmem %s238, 8 [#allocation6]
        %v667 = vld [vmem:[%s666] sm:$0xff]
        %v668 = vsub.f32 %v667, %v647
        %v669 = vand.u32 2147483647, %v668
        %vm670 = vcmp.lt.f32.partialorder %v669, 1.0
        %v671 = vmul.f32 %v668, 0.5
        %v672 = vmul.f32 %v671, %v668
        %v673 = vsub.f32 %v669, 0.5
        %v674 = vsel %vm670, %v672, %v673
        %v675 = vadd.f32 %v665, %v674
        %s676 = scalar_lea.vmem %s238, 16 [#allocation6]
        %v677 = vld [vmem:[%s676] sm:$0xff]
        %v678 = vsub.f32 %v677, %v652
        %v679 = vand.u32 2147483647, %v678
        %vm680 = vcmp.lt.f32.partialorder %v679, 1.0
        %v681 = vmul.f32 %v678, 0.5
        %v682 = vmul.f32 %v681, %v678
        %v683 = vsub.f32 %v679, 0.5
        %v684 = vsel %vm680, %v682, %v683
        %v685 = vadd.f32 %v675, %v684
        %s686 = scalar_lea.vmem %s238, 24 [#allocation6]
        %v687 = vld [vmem:[%s686] sm:$0xff]
        %v688 = vsub.f32 %v687, %v657
        %v689 = vand.u32 2147483647, %v688
        %vm690 = vcmp.lt.f32.partialorder %v689, 1.0
        %v691 = vmul.f32 %v688, 0.5
        %v692 = vmul.f32 %v691, %v688
        %v693 = vsub.f32 %v689, 0.5
        %v694 = vsel %vm690, %v692, %v693
        %v695 = vadd.f32 %v685, %v694
        %v696 = vsel %vm637, %v695, 0.0
        %697 = vadd.xlane.f32.xlu0 %v696
        %v698 = vpop.xlane.xlu0 %697
        %v699 = vrot.slane %v698, 4
        %v700 = vadd.f32 %v698, %v699
        %v701 = vrot.slane %v700, 2
        %v702 = vadd.f32 %v700, %v701
        %v703 = vrot.slane %v702, 1
        %v704 = vadd.f32 %v702, %v703
        %s705 = vtos %v704
        %v706 = vld [vmem:[%s247] sm:$0xff]
        %s707 = scalar_lea.vmem %s247, 8 [#allocation7]
        %v708 = vld [vmem:[%s707] sm:$0xff]
        %v709 = vmax.f32 %v706, %v708
        %s710 = scalar_lea.vmem %s247, 16 [#allocation7]
        %v711 = vld [vmem:[%s710] sm:$0xff]
        %v712 = vmax.f32 %v709, %v711
        %s713 = scalar_lea.vmem %s247, 24 [#allocation7]
        %v714 = vld [vmem:[%s713] sm:$0xff]
        %v715 = vmax.f32 %v712, %v714
        %s716 = scalar_lea.vmem %s247, 32 [#allocation7]
        %v717 = vld [vmem:[%s716] sm:$0xff]
        %v718 = vmax.f32 %v715, %v717
        %s719 = scalar_lea.vmem %s247, 40 [#allocation7]
        %v720 = vld [vmem:[%s719] sm:$0xff]
        %v721 = vmax.f32 %v718, %v720
        %s722 = scalar_lea.vmem %s247, 48 [#allocation7]
        %v723 = vld [vmem:[%s722] sm:$0xff]
        %v724 = vmax.f32 %v721, %v723
        %s725 = scalar_lea.vmem %s247, 56 [#allocation7]
        %v726 = vld [vmem:[%s725] sm:$0xff]
        %v727 = vmax.f32 %v724, %v726
        %s728 = scalar_lea.vmem %s247, 64 [#allocation7]
        %v729 = vld [vmem:[%s728] sm:$0xff]
        %v730 = vmax.f32 %v727, %v729
        %s731 = scalar_lea.vmem %s247, 72 [#allocation7]
        %v732 = vld [vmem:[%s731] sm:$0xff]
        %v733 = vmax.f32 %v730, %v732
        %s734 = scalar_lea.vmem %s247, 80 [#allocation7]
        %v735 = vld [vmem:[%s734] sm:$0xff]
        %v736 = vmax.f32 %v733, %v735
        %s737 = scalar_lea.vmem %s247, 88 [#allocation7]
        %v738 = vld [vmem:[%s737] sm:$0xff]
        %v739 = vmax.f32 %v736, %v738
        %s740 = scalar_lea.vmem %s247, 96 [#allocation7]
        %v741 = vld [vmem:[%s740] sm:$0xff]
        %v742 = vmax.f32 %v739, %v741
        %s743 = scalar_lea.vmem %s247, 104 [#allocation7]
        %v744 = vld [vmem:[%s743] sm:$0xff]
        %v745 = vmax.f32 %v742, %v744
        %s746 = scalar_lea.vmem %s247, 112 [#allocation7]
        %v747 = vld [vmem:[%s746] sm:$0xff]
        %v748 = vmax.f32 %v745, %v747
        %s749 = scalar_lea.vmem %s247, 120 [#allocation7]
        %v750 = vld [vmem:[%s749] sm:$0xff]
        %v751 = vmax.f32 %v748, %v750
        %s752 = scalar_lea.vmem %s247, 128 [#allocation7]
        %v753 = vld [vmem:[%s752] sm:$0xff]
        %v754 = vmax.f32 %v751, %v753
        %s755 = scalar_lea.vmem %s247, 136 [#allocation7]
        %v756 = vld [vmem:[%s755] sm:$0xff]
        %v757 = vmax.f32 %v754, %v756
        %s758 = scalar_lea.vmem %s247, 144 [#allocation7]
        %v759 = vld [vmem:[%s758] sm:$0xff]
        %v760 = vmax.f32 %v757, %v759
        %s761 = scalar_lea.vmem %s247, 152 [#allocation7]
        %v762 = vld [vmem:[%s761] sm:$0xff]
        %v763 = vmax.f32 %v760, %v762
        %s764 = scalar_lea.vmem %s247, 160 [#allocation7]
        %v765 = vld [vmem:[%s764] sm:$0xff]
        %v766 = vmax.f32 %v763, %v765
        %v767 = vsub.f32 %v706, %v766
        %v768 = vmul.f32 %v767, 1.442695
        %v769 = vpow.pop %v768
        %v770 = vadd.f32 %v769, 0.0
        %vm771 = vcmp.eq.s32.totalorder %v636, 0
        %v772 = vsel %vm771, %v706, 0.0
        %v773 = vsub.f32 %v708, %v766
        %v774 = vmul.f32 %v773, 1.442695
        %v775 = vpow.pop %v774
        %v776 = vadd.f32 %v770, %v775
        %vm777 = vcmp.eq.s32.totalorder %v636, 1
        %v778 = vsel %vm777, %v708, %v772
        %v779 = vsub.f32 %v711, %v766
        %v780 = vmul.f32 %v779, 1.442695
        %v781 = vpow.pop %v780
        %v782 = vadd.f32 %v776, %v781
        %vm783 = vcmp.eq.s32.totalorder %v636, 2
        %v784 = vsel %vm783, %v711, %v778
        %v785 = vsub.f32 %v714, %v766
        %v786 = vmul.f32 %v785, 1.442695
        %v787 = vpow.pop %v786
        %v788 = vadd.f32 %v782, %v787
        %vm789 = vcmp.eq.s32.totalorder %v636, 3
        %v790 = vsel %vm789, %v714, %v784
        %v791 = vsub.f32 %v717, %v766
        %v792 = vmul.f32 %v791, 1.442695
        %v793 = vpow.pop %v792
        %v794 = vadd.f32 %v788, %v793
        %vm795 = vcmp.eq.s32.totalorder %v636, 4
        %v796 = vsel %vm795, %v717, %v790
        %v797 = vsub.f32 %v720, %v766
        %v798 = vmul.f32 %v797, 1.442695
        %v799 = vpow.pop %v798
        %v800 = vadd.f32 %v794, %v799
        %vm801 = vcmp.eq.s32.totalorder %v636, 5
        %v802 = vsel %vm801, %v720, %v796
        %v803 = vsub.f32 %v723, %v766
        %v804 = vmul.f32 %v803, 1.442695
        %v805 = vpow.pop %v804
        %v806 = vadd.f32 %v800, %v805
        %vm807 = vcmp.eq.s32.totalorder %v636, 6
        %v808 = vsel %vm807, %v723, %v802
        %v809 = vsub.f32 %v726, %v766
        %v810 = vmul.f32 %v809, 1.442695
        %v811 = vpow.pop %v810
        %v812 = vadd.f32 %v806, %v811
        %vm813 = vcmp.eq.s32.totalorder %v636, 7
        %v814 = vsel %vm813, %v726, %v808
        %v815 = vsub.f32 %v729, %v766
        %v816 = vmul.f32 %v815, 1.442695
        %v817 = vpow.pop %v816
        %v818 = vadd.f32 %v812, %v817
        %vm819 = vcmp.eq.s32.totalorder %v636, 8
        %v820 = vsel %vm819, %v729, %v814
        %v821 = vsub.f32 %v732, %v766
        %v822 = vmul.f32 %v821, 1.442695
        %v823 = vpow.pop %v822
        %v824 = vadd.f32 %v818, %v823
        %vm825 = vcmp.eq.s32.totalorder %v636, 9
        %v826 = vsel %vm825, %v732, %v820
        %v827 = vsub.f32 %v735, %v766
        %v828 = vmul.f32 %v827, 1.442695
        %v829 = vpow.pop %v828
        %v830 = vadd.f32 %v824, %v829
        %vm831 = vcmp.eq.s32.totalorder %v636, 10
        %v832 = vsel %vm831, %v735, %v826
        %v833 = vsub.f32 %v738, %v766
        %v834 = vmul.f32 %v833, 1.442695
        %v835 = vpow.pop %v834
        %v836 = vadd.f32 %v830, %v835
        %vm837 = vcmp.eq.s32.totalorder %v636, 11
        %v838 = vsel %vm837, %v738, %v832
        %v839 = vsub.f32 %v741, %v766
        %v840 = vmul.f32 %v839, 1.442695
        %v841 = vpow.pop %v840
        %v842 = vadd.f32 %v836, %v841
        %vm843 = vcmp.eq.s32.totalorder %v636, 12
        %v844 = vsel %vm843, %v741, %v838
        %v845 = vsub.f32 %v744, %v766
        %v846 = vmul.f32 %v845, 1.442695
        %v847 = vpow.pop %v846
        %v848 = vadd.f32 %v842, %v847
        %vm849 = vcmp.eq.s32.totalorder %v636, 13
        %v850 = vsel %vm849, %v744, %v844
        %v851 = vsub.f32 %v747, %v766
        %v852 = vmul.f32 %v851, 1.442695
        %v853 = vpow.pop %v852
        %v854 = vadd.f32 %v848, %v853
        %vm855 = vcmp.eq.s32.totalorder %v636, 14
        %v856 = vsel %vm855, %v747, %v850
        %v857 = vsub.f32 %v750, %v766
        %v858 = vmul.f32 %v857, 1.442695
        %v859 = vpow.pop %v858
        %v860 = vadd.f32 %v854, %v859
        %vm861 = vcmp.eq.s32.totalorder %v636, 15
        %v862 = vsel %vm861, %v750, %v856
        %v863 = vsub.f32 %v753, %v766
        %v864 = vmul.f32 %v863, 1.442695
        %v865 = vpow.pop %v864
        %v866 = vadd.f32 %v860, %v865
        %vm867 = vcmp.eq.s32.totalorder %v636, 16
        %v868 = vsel %vm867, %v753, %v862
        %v869 = vsub.f32 %v756, %v766
        %v870 = vmul.f32 %v869, 1.442695
        %v871 = vpow.pop %v870
        %v872 = vadd.f32 %v866, %v871
        %vm873 = vcmp.eq.s32.totalorder %v636, 17
        %v874 = vsel %vm873, %v756, %v868
        %v875 = vsub.f32 %v759, %v766
        %v876 = vmul.f32 %v875, 1.442695
        %v877 = vpow.pop %v876
        %v878 = vadd.f32 %v872, %v877
        %vm879 = vcmp.eq.s32.totalorder %v636, 18
        %v880 = vsel %vm879, %v759, %v874
        %v881 = vsub.f32 %v762, %v766
        %v882 = vmul.f32 %v881, 1.442695
        %v883 = vpow.pop %v882
        %v884 = vadd.f32 %v878, %v883
        %vm885 = vcmp.eq.s32.totalorder %v636, 19
        %v886 = vsel %vm885, %v762, %v880
        %v887 = vsub.f32 %v765, %v766
        %v888 = vmul.f32 %v887, 1.442695
        %v889 = vpow.pop %v888
        %v890 = vadd.f32 %v884, %v889
        %vm891 = vcmp.eq.s32.totalorder %v636, 20
        %v892 = vsel %vm891, %v765, %v886
        %v893 = vlog2.pop %v890
        %v894 = vmul.f32 %v893, 0.6931472
        %v895 = vadd.f32 %v766, %v894
        %v896 = vsub.f32 %v895, %v892
        %v897 = vsel %vm637, 1, 0
        %v898 = vand.u32 %v897, 65535
        %v899 = vshrl.u32 %v897, 16
        %v900 = vcvt.s32.f32 %v898
        %v901 = vcvt.s32.f32 %v899
        %902 = vadd.xlane.f32.xlu0 %v900
        %v903 = vpop.xlane.xlu0 %902
        %904 = vadd.xlane.f32.xlu0 %v901
        %v905 = vpop.xlane.xlu0 %904
        %v906 = vcvt.f32.s32 %v903
        %v907 = vcvt.f32.s32 %v905
        %v908 = vshll.u32 %v907, 16
        %v909 = vadd.s32 %v908, %v906
        %v910 = vrot.slane %v909, 4
        %v911 = vadd.s32 %v909, %v910
        %v912 = vrot.slane %v911, 2
        %v913 = vadd.s32 %v911, %v912
        %v914 = vrot.slane %v913, 1
        %v915 = vadd.s32 %v913, %v914
        %s916 = vtos %v915
        %s917 = smul.u32 %s916, 3
        %p918 = scmp.lt.s32.totalorder %s917, 256
        %s919 = scalar_select %p918, %s917, 256
        %vm920 = vmxor %vm637, 1
        %vm921 = vmand %vm305, %vm920
        %v922 = vsel %vm921, %v896, 0.0
        %v923 = vmax.f32 %v922, 0.0
        %vm925 = vcmp.ge.s32.totalorder %v923, 536870912
        %v926 = vsel %vm925, 1, 0
        %vm927 = vcmp.ge.s32.totalorder %v923, 1073741824
        %v928 = vsel %vm927, 1, 0
        %vm929 = vcmp.ge.s32.totalorder %v923, 1610612736
        %v930 = vsel %vm929, 1, 0
        %v931 = vshll.u32 %v930, 16
        %v932 = vadd.s32 %v926, %v931
        %v933 = vand.u32 %v932, 65535
        %v934 = vshrl.u32 %v932, 16
        %v935 = vcvt.s32.f32 %v933
        %v936 = vcvt.s32.f32 %v934
        %937 = vadd.xlane.f32.xlu0 %v935
        %v938 = vpop.xlane.xlu0 %937
        %939 = vadd.xlane.f32.xlu0 %v936
        %v940 = vpop.xlane.xlu0 %939
        %v941 = vcvt.f32.s32 %v938
        %v942 = vcvt.f32.s32 %v940
        %v943 = vshll.u32 %v942, 16
        %v944 = vadd.s32 %v943, %v941
        %v945 = vrot.slane %v944, 4
        %v946 = vadd.s32 %v944, %v945
        %v947 = vrot.slane %v946, 2
        %v948 = vadd.s32 %v946, %v947
        %v949 = vrot.slane %v948, 1
        %v950 = vadd.s32 %v948, %v949
        %s951 = vtos %v950
        %v952 = vand.u32 %v928, 65535
        %v953 = vshrl.u32 %v928, 16
        %v954 = vcvt.s32.f32 %v952
        %v955 = vcvt.s32.f32 %v953
        %956 = vadd.xlane.f32.xlu0 %v954
        %v957 = vpop.xlane.xlu0 %956
        %958 = vadd.xlane.f32.xlu0 %v955
        %v959 = vpop.xlane.xlu0 %958
        %v960 = vcvt.f32.s32 %v957
        %v961 = vcvt.f32.s32 %v959
        %v962 = vshll.u32 %v961, 16
        %v963 = vadd.s32 %v962, %v960
        %v964 = vrot.slane %v963, 4
        %v965 = vadd.s32 %v963, %v964
        %v966 = vrot.slane %v965, 2
        %v967 = vadd.s32 %v965, %v966
        %v968 = vrot.slane %v967, 1
        %v969 = vadd.s32 %v967, %v968
        %s970 = vtos %v969
        %s971 = sand.u32 %s951, 65535
        %s972 = sshra.s32 %s951, 16
        %p973 = scmp.ge.s32.totalorder %s971, %s919
        %s974 = scalar_select %p973, 1, 0
        %p975 = scmp.ge.s32.totalorder %s970, %s919
        %s976 = scalar_select %p975, 1, 0
        %s977 = sadd.s32 %s974, %s976
        %p978 = scmp.ge.s32.totalorder %s972, %s919
        %s979 = scalar_select %p978, 1, 0
        %s980 = sadd.s32 %s977, %s979
        %s981 = smul.u32 %s980, 536870912
        %s982 = sadd.s32 %s981, 134217728
        %v983 = vstv %s982
        %vm984 = vcmp.ge.s32.totalorder %v923, %v983
        %v985 = vsel %vm984, 1, 0
        %s986 = sadd.s32 %s981, 268435456
        %v987 = vstv %s986
        %vm988 = vcmp.ge.s32.totalorder %v923, %v987
        %v989 = vsel %vm988, 1, 0
        %s990 = sadd.s32 %s981, 402653184
        %v991 = vstv %s990
        %vm992 = vcmp.ge.s32.totalorder %v923, %v991
        %v993 = vsel %vm992, 1, 0
        %v994 = vshll.u32 %v993, 16
        %v995 = vadd.s32 %v985, %v994
        %v996 = vand.u32 %v995, 65535
        %v997 = vshrl.u32 %v995, 16
        %v998 = vcvt.s32.f32 %v996
        %v999 = vcvt.s32.f32 %v997
        %1000 = vadd.xlane.f32.xlu0 %v998
        %v1001 = vpop.xlane.xlu0 %1000
        %1002 = vadd.xlane.f32.xlu0 %v999
        %v1003 = vpop.xlane.xlu0 %1002
        %v1004 = vcvt.f32.s32 %v1001
        %v1005 = vcvt.f32.s32 %v1003
        %v1006 = vshll.u32 %v1005, 16
        %v1007 = vadd.s32 %v1006, %v1004
        %v1008 = vrot.slane %v1007, 4
        %v1009 = vadd.s32 %v1007, %v1008
        %v1010 = vrot.slane %v1009, 2
        %v1011 = vadd.s32 %v1009, %v1010
        %v1012 = vrot.slane %v1011, 1
        %v1013 = vadd.s32 %v1011, %v1012
        %s1014 = vtos %v1013
        %v1015 = vand.u32 %v989, 65535
        %v1016 = vshrl.u32 %v989, 16
        %v1017 = vcvt.s32.f32 %v1015
        %v1018 = vcvt.s32.f32 %v1016
        %1019 = vadd.xlane.f32.xlu0 %v1017
        %v1020 = vpop.xlane.xlu0 %1019
        %1021 = vadd.xlane.f32.xlu0 %v1018
        %v1022 = vpop.xlane.xlu0 %1021
        %v1023 = vcvt.f32.s32 %v1020
        %v1024 = vcvt.f32.s32 %v1022
        %v1025 = vshll.u32 %v1024, 16
        %v1026 = vadd.s32 %v1025, %v1023
        %v1027 = vrot.slane %v1026, 4
        %v1028 = vadd.s32 %v1026, %v1027
        %v1029 = vrot.slane %v1028, 2
        %v1030 = vadd.s32 %v1028, %v1029
        %v1031 = vrot.slane %v1030, 1
        %v1032 = vadd.s32 %v1030, %v1031
        %s1033 = vtos %v1032
        %s1034 = sand.u32 %s1014, 65535
        %s1035 = sshra.s32 %s1014, 16
        %p1036 = scmp.ge.s32.totalorder %s1034, %s919
        %s1037 = scalar_select %p1036, 1, 0
        %p1038 = scmp.ge.s32.totalorder %s1033, %s919
        %s1039 = scalar_select %p1038, 1, 0
        %s1040 = sadd.s32 %s1037, %s1039
        %p1041 = scmp.ge.s32.totalorder %s1035, %s919
        %s1042 = scalar_select %p1041, 1, 0
        %s1043 = sadd.s32 %s1040, %s1042
        %s1044 = smul.u32 %s1043, 134217728
        %s1045 = sadd.s32 %s981, %s1044
        %s1046 = sadd.s32 %s1045, 33554432
        %v1047 = vstv %s1046
        %vm1048 = vcmp.ge.s32.totalorder %v923, %v1047
        %v1049 = vsel %vm1048, 1, 0
        %s1050 = sadd.s32 %s1045, 67108864
        %v1051 = vstv %s1050
        %vm1052 = vcmp.ge.s32.totalorder %v923, %v1051
        %v1053 = vsel %vm1052, 1, 0
        %s1054 = sadd.s32 %s1045, 100663296
        %v1055 = vstv %s1054
        %vm1056 = vcmp.ge.s32.totalorder %v923, %v1055
        %v1057 = vsel %vm1056, 1, 0
        %v1058 = vshll.u32 %v1057, 16
        %v1059 = vadd.s32 %v1049, %v1058
        %v1060 = vand.u32 %v1059, 65535
        %v1061 = vshrl.u32 %v1059, 16
        %v1062 = vcvt.s32.f32 %v1060
        %v1063 = vcvt.s32.f32 %v1061
        %1064 = vadd.xlane.f32.xlu0 %v1062
        %v1065 = vpop.xlane.xlu0 %1064
        %1066 = vadd.xlane.f32.xlu0 %v1063
        %v1067 = vpop.xlane.xlu0 %1066
        %v1068 = vcvt.f32.s32 %v1065
        %v1069 = vcvt.f32.s32 %v1067
        %v1070 = vshll.u32 %v1069, 16
        %v1071 = vadd.s32 %v1070, %v1068
        %v1072 = vrot.slane %v1071, 4
        %v1073 = vadd.s32 %v1071, %v1072
        %v1074 = vrot.slane %v1073, 2
        %v1075 = vadd.s32 %v1073, %v1074
        %v1076 = vrot.slane %v1075, 1
        %v1077 = vadd.s32 %v1075, %v1076
        %s1078 = vtos %v1077
        %v1079 = vand.u32 %v1053, 65535
        %v1080 = vshrl.u32 %v1053, 16
        %v1081 = vcvt.s32.f32 %v1079
        %v1082 = vcvt.s32.f32 %v1080
        %1083 = vadd.xlane.f32.xlu0 %v1081
        %v1084 = vpop.xlane.xlu0 %1083
        %1085 = vadd.xlane.f32.xlu0 %v1082
        %v1086 = vpop.xlane.xlu0 %1085
        %v1087 = vcvt.f32.s32 %v1084
        %v1088 = vcvt.f32.s32 %v1086
        %v1089 = vshll.u32 %v1088, 16
        %v1090 = vadd.s32 %v1089, %v1087
        %v1091 = vrot.slane %v1090, 4
        %v1092 = vadd.s32 %v1090, %v1091
        %v1093 = vrot.slane %v1092, 2
        %v1094 = vadd.s32 %v1092, %v1093
        %v1095 = vrot.slane %v1094, 1
        %v1096 = vadd.s32 %v1094, %v1095
        %s1097 = vtos %v1096
        %s1098 = sand.u32 %s1078, 65535
        %s1099 = sshra.s32 %s1078, 16
        %p1100 = scmp.ge.s32.totalorder %s1098, %s919
        %s1101 = scalar_select %p1100, 1, 0
        %p1102 = scmp.ge.s32.totalorder %s1097, %s919
        %s1103 = scalar_select %p1102, 1, 0
        %s1104 = sadd.s32 %s1101, %s1103
        %p1105 = scmp.ge.s32.totalorder %s1099, %s919
        %s1106 = scalar_select %p1105, 1, 0
        %s1107 = sadd.s32 %s1104, %s1106
        %s1108 = smul.u32 %s1107, 33554432
        %s1109 = sadd.s32 %s1045, %s1108
        %s1110 = sadd.s32 %s1109, 8388608
        %v1111 = vstv %s1110
        %vm1112 = vcmp.ge.s32.totalorder %v923, %v1111
        %v1113 = vsel %vm1112, 1, 0
        %s1114 = sadd.s32 %s1109, 16777216
        %v1115 = vstv %s1114
        %vm1116 = vcmp.ge.s32.totalorder %v923, %v1115
        %v1117 = vsel %vm1116, 1, 0
        %s1118 = sadd.s32 %s1109, 25165824
        %v1119 = vstv %s1118
        %vm1120 = vcmp.ge.s32.totalorder %v923, %v1119
        %v1121 = vsel %vm1120, 1, 0
        %v1122 = vshll.u32 %v1121, 16
        %v1123 = vadd.s32 %v1113, %v1122
        %v1124 = vand.u32 %v1123, 65535
        %v1125 = vshrl.u32 %v1123, 16
        %v1126 = vcvt.s32.f32 %v1124
        %v1127 = vcvt.s32.f32 %v1125
        %1128 = vadd.xlane.f32.xlu0 %v1126
        %v1129 = vpop.xlane.xlu0 %1128
        %1130 = vadd.xlane.f32.xlu0 %v1127
        %v1131 = vpop.xlane.xlu0 %1130
        %v1132 = vcvt.f32.s32 %v1129
        %v1133 = vcvt.f32.s32 %v1131
        %v1134 = vshll.u32 %v1133, 16
        %v1135 = vadd.s32 %v1134, %v1132
        %v1136 = vrot.slane %v1135, 4
        %v1137 = vadd.s32 %v1135, %v1136
        %v1138 = vrot.slane %v1137, 2
        %v1139 = vadd.s32 %v1137, %v1138
        %v1140 = vrot.slane %v1139, 1
        %v1141 = vadd.s32 %v1139, %v1140
        %s1142 = vtos %v1141
        %v1143 = vand.u32 %v1117, 65535
        %v1144 = vshrl.u32 %v1117, 16
        %v1145 = vcvt.s32.f32 %v1143
        %v1146 = vcvt.s32.f32 %v1144
        %1147 = vadd.xlane.f32.xlu0 %v1145
        %v1148 = vpop.xlane.xlu0 %1147
        %1149 = vadd.xlane.f32.xlu0 %v1146
        %v1150 = vpop.xlane.xlu0 %1149
        %v1151 = vcvt.f32.s32 %v1148
        %v1152 = vcvt.f32.s32 %v1150
        %v1153 = vshll.u32 %v1152, 16
        %v1154 = vadd.s32 %v1153, %v1151
        %v1155 = vrot.slane %v1154, 4
        %v1156 = vadd.s32 %v1154, %v1155
        %v1157 = vrot.slane %v1156, 2
        %v1158 = vadd.s32 %v1156, %v1157
        %v1159 = vrot.slane %v1158, 1
        %v1160 = vadd.s32 %v1158, %v1159
        %s1161 = vtos %v1160
        %s1162 = sand.u32 %s1142, 65535
        %s1163 = sshra.s32 %s1142, 16
        %p1164 = scmp.ge.s32.totalorder %s1162, %s919
        %s1165 = scalar_select %p1164, 1, 0
        %p1166 = scmp.ge.s32.totalorder %s1161, %s919
        %s1167 = scalar_select %p1166, 1, 0
        %s1168 = sadd.s32 %s1165, %s1167
        %p1169 = scmp.ge.s32.totalorder %s1163, %s919
        %s1170 = scalar_select %p1169, 1, 0
        %s1171 = sadd.s32 %s1168, %s1170
        %s1172 = smul.u32 %s1171, 8388608
        %s1173 = sadd.s32 %s1109, %s1172
        %s1174 = sadd.s32 %s1173, 2097152
        %v1175 = vstv %s1174
        %vm1176 = vcmp.ge.s32.totalorder %v923, %v1175
        %v1177 = vsel %vm1176, 1, 0
        %s1178 = sadd.s32 %s1173, 4194304
        %v1179 = vstv %s1178
        %vm1180 = vcmp.ge.s32.totalorder %v923, %v1179
        %v1181 = vsel %vm1180, 1, 0
        %s1182 = sadd.s32 %s1173, 6291456
        %v1183 = vstv %s1182
        %vm1184 = vcmp.ge.s32.totalorder %v923, %v1183
        %v1185 = vsel %vm1184, 1, 0
        %v1186 = vshll.u32 %v1185, 16
        %v1187 = vadd.s32 %v1177, %v1186
        %v1188 = vand.u32 %v1187, 65535
        %v1189 = vshrl.u32 %v1187, 16
        %v1190 = vcvt.s32.f32 %v1188
        %v1191 = vcvt.s32.f32 %v1189
        %1192 = vadd.xlane.f32.xlu0 %v1190
        %v1193 = vpop.xlane.xlu0 %1192
        %1194 = vadd.xlane.f32.xlu0 %v1191
        %v1195 = vpop.xlane.xlu0 %1194
        %v1196 = vcvt.f32.s32 %v1193
        %v1197 = vcvt.f32.s32 %v1195
        %v1198 = vshll.u32 %v1197, 16
        %v1199 = vadd.s32 %v1198, %v1196
        %v1200 = vrot.slane %v1199, 4
        %v1201 = vadd.s32 %v1199, %v1200
        %v1202 = vrot.slane %v1201, 2
        %v1203 = vadd.s32 %v1201, %v1202
        %v1204 = vrot.slane %v1203, 1
        %v1205 = vadd.s32 %v1203, %v1204
        %s1206 = vtos %v1205
        %v1207 = vand.u32 %v1181, 65535
        %v1208 = vshrl.u32 %v1181, 16
        %v1209 = vcvt.s32.f32 %v1207
        %v1210 = vcvt.s32.f32 %v1208
        %1211 = vadd.xlane.f32.xlu0 %v1209
        %v1212 = vpop.xlane.xlu0 %1211
        %1213 = vadd.xlane.f32.xlu0 %v1210
        %v1214 = vpop.xlane.xlu0 %1213
        %v1215 = vcvt.f32.s32 %v1212
        %v1216 = vcvt.f32.s32 %v1214
        %v1217 = vshll.u32 %v1216, 16
        %v1218 = vadd.s32 %v1217, %v1215
        %v1219 = vrot.slane %v1218, 4
        %v1220 = vadd.s32 %v1218, %v1219
        %v1221 = vrot.slane %v1220, 2
        %v1222 = vadd.s32 %v1220, %v1221
        %v1223 = vrot.slane %v1222, 1
        %v1224 = vadd.s32 %v1222, %v1223
        %s1225 = vtos %v1224
        %s1226 = sand.u32 %s1206, 65535
        %s1227 = sshra.s32 %s1206, 16
        %p1228 = scmp.ge.s32.totalorder %s1226, %s919
        %s1229 = scalar_select %p1228, 1, 0
        %p1230 = scmp.ge.s32.totalorder %s1225, %s919
        %s1231 = scalar_select %p1230, 1, 0
        %s1232 = sadd.s32 %s1229, %s1231
        %p1233 = scmp.ge.s32.totalorder %s1227, %s919
        %s1234 = scalar_select %p1233, 1, 0
        %s1235 = sadd.s32 %s1232, %s1234
        %s1236 = smul.u32 %s1235, 2097152
        %s1237 = sadd.s32 %s1173, %s1236
        %s1238 = sadd.s32 %s1237, 524288
        %v1239 = vstv %s1238
        %vm1240 = vcmp.ge.s32.totalorder %v923, %v1239
        %v1241 = vsel %vm1240, 1, 0
        %s1242 = sadd.s32 %s1237, 1048576
        %v1243 = vstv %s1242
        %vm1244 = vcmp.ge.s32.totalorder %v923, %v1243
        %v1245 = vsel %vm1244, 1, 0
        %s1246 = sadd.s32 %s1237, 1572864
        %v1247 = vstv %s1246
        %vm1248 = vcmp.ge.s32.totalorder %v923, %v1247
        %v1249 = vsel %vm1248, 1, 0
        %v1250 = vshll.u32 %v1249, 16
        %v1251 = vadd.s32 %v1241, %v1250
        %v1252 = vand.u32 %v1251, 65535
        %v1253 = vshrl.u32 %v1251, 16
        %v1254 = vcvt.s32.f32 %v1252
        %v1255 = vcvt.s32.f32 %v1253
        %1256 = vadd.xlane.f32.xlu0 %v1254
        %v1257 = vpop.xlane.xlu0 %1256
        %1258 = vadd.xlane.f32.xlu0 %v1255
        %v1259 = vpop.xlane.xlu0 %1258
        %v1260 = vcvt.f32.s32 %v1257
        %v1261 = vcvt.f32.s32 %v1259
        %v1262 = vshll.u32 %v1261, 16
        %v1263 = vadd.s32 %v1262, %v1260
        %v1264 = vrot.slane %v1263, 4
        %v1265 = vadd.s32 %v1263, %v1264
        %v1266 = vrot.slane %v1265, 2
        %v1267 = vadd.s32 %v1265, %v1266
        %v1268 = vrot.slane %v1267, 1
        %v1269 = vadd.s32 %v1267, %v1268
        %s1270 = vtos %v1269
        %v1271 = vand.u32 %v1245, 65535
        %v1272 = vshrl.u32 %v1245, 16
        %v1273 = vcvt.s32.f32 %v1271
        %v1274 = vcvt.s32.f32 %v1272
        %1275 = vadd.xlane.f32.xlu0 %v1273
        %v1276 = vpop.xlane.xlu0 %1275
        %1277 = vadd.xlane.f32.xlu0 %v1274
        %v1278 = vpop.xlane.xlu0 %1277
        %v1279 = vcvt.f32.s32 %v1276
        %v1280 = vcvt.f32.s32 %v1278
        %v1281 = vshll.u32 %v1280, 16
        %v1282 = vadd.s32 %v1281, %v1279
        %v1283 = vrot.slane %v1282, 4
        %v1284 = vadd.s32 %v1282, %v1283
        %v1285 = vrot.slane %v1284, 2
        %v1286 = vadd.s32 %v1284, %v1285
        %v1287 = vrot.slane %v1286, 1
        %v1288 = vadd.s32 %v1286, %v1287
        %s1289 = vtos %v1288
        %s1290 = sand.u32 %s1270, 65535
        %s1291 = sshra.s32 %s1270, 16
        %p1292 = scmp.ge.s32.totalorder %s1290, %s919
        %s1293 = scalar_select %p1292, 1, 0
        %p1294 = scmp.ge.s32.totalorder %s1289, %s919
        %s1295 = scalar_select %p1294, 1, 0
        %s1296 = sadd.s32 %s1293, %s1295
        %p1297 = scmp.ge.s32.totalorder %s1291, %s919
        %s1298 = scalar_select %p1297, 1, 0
        %s1299 = sadd.s32 %s1296, %s1298
        %s1300 = smul.u32 %s1299, 524288
        %s1301 = sadd.s32 %s1237, %s1300
        %s1302 = sadd.s32 %s1301, 131072
        %v1303 = vstv %s1302
        %vm1304 = vcmp.ge.s32.totalorder %v923, %v1303
        %v1305 = vsel %vm1304, 1, 0
        %s1306 = sadd.s32 %s1301, 262144
        %v1307 = vstv %s1306
        %vm1308 = vcmp.ge.s32.totalorder %v923, %v1307
        %v1309 = vsel %vm1308, 1, 0
        %s1310 = sadd.s32 %s1301, 393216
        %v1311 = vstv %s1310
        %vm1312 = vcmp.ge.s32.totalorder %v923, %v1311
        %v1313 = vsel %vm1312, 1, 0
        %v1314 = vshll.u32 %v1313, 16
        %v1315 = vadd.s32 %v1305, %v1314
        %v1316 = vand.u32 %v1315, 65535
        %v1317 = vshrl.u32 %v1315, 16
        %v1318 = vcvt.s32.f32 %v1316
        %v1319 = vcvt.s32.f32 %v1317
        %1320 = vadd.xlane.f32.xlu0 %v1318
        %v1321 = vpop.xlane.xlu0 %1320
        %1322 = vadd.xlane.f32.xlu0 %v1319
        %v1323 = vpop.xlane.xlu0 %1322
        %v1324 = vcvt.f32.s32 %v1321
        %v1325 = vcvt.f32.s32 %v1323
        %v1326 = vshll.u32 %v1325, 16
        %v1327 = vadd.s32 %v1326, %v1324
        %v1328 = vrot.slane %v1327, 4
        %v1329 = vadd.s32 %v1327, %v1328
        %v1330 = vrot.slane %v1329, 2
        %v1331 = vadd.s32 %v1329, %v1330
        %v1332 = vrot.slane %v1331, 1
        %v1333 = vadd.s32 %v1331, %v1332
        %s1334 = vtos %v1333
        %v1335 = vand.u32 %v1309, 65535
        %v1336 = vshrl.u32 %v1309, 16
        %v1337 = vcvt.s32.f32 %v1335
        %v1338 = vcvt.s32.f32 %v1336
        %1339 = vadd.xlane.f32.xlu0 %v1337
        %v1340 = vpop.xlane.xlu0 %1339
        %1341 = vadd.xlane.f32.xlu0 %v1338
        %v1342 = vpop.xlane.xlu0 %1341
        %v1343 = vcvt.f32.s32 %v1340
        %v1344 = vcvt.f32.s32 %v1342
        %v1345 = vshll.u32 %v1344, 16
        %v1346 = vadd.s32 %v1345, %v1343
        %v1347 = vrot.slane %v1346, 4
        %v1348 = vadd.s32 %v1346, %v1347
        %v1349 = vrot.slane %v1348, 2
        %v1350 = vadd.s32 %v1348, %v1349
        %v1351 = vrot.slane %v1350, 1
        %v1352 = vadd.s32 %v1350, %v1351
        %s1353 = vtos %v1352
        %s1354 = sand.u32 %s1334, 65535
        %s1355 = sshra.s32 %s1334, 16
        %p1356 = scmp.ge.s32.totalorder %s1354, %s919
        %s1357 = scalar_select %p1356, 1, 0
        %p1358 = scmp.ge.s32.totalorder %s1353, %s919
        %s1359 = scalar_select %p1358, 1, 0
        %s1360 = sadd.s32 %s1357, %s1359
        %p1361 = scmp.ge.s32.totalorder %s1355, %s919
        %s1362 = scalar_select %p1361, 1, 0
        %s1363 = sadd.s32 %s1360, %s1362
        %s1364 = smul.u32 %s1363, 131072
        %s1365 = sadd.s32 %s1301, %s1364
        %s1366 = sadd.s32 %s1365, 32768
        %v1367 = vstv %s1366
        %vm1368 = vcmp.ge.s32.totalorder %v923, %v1367
        %v1369 = vsel %vm1368, 1, 0
        %s1370 = sadd.s32 %s1365, 65536
        %v1371 = vstv %s1370
        %vm1372 = vcmp.ge.s32.totalorder %v923, %v1371
        %v1373 = vsel %vm1372, 1, 0
        %s1374 = sadd.s32 %s1365, 98304
        %v1375 = vstv %s1374
        %vm1376 = vcmp.ge.s32.totalorder %v923, %v1375
        %v1377 = vsel %vm1376, 1, 0
        %v1378 = vshll.u32 %v1377, 16
        %v1379 = vadd.s32 %v1369, %v1378
        %v1380 = vand.u32 %v1379, 65535
        %v1381 = vshrl.u32 %v1379, 16
        %v1382 = vcvt.s32.f32 %v1380
        %v1383 = vcvt.s32.f32 %v1381
        %1384 = vadd.xlane.f32.xlu0 %v1382
        %v1385 = vpop.xlane.xlu0 %1384
        %1386 = vadd.xlane.f32.xlu0 %v1383
        %v1387 = vpop.xlane.xlu0 %1386
        %v1388 = vcvt.f32.s32 %v1385
        %v1389 = vcvt.f32.s32 %v1387
        %v1390 = vshll.u32 %v1389, 16
        %v1391 = vadd.s32 %v1390, %v1388
        %v1392 = vrot.slane %v1391, 4
        %v1393 = vadd.s32 %v1391, %v1392
        %v1394 = vrot.slane %v1393, 2
        %v1395 = vadd.s32 %v1393, %v1394
        %v1396 = vrot.slane %v1395, 1
        %v1397 = vadd.s32 %v1395, %v1396
        %s1398 = vtos %v1397
        %v1399 = vand.u32 %v1373, 65535
        %v1400 = vshrl.u32 %v1373, 16
        %v1401 = vcvt.s32.f32 %v1399
        %v1402 = vcvt.s32.f32 %v1400
        %1403 = vadd.xlane.f32.xlu0 %v1401
        %v1404 = vpop.xlane.xlu0 %1403
        %1405 = vadd.xlane.f32.xlu0 %v1402
        %v1406 = vpop.xlane.xlu0 %1405
        %v1407 = vcvt.f32.s32 %v1404
        %v1408 = vcvt.f32.s32 %v1406
        %v1409 = vshll.u32 %v1408, 16
        %v1410 = vadd.s32 %v1409, %v1407
        %v1411 = vrot.slane %v1410, 4
        %v1412 = vadd.s32 %v1410, %v1411
        %v1413 = vrot.slane %v1412, 2
        %v1414 = vadd.s32 %v1412, %v1413
        %v1415 = vrot.slane %v1414, 1
        %v1416 = vadd.s32 %v1414, %v1415
        %s1417 = vtos %v1416
        %s1418 = sand.u32 %s1398, 65535
        %s1419 = sshra.s32 %s1398, 16
        %p1420 = scmp.ge.s32.totalorder %s1418, %s919
        %s1421 = scalar_select %p1420, 1, 0
        %p1422 = scmp.ge.s32.totalorder %s1417, %s919
        %s1423 = scalar_select %p1422, 1, 0
        %s1424 = sadd.s32 %s1421, %s1423
        %p1425 = scmp.ge.s32.totalorder %s1419, %s919
        %s1426 = scalar_select %p1425, 1, 0
        %s1427 = sadd.s32 %s1424, %s1426
        %s1428 = smul.u32 %s1427, 32768
        %s1429 = sadd.s32 %s1365, %s1428
        %s1430 = sadd.s32 %s1429, 8192
        %v1431 = vstv %s1430
        %vm1432 = vcmp.ge.s32.totalorder %v923, %v1431
        %v1433 = vsel %vm1432, 1, 0
        %s1434 = sadd.s32 %s1429, 16384
        %v1435 = vstv %s1434
        %vm1436 = vcmp.ge.s32.totalorder %v923, %v1435
        %v1437 = vsel %vm1436, 1, 0
        %s1438 = sadd.s32 %s1429, 24576
        %v1439 = vstv %s1438
        %vm1440 = vcmp.ge.s32.totalorder %v923, %v1439
        %v1441 = vsel %vm1440, 1, 0
        %v1442 = vshll.u32 %v1441, 16
        %v1443 = vadd.s32 %v1433, %v1442
        %v1444 = vand.u32 %v1443, 65535
        %v1445 = vshrl.u32 %v1443, 16
        %v1446 = vcvt.s32.f32 %v1444
        %v1447 = vcvt.s32.f32 %v1445
        %1448 = vadd.xlane.f32.xlu0 %v1446
        %v1449 = vpop.xlane.xlu0 %1448
        %1450 = vadd.xlane.f32.xlu0 %v1447
        %v1451 = vpop.xlane.xlu0 %1450
        %v1452 = vcvt.f32.s32 %v1449
        %v1453 = vcvt.f32.s32 %v1451
        %v1454 = vshll.u32 %v1453, 16
        %v1455 = vadd.s32 %v1454, %v1452
        %v1456 = vrot.slane %v1455, 4
        %v1457 = vadd.s32 %v1455, %v1456
        %v1458 = vrot.slane %v1457, 2
        %v1459 = vadd.s32 %v1457, %v1458
        %v1460 = vrot.slane %v1459, 1
        %v1461 = vadd.s32 %v1459, %v1460
        %s1462 = vtos %v1461
        %v1463 = vand.u32 %v1437, 65535
        %v1464 = vshrl.u32 %v1437, 16
        %v1465 = vcvt.s32.f32 %v1463
        %v1466 = vcvt.s32.f32 %v1464
        %1467 = vadd.xlane.f32.xlu0 %v1465
        %v1468 = vpop.xlane.xlu0 %1467
        %1469 = vadd.xlane.f32.xlu0 %v1466
        %v1470 = vpop.xlane.xlu0 %1469
        %v1471 = vcvt.f32.s32 %v1468
        %v1472 = vcvt.f32.s32 %v1470
        %v1473 = vshll.u32 %v1472, 16
        %v1474 = vadd.s32 %v1473, %v1471
        %v1475 = vrot.slane %v1474, 4
        %v1476 = vadd.s32 %v1474, %v1475
        %v1477 = vrot.slane %v1476, 2
        %v1478 = vadd.s32 %v1476, %v1477
        %v1479 = vrot.slane %v1478, 1
        %v1480 = vadd.s32 %v1478, %v1479
        %s1481 = vtos %v1480
        %s1482 = sand.u32 %s1462, 65535
        %s1483 = sshra.s32 %s1462, 16
        %p1484 = scmp.ge.s32.totalorder %s1482, %s919
        %s1485 = scalar_select %p1484, 1, 0
        %p1486 = scmp.ge.s32.totalorder %s1481, %s919
        %s1487 = scalar_select %p1486, 1, 0
        %s1488 = sadd.s32 %s1485, %s1487
        %p1489 = scmp.ge.s32.totalorder %s1483, %s919
        %s1490 = scalar_select %p1489, 1, 0
        %s1491 = sadd.s32 %s1488, %s1490
        %s1492 = smul.u32 %s1491, 8192
        %s1493 = sadd.s32 %s1429, %s1492
        %s1494 = sadd.s32 %s1493, 2048
        %v1495 = vstv %s1494
        %vm1496 = vcmp.ge.s32.totalorder %v923, %v1495
        %v1497 = vsel %vm1496, 1, 0
        %s1498 = sadd.s32 %s1493, 4096
        %v1499 = vstv %s1498
        %vm1500 = vcmp.ge.s32.totalorder %v923, %v1499
        %v1501 = vsel %vm1500, 1, 0
        %s1502 = sadd.s32 %s1493, 6144
        %v1503 = vstv %s1502
        %vm1504 = vcmp.ge.s32.totalorder %v923, %v1503
        %v1505 = vsel %vm1504, 1, 0
        %v1506 = vshll.u32 %v1505, 16
        %v1507 = vadd.s32 %v1497, %v1506
        %v1508 = vand.u32 %v1507, 65535
        %v1509 = vshrl.u32 %v1507, 16
        %v1510 = vcvt.s32.f32 %v1508
        %v1511 = vcvt.s32.f32 %v1509
        %1512 = vadd.xlane.f32.xlu0 %v1510
        %v1513 = vpop.xlane.xlu0 %1512
        %1514 = vadd.xlane.f32.xlu0 %v1511
        %v1515 = vpop.xlane.xlu0 %1514
        %v1516 = vcvt.f32.s32 %v1513
        %v1517 = vcvt.f32.s32 %v1515
        %v1518 = vshll.u32 %v1517, 16
        %v1519 = vadd.s32 %v1518, %v1516
        %v1520 = vrot.slane %v1519, 4
        %v1521 = vadd.s32 %v1519, %v1520
        %v1522 = vrot.slane %v1521, 2
        %v1523 = vadd.s32 %v1521, %v1522
        %v1524 = vrot.slane %v1523, 1
        %v1525 = vadd.s32 %v1523, %v1524
        %s1526 = vtos %v1525
        %v1527 = vand.u32 %v1501, 65535
        %v1528 = vshrl.u32 %v1501, 16
        %v1529 = vcvt.s32.f32 %v1527
        %v1530 = vcvt.s32.f32 %v1528
        %1531 = vadd.xlane.f32.xlu0 %v1529
        %v1532 = vpop.xlane.xlu0 %1531
        %1533 = vadd.xlane.f32.xlu0 %v1530
        %v1534 = vpop.xlane.xlu0 %1533
        %v1535 = vcvt.f32.s32 %v1532
        %v1536 = vcvt.f32.s32 %v1534
        %v1537 = vshll.u32 %v1536, 16
        %v1538 = vadd.s32 %v1537, %v1535
        %v1539 = vrot.slane %v1538, 4
        %v1540 = vadd.s32 %v1538, %v1539
        %v1541 = vrot.slane %v1540, 2
        %v1542 = vadd.s32 %v1540, %v1541
        %v1543 = vrot.slane %v1542, 1
        %v1544 = vadd.s32 %v1542, %v1543
        %s1545 = vtos %v1544
        %s1546 = sand.u32 %s1526, 65535
        %s1547 = sshra.s32 %s1526, 16
        %p1548 = scmp.ge.s32.totalorder %s1546, %s919
        %s1549 = scalar_select %p1548, 1, 0
        %p1550 = scmp.ge.s32.totalorder %s1545, %s919
        %s1551 = scalar_select %p1550, 1, 0
        %s1552 = sadd.s32 %s1549, %s1551
        %p1553 = scmp.ge.s32.totalorder %s1547, %s919
        %s1554 = scalar_select %p1553, 1, 0
        %s1555 = sadd.s32 %s1552, %s1554
        %s1556 = smul.u32 %s1555, 2048
        %s1557 = sadd.s32 %s1493, %s1556
        %s1558 = sadd.s32 %s1557, 512
        %v1559 = vstv %s1558
        %vm1560 = vcmp.ge.s32.totalorder %v923, %v1559
        %v1561 = vsel %vm1560, 1, 0
        %s1562 = sadd.s32 %s1557, 1024
        %v1563 = vstv %s1562
        %vm1564 = vcmp.ge.s32.totalorder %v923, %v1563
        %v1565 = vsel %vm1564, 1, 0
        %s1566 = sadd.s32 %s1557, 1536
        %v1567 = vstv %s1566
        %vm1568 = vcmp.ge.s32.totalorder %v923, %v1567
        %v1569 = vsel %vm1568, 1, 0
        %v1570 = vshll.u32 %v1569, 16
        %v1571 = vadd.s32 %v1561, %v1570
        %v1572 = vand.u32 %v1571, 65535
        %v1573 = vshrl.u32 %v1571, 16
        %v1574 = vcvt.s32.f32 %v1572
        %v1575 = vcvt.s32.f32 %v1573
        %1576 = vadd.xlane.f32.xlu0 %v1574
        %v1577 = vpop.xlane.xlu0 %1576
        %1578 = vadd.xlane.f32.xlu0 %v1575
        %v1579 = vpop.xlane.xlu0 %1578
        %v1580 = vcvt.f32.s32 %v1577
        %v1581 = vcvt.f32.s32 %v1579
        %v1582 = vshll.u32 %v1581, 16
        %v1583 = vadd.s32 %v1582, %v1580
        %v1584 = vrot.slane %v1583, 4
        %v1585 = vadd.s32 %v1583, %v1584
        %v1586 = vrot.slane %v1585, 2
        %v1587 = vadd.s32 %v1585, %v1586
        %v1588 = vrot.slane %v1587, 1
        %v1589 = vadd.s32 %v1587, %v1588
        %s1590 = vtos %v1589
        %v1591 = vand.u32 %v1565, 65535
        %v1592 = vshrl.u32 %v1565, 16
        %v1593 = vcvt.s32.f32 %v1591
        %v1594 = vcvt.s32.f32 %v1592
        %1595 = vadd.xlane.f32.xlu0 %v1593
        %v1596 = vpop.xlane.xlu0 %1595
        %1597 = vadd.xlane.f32.xlu0 %v1594
        %v1598 = vpop.xlane.xlu0 %1597
        %v1599 = vcvt.f32.s32 %v1596
        %v1600 = vcvt.f32.s32 %v1598
        %v1601 = vshll.u32 %v1600, 16
        %v1602 = vadd.s32 %v1601, %v1599
        %v1603 = vrot.slane %v1602, 4
        %v1604 = vadd.s32 %v1602, %v1603
        %v1605 = vrot.slane %v1604, 2
        %v1606 = vadd.s32 %v1604, %v1605
        %v1607 = vrot.slane %v1606, 1
        %v1608 = vadd.s32 %v1606, %v1607
        %s1609 = vtos %v1608
        %s1610 = sand.u32 %s1590, 65535
        %s1611 = sshra.s32 %s1590, 16
        %p1612 = scmp.ge.s32.totalorder %s1610, %s919
        %s1613 = scalar_select %p1612, 1, 0
        %p1614 = scmp.ge.s32.totalorder %s1609, %s919
        %s1615 = scalar_select %p1614, 1, 0
        %s1616 = sadd.s32 %s1613, %s1615
        %p1617 = scmp.ge.s32.totalorder %s1611, %s919
        %s1618 = scalar_select %p1617, 1, 0
        %s1619 = sadd.s32 %s1616, %s1618
        %s1620 = smul.u32 %s1619, 512
        %s1621 = sadd.s32 %s1557, %s1620
        %s1622 = sadd.s32 %s1621, 128
        %v1623 = vstv %s1622
        %vm1624 = vcmp.ge.s32.totalorder %v923, %v1623
        %v1625 = vsel %vm1624, 1, 0
        %s1626 = sadd.s32 %s1621, 256
        %v1627 = vstv %s1626
        %vm1628 = vcmp.ge.s32.totalorder %v923, %v1627
        %v1629 = vsel %vm1628, 1, 0
        %s1630 = sadd.s32 %s1621, 384
        %v1631 = vstv %s1630
        %vm1632 = vcmp.ge.s32.totalorder %v923, %v1631
        %v1633 = vsel %vm1632, 1, 0
        %v1634 = vshll.u32 %v1633, 16
        %v1635 = vadd.s32 %v1625, %v1634
        %v1636 = vand.u32 %v1635, 65535
        %v1637 = vshrl.u32 %v1635, 16
        %v1638 = vcvt.s32.f32 %v1636
        %v1639 = vcvt.s32.f32 %v1637
        %1640 = vadd.xlane.f32.xlu0 %v1638
        %v1641 = vpop.xlane.xlu0 %1640
        %1642 = vadd.xlane.f32.xlu0 %v1639
        %v1643 = vpop.xlane.xlu0 %1642
        %v1644 = vcvt.f32.s32 %v1641
        %v1645 = vcvt.f32.s32 %v1643
        %v1646 = vshll.u32 %v1645, 16
        %v1647 = vadd.s32 %v1646, %v1644
        %v1648 = vrot.slane %v1647, 4
        %v1649 = vadd.s32 %v1647, %v1648
        %v1650 = vrot.slane %v1649, 2
        %v1651 = vadd.s32 %v1649, %v1650
        %v1652 = vrot.slane %v1651, 1
        %v1653 = vadd.s32 %v1651, %v1652
        %s1654 = vtos %v1653
        %v1655 = vand.u32 %v1629, 65535
        %v1656 = vshrl.u32 %v1629, 16
        %v1657 = vcvt.s32.f32 %v1655
        %v1658 = vcvt.s32.f32 %v1656
        %1659 = vadd.xlane.f32.xlu0 %v1657
        %v1660 = vpop.xlane.xlu0 %1659
        %1661 = vadd.xlane.f32.xlu0 %v1658
        %v1662 = vpop.xlane.xlu0 %1661
        %v1663 = vcvt.f32.s32 %v1660
        %v1664 = vcvt.f32.s32 %v1662
        %v1665 = vshll.u32 %v1664, 16
        %v1666 = vadd.s32 %v1665, %v1663
        %v1667 = vrot.slane %v1666, 4
        %v1668 = vadd.s32 %v1666, %v1667
        %v1669 = vrot.slane %v1668, 2
        %v1670 = vadd.s32 %v1668, %v1669
        %v1671 = vrot.slane %v1670, 1
        %v1672 = vadd.s32 %v1670, %v1671
        %s1673 = vtos %v1672
        %s1674 = sand.u32 %s1654, 65535
        %s1675 = sshra.s32 %s1654, 16
        %p1676 = scmp.ge.s32.totalorder %s1674, %s919
        %s1677 = scalar_select %p1676, 1, 0
        %p1678 = scmp.ge.s32.totalorder %s1673, %s919
        %s1679 = scalar_select %p1678, 1, 0
        %s1680 = sadd.s32 %s1677, %s1679
        %p1681 = scmp.ge.s32.totalorder %s1675, %s919
        %s1682 = scalar_select %p1681, 1, 0
        %s1683 = sadd.s32 %s1680, %s1682
        %s1684 = smul.u32 %s1683, 128
        %s1685 = sadd.s32 %s1621, %s1684
        %s1686 = sadd.s32 %s1685, 32
        %v1687 = vstv %s1686
        %vm1688 = vcmp.ge.s32.totalorder %v923, %v1687
        %v1689 = vsel %vm1688, 1, 0
        %s1690 = sadd.s32 %s1685, 64
        %v1691 = vstv %s1690
        %vm1692 = vcmp.ge.s32.totalorder %v923, %v1691
        %v1693 = vsel %vm1692, 1, 0
        %s1694 = sadd.s32 %s1685, 96
        %v1695 = vstv %s1694
        %vm1696 = vcmp.ge.s32.totalorder %v923, %v1695
        %v1697 = vsel %vm1696, 1, 0
        %v1698 = vshll.u32 %v1697, 16
        %v1699 = vadd.s32 %v1689, %v1698
        %v1700 = vand.u32 %v1699, 65535
        %v1701 = vshrl.u32 %v1699, 16
        %v1702 = vcvt.s32.f32 %v1700
        %v1703 = vcvt.s32.f32 %v1701
        %1704 = vadd.xlane.f32.xlu0 %v1702
        %v1705 = vpop.xlane.xlu0 %1704
        %1706 = vadd.xlane.f32.xlu0 %v1703
        %v1707 = vpop.xlane.xlu0 %1706
        %v1708 = vcvt.f32.s32 %v1705
        %v1709 = vcvt.f32.s32 %v1707
        %v1710 = vshll.u32 %v1709, 16
        %v1711 = vadd.s32 %v1710, %v1708
        %v1712 = vrot.slane %v1711, 4
        %v1713 = vadd.s32 %v1711, %v1712
        %v1714 = vrot.slane %v1713, 2
        %v1715 = vadd.s32 %v1713, %v1714
        %v1716 = vrot.slane %v1715, 1
        %v1717 = vadd.s32 %v1715, %v1716
        %s1718 = vtos %v1717
        %v1719 = vand.u32 %v1693, 65535
        %v1720 = vshrl.u32 %v1693, 16
        %v1721 = vcvt.s32.f32 %v1719
        %v1722 = vcvt.s32.f32 %v1720
        %1723 = vadd.xlane.f32.xlu0 %v1721
        %v1724 = vpop.xlane.xlu0 %1723
        %1725 = vadd.xlane.f32.xlu0 %v1722
        %v1726 = vpop.xlane.xlu0 %1725
        %v1727 = vcvt.f32.s32 %v1724
        %v1728 = vcvt.f32.s32 %v1726
        %v1729 = vshll.u32 %v1728, 16
        %v1730 = vadd.s32 %v1729, %v1727
        %v1731 = vrot.slane %v1730, 4
        %v1732 = vadd.s32 %v1730, %v1731
        %v1733 = vrot.slane %v1732, 2
        %v1734 = vadd.s32 %v1732, %v1733
        %v1735 = vrot.slane %v1734, 1
        %v1736 = vadd.s32 %v1734, %v1735
        %s1737 = vtos %v1736
        %s1738 = sand.u32 %s1718, 65535
        %s1739 = sshra.s32 %s1718, 16
        %p1740 = scmp.ge.s32.totalorder %s1738, %s919
        %s1741 = scalar_select %p1740, 1, 0
        %p1742 = scmp.ge.s32.totalorder %s1737, %s919
        %s1743 = scalar_select %p1742, 1, 0
        %s1744 = sadd.s32 %s1741, %s1743
        %p1745 = scmp.ge.s32.totalorder %s1739, %s919
        %s1746 = scalar_select %p1745, 1, 0
        %s1747 = sadd.s32 %s1744, %s1746
        %s1748 = smul.u32 %s1747, 32
        %s1749 = sadd.s32 %s1685, %s1748
        %s1750 = sadd.s32 %s1749, 8
        %v1751 = vstv %s1750
        %vm1752 = vcmp.ge.s32.totalorder %v923, %v1751
        %v1753 = vsel %vm1752, 1, 0
        %s1754 = sadd.s32 %s1749, 16
        %v1755 = vstv %s1754
        %vm1756 = vcmp.ge.s32.totalorder %v923, %v1755
        %v1757 = vsel %vm1756, 1, 0
        %s1758 = sadd.s32 %s1749, 24
        %v1759 = vstv %s1758
        %vm1760 = vcmp.ge.s32.totalorder %v923, %v1759
        %v1761 = vsel %vm1760, 1, 0
        %v1762 = vshll.u32 %v1761, 16
        %v1763 = vadd.s32 %v1753, %v1762
        %v1764 = vand.u32 %v1763, 65535
        %v1765 = vshrl.u32 %v1763, 16
        %v1766 = vcvt.s32.f32 %v1764
        %v1767 = vcvt.s32.f32 %v1765
        %1768 = vadd.xlane.f32.xlu0 %v1766
        %v1769 = vpop.xlane.xlu0 %1768
        %1770 = vadd.xlane.f32.xlu0 %v1767
        %v1771 = vpop.xlane.xlu0 %1770
        %v1772 = vcvt.f32.s32 %v1769
        %v1773 = vcvt.f32.s32 %v1771
        %v1774 = vshll.u32 %v1773, 16
        %v1775 = vadd.s32 %v1774, %v1772
        %v1776 = vrot.slane %v1775, 4
        %v1777 = vadd.s32 %v1775, %v1776
        %v1778 = vrot.slane %v1777, 2
        %v1779 = vadd.s32 %v1777, %v1778
        %v1780 = vrot.slane %v1779, 1
        %v1781 = vadd.s32 %v1779, %v1780
        %s1782 = vtos %v1781
        %v1783 = vand.u32 %v1757, 65535
        %v1784 = vshrl.u32 %v1757, 16
        %v1785 = vcvt.s32.f32 %v1783
        %v1786 = vcvt.s32.f32 %v1784
        %1787 = vadd.xlane.f32.xlu0 %v1785
        %v1788 = vpop.xlane.xlu0 %1787
        %1789 = vadd.xlane.f32.xlu0 %v1786
        %v1790 = vpop.xlane.xlu0 %1789
        %v1791 = vcvt.f32.s32 %v1788
        %v1792 = vcvt.f32.s32 %v1790
        %v1793 = vshll.u32 %v1792, 16
        %v1794 = vadd.s32 %v1793, %v1791
        %v1795 = vrot.slane %v1794, 4
        %v1796 = vadd.s32 %v1794, %v1795
        %v1797 = vrot.slane %v1796, 2
        %v1798 = vadd.s32 %v1796, %v1797
        %v1799 = vrot.slane %v1798, 1
        %v1800 = vadd.s32 %v1798, %v1799
        %s1801 = vtos %v1800
        %s1802 = sand.u32 %s1782, 65535
        %s1803 = sshra.s32 %s1782, 16
        %p1804 = scmp.ge.s32.totalorder %s1802, %s919
        %s1805 = scalar_select %p1804, 1, 0
        %p1806 = scmp.ge.s32.totalorder %s1801, %s919
        %s1807 = scalar_select %p1806, 1, 0
        %s1808 = sadd.s32 %s1805, %s1807
        %p1809 = scmp.ge.s32.totalorder %s1803, %s919
        %s1810 = scalar_select %p1809, 1, 0
        %s1811 = sadd.s32 %s1808, %s1810
        %s1812 = smul.u32 %s1811, 8
        %s1813 = sadd.s32 %s1749, %s1812
        %s1814 = sadd.s32 %s1813, 2
        %v1815 = vstv %s1814
        %vm1816 = vcmp.ge.s32.totalorder %v923, %v1815
        %v1817 = vsel %vm1816, 1, 0
        %s1818 = sadd.s32 %s1813, 4
        %v1819 = vstv %s1818
        %vm1820 = vcmp.ge.s32.totalorder %v923, %v1819
        %v1821 = vsel %vm1820, 1, 0
        %s1822 = sadd.s32 %s1813, 6
        %v1823 = vstv %s1822
        %vm1824 = vcmp.ge.s32.totalorder %v923, %v1823
        %v1825 = vsel %vm1824, 1, 0
        %v1826 = vshll.u32 %v1825, 16
        %v1827 = vadd.s32 %v1817, %v1826
        %v1828 = vand.u32 %v1827, 65535
        %v1829 = vshrl.u32 %v1827, 16
        %v1830 = vcvt.s32.f32 %v1828
        %v1831 = vcvt.s32.f32 %v1829
        %1832 = vadd.xlane.f32.xlu0 %v1830
        %v1833 = vpop.xlane.xlu0 %1832
        %1834 = vadd.xlane.f32.xlu0 %v1831
        %v1835 = vpop.xlane.xlu0 %1834
        %v1836 = vcvt.f32.s32 %v1833
        %v1837 = vcvt.f32.s32 %v1835
        %v1838 = vshll.u32 %v1837, 16
        %v1839 = vadd.s32 %v1838, %v1836
        %v1840 = vrot.slane %v1839, 4
        %v1841 = vadd.s32 %v1839, %v1840
        %v1842 = vrot.slane %v1841, 2
        %v1843 = vadd.s32 %v1841, %v1842
        %v1844 = vrot.slane %v1843, 1
        %v1845 = vadd.s32 %v1843, %v1844
        %s1846 = vtos %v1845
        %v1847 = vand.u32 %v1821, 65535
        %v1848 = vshrl.u32 %v1821, 16
        %v1849 = vcvt.s32.f32 %v1847
        %v1850 = vcvt.s32.f32 %v1848
        %1851 = vadd.xlane.f32.xlu0 %v1849
        %v1852 = vpop.xlane.xlu0 %1851
        %1853 = vadd.xlane.f32.xlu0 %v1850
        %v1854 = vpop.xlane.xlu0 %1853
        %v1855 = vcvt.f32.s32 %v1852
        %v1856 = vcvt.f32.s32 %v1854
        %v1857 = vshll.u32 %v1856, 16
        %v1858 = vadd.s32 %v1857, %v1855
        %v1859 = vrot.slane %v1858, 4
        %v1860 = vadd.s32 %v1858, %v1859
        %v1861 = vrot.slane %v1860, 2
        %v1862 = vadd.s32 %v1860, %v1861
        %v1863 = vrot.slane %v1862, 1
        %v1864 = vadd.s32 %v1862, %v1863
        %s1865 = vtos %v1864
        %s1866 = sand.u32 %s1846, 65535
        %s1867 = sshra.s32 %s1846, 16
        %p1868 = scmp.ge.s32.totalorder %s1866, %s919
        %s1869 = scalar_select %p1868, 1, 0
        %p1870 = scmp.ge.s32.totalorder %s1865, %s919
        %s1871 = scalar_select %p1870, 1, 0
        %s1872 = sadd.s32 %s1869, %s1871
        %p1873 = scmp.ge.s32.totalorder %s1867, %s919
        %s1874 = scalar_select %p1873, 1, 0
        %s1875 = sadd.s32 %s1872, %s1874
        %s1876 = smul.u32 %s1875, 2
        %s1877 = sadd.s32 %s1813, %s1876
        %s1878 = sadd.s32 %s1877, 1
        %v1879 = vstv %s1878
        %vm1880 = vcmp.ge.s32.totalorder %v923, %v1879
        %v1881 = vsel %vm1880, 1, 0
        %v1882 = vand.u32 %v1881, 65535
        %v1883 = vshrl.u32 %v1881, 16
        %v1884 = vcvt.s32.f32 %v1882
        %v1885 = vcvt.s32.f32 %v1883
        %1886 = vadd.xlane.f32.xlu0 %v1884
        %v1887 = vpop.xlane.xlu0 %1886
        %1888 = vadd.xlane.f32.xlu0 %v1885
        %v1889 = vpop.xlane.xlu0 %1888
        %v1890 = vcvt.f32.s32 %v1887
        %v1891 = vcvt.f32.s32 %v1889
        %v1892 = vshll.u32 %v1891, 16
        %v1893 = vadd.s32 %v1892, %v1890
        %v1894 = vrot.slane %v1893, 4
        %v1895 = vadd.s32 %v1893, %v1894
        %v1896 = vrot.slane %v1895, 2
        %v1897 = vadd.s32 %v1895, %v1896
        %v1898 = vrot.slane %v1897, 1
        %v1899 = vadd.s32 %v1897, %v1898
        %s1900 = vtos %v1899
        %p1901 = scmp.ge.s32.totalorder %s1900, %s919
        %s1902 = scalar_select %p1901, %s1878, %s1877
        %v1903 = vstv %s1902
        %vm1904 = vcmp.eq.s32.totalorder %v923, %v1903
        %v1905 = vsel %vm1904, %v923, 0.0
        %1906 = vmax.xlane.f32.xlu0 %v1905
        %v1907 = vpop.xlane.xlu0 %1906
        %v1908 = vrot.slane %v1907, 4
        %v1909 = vmax.f32 %v1907, %v1908
        %v1910 = vrot.slane %v1909, 2
        %v1911 = vmax.f32 %v1909, %v1910
        %v1912 = vrot.slane %v1911, 1
        %v1913 = vmax.f32 %v1911, %v1912
        %s1914 = vtos %v1913
        %vm1915 = vcmp.gt.s32.totalorder %v923, %v1903
        %v1916 = vsel %vm1915, 1, 0
        %v1917 = vand.u32 %v1916, 65535
        %v1918 = vshrl.u32 %v1916, 16
        %v1919 = vcvt.s32.f32 %v1917
        %v1920 = vcvt.s32.f32 %v1918
        %1921 = vadd.xlane.f32.xlu0 %v1919
        %v1922 = vpop.xlane.xlu0 %1921
        %1923 = vadd.xlane.f32.xlu0 %v1920
        %v1924 = vpop.xlane.xlu0 %1923
        %v1925 = vcvt.f32.s32 %v1922
        %v1926 = vcvt.f32.s32 %v1924
        %v1927 = vshll.u32 %v1926, 16
        %v1928 = vadd.s32 %v1927, %v1925
        %v1929 = vrot.slane %v1928, 4
        %v1930 = vadd.s32 %v1928, %v1929
        %v1931 = vrot.slane %v1930, 2
        %v1932 = vadd.s32 %v1930, %v1931
        %v1933 = vrot.slane %v1932, 1
        %v1934 = vadd.s32 %v1932, %v1933
        %s1935 = vtos %v1934
        %v1936 = vsel %vm1915, %v923, 0.0
        %1937 = vadd.xlane.f32.xlu0 %v1936
        %v1938 = vpop.xlane.xlu0 %1937
        %v1939 = vrot.slane %v1938, 4
        %v1940 = vadd.f32 %v1938, %v1939
        %v1941 = vrot.slane %v1940, 2
        %v1942 = vadd.f32 %v1940, %v1941
        %v1943 = vrot.slane %v1942, 1
        %v1944 = vadd.f32 %v1942, %v1943
        %s1945 = vtos %v1944
        %s1946 = ssub.s32 %s919, %s1935
        %s1947 = scvt.s32.f32 %s1946
        %s1948 = smul.f32 %s1947, %s1914
        %s1949 = sadd.f32 %s1945, %s1948
        %v1950 = vsel %vm637, %v896, 0.0
        %1951 = vadd.xlane.f32.xlu0 %v1950
        %v1952 = vpop.xlane.xlu0 %1951
        %v1953 = vrot.slane %v1952, 4
        %v1954 = vadd.f32 %v1952, %v1953
        %v1955 = vrot.slane %v1954, 2
        %v1956 = vadd.f32 %v1954, %v1955
        %v1957 = vrot.slane %v1956, 1
        %v1958 = vadd.f32 %v1956, %v1957
        %s1959 = vtos %v1958
        %s1960 = sadd.f32 %s1959, %s1949
        %vm1961 = vcmp.eq.s32.totalorder %v304, 0
        %vm1962 = vcmp.eq.s32.totalorder %v304, 1
        %vm1963 = vcmp.eq.s32.totalorder %v304, 2
        %s1964 = scvt.s32.f32 %s916
        %v1965 = vstv %s1964
        %v1966 = vsel %vm1963, %v1965, 0.0
        %v1967 = vstv %s1960
        %v1968 = vsel %vm1962, %v1967, %v1966
        %v1969 = vstv %s705
        %v1970 = vsel %vm1961, %v1969, %v1968
        %1971 = vst [vmem:[%s281] sm:$0xff] %v1970
        %s1972 = sand.u32 %s127, 1
        %s1973 = scalar_lea.sflag [#allocation4], %s1972
        %s1974 = sand.u32 %s127, 1
        %s1975 = smul.addr %s1974, 8
        %s1976 = scalar_lea.vmem [#allocation10], %s1975
        // Predicated region
        $region53: #{tpu_custom_call.1} parent=35 // pred_check
          %p1977 = pneg %p137
        $region54: #{tpu_custom_call.1} parent=35 // pred_check_branch
          %1979 = sbr.rel (%p1977) target = $region56
        $region55: #{tpu_custom_call.1} parent=35 // pred_region
          %s1981 = ssub.s32 128, 128
          %1982 = vsyncadd %s1973, %s1981
          %s1983 = smul.addr %s25, 128
          %s1984 = scalar_lea.hbm %s4, %s1983
          %s1986 = sshll.u32 %s1976, 4
          %s1987 = int_to_ptr.vmem [resolvable:$true] %s1986
          %1989 = dma.vmem_to_hbm [thread:$0]  %s1987, 128, %s1984, %s1973
        $region56: #{tpu_custom_call.1} parent=35 // pred_fallthru
          _
      $region36: #{tpu_custom_call.1} parent=5 // pred_fallthru
        _
      %p1990 = scmp.le.s32.totalorder 2, %s20
      // Predicated region
      $region57: #{tpu_custom_call.1} parent=5 // pred_check
        %p1991 = pneg %p1990
      $region58: #{tpu_custom_call.1} parent=5 // pred_check_branch
        %1993 = sbr.rel (%p1991) target = $region60
      $region59: #{tpu_custom_call.1} parent=5 // pred_region
        %s1994 = ssub.s32 %s20, 2
        // Predicated region
        $region61: #{tpu_custom_call.1} parent=59 // pred_check
          %p1995 = pneg %p143
        $region62: #{tpu_custom_call.1} parent=59 // pred_check_branch
          %1997 = sbr.rel (%p1995) target = $region64
        $region63: #{tpu_custom_call.1} parent=59 // pred_region
          %s1998 = sand.u32 %s128, 1
          %s1999 = scalar_lea.sflag [#allocation4], %s1998
          %s2000 = sand.u32 %s128, 1
          %s2001 = smul.addr %s2000, 8
          %s2002 = scalar_lea.vmem [#allocation10], %s2001
          %2003 = dma.done %s1999, 128
        $region64: #{tpu_custom_call.1} parent=59 // pred_fallthru
          _
      $region60: #{tpu_custom_call.1} parent=5 // pred_fallthru
        _
    $region6: #{tpu_custom_call.1} parent=1 // loop_footer
      %s24 = sadd.s32 1, %s20
    $region7: #{tpu_custom_call.1} parent=1 // loop_footer_branch
      %19 = sbr.rel target = $region3
    $region8: #{tpu_custom_call.1} parent=1 // loop_exit
      _
    %2004 = vsyncpa [#allocation3], 1
    %s2005 = scalar_lea.sflag [#allocation3], 1
    %2006 = vsyncpa %s2005, 1
    %2007 = vsyncpa [#allocation8], 1
    %s2008 = scalar_lea.sflag [#allocation8], 1
    %2009 = vsyncpa %s2008, 1
    %2010 = vsyncpa [#allocation4], 1
    %s2011 = scalar_lea.sflag [#allocation4], 1
    %2012 = vsyncpa %s2011, 1
    %2013 = vsyncpa [#allocation5], 1
    %s2014 = scalar_lea.sflag [#allocation5], 1
    %2015 = vsyncpa %s2014, 1

</llo_original>
